<compile_context>
chip_gen: v7x
topology: tpu7x:2x2x1
jax: 0.10.0
libtpu: 0.0.40
codegen_flags: <defaults>
</compile_context>

<pallas_src>
import jax
import jax.numpy as jnp
from jax.experimental import pallas as pl
from jax.experimental.pallas import tpu as pltpu

L_IN = 16800
L1 = (L_IN - 100) // 10 + 1    # 1671  conv1 output length
L1P = (L1 - 3) // 2 + 1        # 835   pool1 output length
L2 = (L1P - 5) // 10 + 1       # 84    conv2 output length
L2P = (L2 - 2) // 2 + 1        # 42    pool2 output length
NPOS = 11                      # conv1 positions needed per conv2 window
SEG = 400                      # raw samples per pool2 row (2 conv2 windows)


# ---------------------------------------------------------------------------
# Kernel 1: conv1 + relu + pool1 + conv2 + relu + pool2, one batch per step.
# ---------------------------------------------------------------------------
def _conv_front_kernel(x_ref, w1_ref, b1_ref, w2_ref, b2_ref, o_ref):
    """x_ref  : [1, 42, 400]  raw samples, one pool2 row per sublane row
       w1_ref : [200, 704]    block-Toeplitz conv1 weight (11 positions x 64ch)
       b1_ref : [1, 704]      conv1 bias tiled 11x
       w2_ref : [320, 32]     conv2 weight, rows = (tap k, in-channel)
       b2_ref : [1, 32]
       o_ref  : [1, 42, 32]   pool2 output (rows = pool2 pos, lanes = channel)
    """
    x = x_ref[0]                        # [42, 400]
    w1 = w1_ref[...]
    b1 = b1_ref[...]
    w2 = w2_ref[...]
    b2 = b2_ref[...]

    def window(xh):                     # xh: [42, 200] -> relu(conv2): [42, 32]
        # conv1: all 11 needed positions in one MXU matmul (im2col is in w1).
        h = jnp.dot(xh, w1, preferred_element_type=jnp.float32) + b1
        h = jnp.maximum(h, 0.0)         # [42, 11*64]
        # pool1 (window 3, stride 2): slot k = max of conv1 positions 2k..2k+2
        slots = []
        for k in range(5):
            p = h[:, (2 * k) * 64:(2 * k + 1) * 64]
            p = jnp.maximum(p, h[:, (2 * k + 1) * 64:(2 * k + 2) * 64])
            p = jnp.maximum(p, h[:, (2 * k + 2) * 64:(2 * k + 3) * 64])
            slots.append(p)
        pcat = jnp.concatenate(slots, axis=1)            # [42, 320]
        # conv2 + bias + relu
        s = jnp.dot(pcat, w2, preferred_element_type=jnp.float32) + b2
        return jnp.maximum(s, 0.0)                       # [42, 32]

    a = window(x[:, :200])              # conv2 windows u = 2*l
    b = window(x[:, 200:])              # conv2 windows u = 2*l + 1
    o_ref[0] = jnp.maximum(a, b)        # pool2 (window 2, stride 2)


def conv_front(xw, w1big, b1big, w2t, b2t):
    B = xw.shape[0]
    return pl.pallas_call(
        _conv_front_kernel,
        out_shape=jax.ShapeDtypeStruct((B, L2P, 32), jnp.float32),
        grid=(B,),
        in_specs=[
            pl.BlockSpec((1, L2P, SEG), lambda b: (b, 0, 0)),
            pl.BlockSpec((200, NPOS * 64), lambda b: (0, 0)),
            pl.BlockSpec((1, NPOS * 64), lambda b: (0, 0)),
            pl.BlockSpec((320, 32), lambda b: (0, 0)),
            pl.BlockSpec((1, 32), lambda b: (0, 0)),
        ],
        out_specs=pl.BlockSpec((1, L2P, 32), lambda b: (b, 0, 0)),
        compiler_params=pltpu.CompilerParams(
            dimension_semantics=("parallel",)),
    )(xw, w1big, b1big, w2t, b2t)


# ---------------------------------------------------------------------------
# Kernel 2: fused fc1 + relu + fc2 + relu + fc3 (everything VMEM resident).
# ---------------------------------------------------------------------------
def _fc_stack_kernel(x_ref, w1_ref, b1_ref, w2_ref, b2_ref, w3_ref, b3_ref,
                     o_ref):
    h = x_ref[...]                                                # [B, 1344]
    h = jnp.dot(h, w1_ref[...], preferred_element_type=jnp.float32) + b1_ref[...]
    h = jnp.maximum(h, 0.0)                                       # [B, 512]
    h = jnp.dot(h, w2_ref[...], preferred_element_type=jnp.float32) + b2_ref[...]
    h = jnp.maximum(h, 0.0)                                       # [B, 64]
    y = jnp.dot(h, w3_ref[...], preferred_element_type=jnp.float32) + b3_ref[...]
    o_ref[...] = y                                                # [B, 3]


def fc_stack(flat, fc1t, fc1b, fc2t, fc2b, fc3t, fc3b):
    B, K = flat.shape
    return pl.pallas_call(
        _fc_stack_kernel,
        out_shape=jax.ShapeDtypeStruct((B, 3), jnp.float32),
        grid=(1,),
        in_specs=[
            pl.BlockSpec((B, K), lambda i: (0, 0)),
            pl.BlockSpec((K, 512), lambda i: (0, 0)),
            pl.BlockSpec((1, 512), lambda i: (0, 0)),
            pl.BlockSpec((512, 64), lambda i: (0, 0)),
            pl.BlockSpec((1, 64), lambda i: (0, 0)),
            pl.BlockSpec((64, 3), lambda i: (0, 0)),
            pl.BlockSpec((1, 3), lambda i: (0, 0)),
        ],
        out_specs=pl.BlockSpec((B, 3), lambda i: (0, 0)),
        compiler_params=pltpu.CompilerParams(
            dimension_semantics=("arbitrary",)),
    )(flat, fc1t, fc1b, fc2t, fc2b, fc3t, fc3b)


# ---------------------------------------------------------------------------
# One-time weight re-layout (hoisted out of the forward pass).
# ---------------------------------------------------------------------------
def prepare_params(params):
    (conv1_w, conv1_b, conv2_w, conv2_b,
     fc1_w, fc1_b, fc2_w, fc2_b, fc3_w, fc3_b) = params

    w1 = conv1_w.reshape(64, 100).T.astype(jnp.float32)          # [100, 64]
    # Block-Toeplitz: column block j holds w1 shifted to rows 10j..10j+99, so
    # (x_window[42,200] @ w1big)[:, 64j + c] = conv1 output at local pos j.
    w1big = jnp.zeros((200, NPOS * 64), jnp.float32)
    for j in range(NPOS):
        w1big = w1big.at[10 * j:10 * j + 100, 64 * j:64 * (j + 1)].set(w1)
    b1big = jnp.tile(conv1_b, NPOS).reshape(1, NPOS * 64).astype(jnp.float32)

    # conv2 weight: row index = tap_k * 64 + in_channel.
    w2t = conv2_w.transpose(2, 1, 0).reshape(5 * 64, 32).astype(jnp.float32)
    b2t = conv2_b.reshape(1, 32).astype(jnp.float32)

    # fc1 re-layout: our flatten order is (pool2_pos, channel); torch's is
    # (channel, pool2_pos), so permute the fc1 weight accordingly.
    fc1t = (fc1_w.reshape(512, 32, L2P).transpose(2, 1, 0)
            .reshape(L2P * 32, 512).astype(jnp.float32))
    fc1b = fc1_b.reshape(1, 512).astype(jnp.float32)
    fc2t = fc2_w.T.astype(jnp.float32)
    fc2b = fc2_b.reshape(1, 64).astype(jnp.float32)
    fc3t = fc3_w.T.astype(jnp.float32)
    fc3b = fc3_b.reshape(1, 3).astype(jnp.float32)
    return (w1big, b1big, w2t, b2t, fc1t, fc1b, fc2t, fc2b, fc3t, fc3b)


@jax.jit
def fuel_cell_net_forward(x, prepped):
    (w1big, b1big, w2t, b2t, fc1t, fc1b, fc2t, fc2b, fc3t, fc3b) = prepped
    B = x.shape[0]
    xw = x.reshape(B, L2P, SEG)            # free reshape: 400 samples per row
    m = conv_front(xw, w1big, b1big, w2t, b2t)          # [B, 42, 32]
    flat = m.reshape(B, L2P * 32)          # row-major == fc1t's (pos, ch) order
    return fc_stack(flat, fc1t, fc1b, fc2t, fc2b, fc3t, fc3b)


# ---------------------------------------------------------------------------
# Deterministic parameter init (PyTorch shapes; synthetic values).
# ---------------------------------------------------------------------------
def init_params(key):
    ks = jax.random.split(key, 10)

    def u(k, shape, fan_in):
        bound = 1.0 / (fan_in ** 0.5)
        return jax.random.uniform(k, shape, jnp.float32, -bound, bound)

    conv1_w = u(ks[0], (64, 1, 100), 100)
    conv1_b = u(ks[1], (64,), 100)
    conv2_w = u(ks[2], (32, 64, 5), 64 * 5)
    conv2_b = u(ks[3], (32,), 64 * 5)
    fc1_w = u(ks[4], (512, 32 * L2P), 32 * L2P)
    fc1_b = u(ks[5], (512,), 32 * L2P)
    fc2_w = u(ks[6], (64, 512), 512)
    fc2_b = u(ks[7], (64,), 512)
    fc3_w = u(ks[8], (3, 64), 64)
    fc3_b = u(ks[9], (3,), 64)
    return (conv1_w, conv1_b, conv2_w, conv2_b,
            fc1_w, fc1_b, fc2_w, fc2_b, fc3_w, fc3_b)


# ---------------------------------------------------------------------------
# Pure-XLA reference mirroring the PyTorch forward (for a smoke check).
# ---------------------------------------------------------------------------
def reference_forward(x, params):
    (conv1_w, conv1_b, conv2_w, conv2_b,
     fc1_w, fc1_b, fc2_w, fc2_b, fc3_w, fc3_b) = params
    hi = jax.lax.Precision.HIGHEST
    h = jax.lax.conv_general_dilated(
        x, conv1_w, (10,), "VALID",
        dimension_numbers=("NCH", "OIH", "NCH"), precision=hi)
    h = jax.nn.relu(h + conv1_b[None, :, None])
    h = jax.lax.reduce_window(h, -jnp.inf, jax.lax.max, (1, 1, 3), (1, 1, 2), "VALID")
    h = jax.lax.conv_general_dilated(
        h, conv2_w, (10,), "VALID",
        dimension_numbers=("NCH", "OIH", "NCH"), precision=hi)
    h = jax.nn.relu(h + conv2_b[None, :, None])
    h = jax.lax.reduce_window(h, -jnp.inf, jax.lax.max, (1, 1, 2), (1, 1, 2), "VALID")
    h = h.reshape(h.shape[0], -1)                     # (c, l) flatten, like torch .view
    h = jax.nn.relu(jnp.matmul(h, fc1_w.T, precision=hi) + fc1_b)
    h = jax.nn.relu(jnp.matmul(h, fc2_w.T, precision=hi) + fc2_b)
    return jnp.matmul(h, fc3_w.T, precision=hi) + fc3_b


if __name__ == "__main__":
    key = jax.random.PRNGKey(0)
    pkey, xkey = jax.random.split(key)
    params = init_params(pkey)
    prepped = prepare_params(params)      # one-time weight re-layout (hoisted)
    # batch kept small (2); sequence length 16800 is dictated by the
    # architecture (fc1 expects 32*42 features after the conv/pool stages).
    x = jax.random.normal(xkey, (2, 1, L_IN), jnp.float32)

    out = jax.block_until_ready(fuel_cell_net_forward(x, prepped))
    assert out.shape == (2, 3), out.shape

    ref = jax.block_until_ready(reference_forward(x, params))
    assert bool(jnp.allclose(out, ref, atol=3e-2, rtol=3e-2)), (out, ref)

    print("KERNEL_OK")
</pallas_src>

<mosaic_0001>
module attributes {stable_mosaic.version = 11 : i64} {
  func.func @_conv_front_kernel(%arg0: i32, %arg1: memref<1x42x400xf32, #tpu.memory_space<vmem>>, %arg2: memref<200x704xf32, #tpu.memory_space<vmem>>, %arg3: memref<1x704xf32, #tpu.memory_space<vmem>>, %arg4: memref<320x32xf32, #tpu.memory_space<vmem>>, %arg5: memref<1x32xf32, #tpu.memory_space<vmem>>, %arg6: memref<1x42x32xf32, #tpu.memory_space<vmem>>) attributes {dimension_semantics = [#tpu.dimension_semantics<parallel>], iteration_bounds = array<i64: 2>, scalar_prefetch = 0 : i64, scratch_operands = 0 : i64, tpu.core_type = #tpu.core_type<tc>, window_params = [{transform_indices = @transform_0, window_bounds = array<i64: 1, 42, 400>}, {pipeline_mode = #tpu.pipeline_mode<synchronous>, transform_indices = @transform_1, window_bounds = array<i64: 200, 704>}, {pipeline_mode = #tpu.pipeline_mode<synchronous>, transform_indices = @transform_2, window_bounds = array<i64: 1, 704>}, {pipeline_mode = #tpu.pipeline_mode<synchronous>, transform_indices = @transform_3, window_bounds = array<i64: 320, 32>}, {pipeline_mode = #tpu.pipeline_mode<synchronous>, transform_indices = @transform_4, window_bounds = array<i64: 1, 32>}, {transform_indices = @transform_5, window_bounds = array<i64: 1, 42, 32>}]} {
    %c0 = arith.constant 0 : index
    %c0_0 = arith.constant 0 : index
    %c0_1 = arith.constant 0 : index
    %0 = vector.load %arg1[%c0, %c0_0, %c0_1] : memref<1x42x400xf32, #tpu.memory_space<vmem>>, vector<1x42x400xf32>
    %1 = vector.shape_cast %0 : vector<1x42x400xf32> to vector<42x400xf32>
    %c0_2 = arith.constant 0 : index
    %c0_3 = arith.constant 0 : index
    %2 = vector.load %arg2[%c0_2, %c0_3] : memref<200x704xf32, #tpu.memory_space<vmem>>, vector<200x704xf32>
    %c0_4 = arith.constant 0 : index
    %c0_5 = arith.constant 0 : index
    %3 = vector.load %arg3[%c0_4, %c0_5] : memref<1x704xf32, #tpu.memory_space<vmem>>, vector<1x704xf32>
    %c0_6 = arith.constant 0 : index
    %c0_7 = arith.constant 0 : index
    %4 = vector.load %arg4[%c0_6, %c0_7] : memref<320x32xf32, #tpu.memory_space<vmem>>, vector<320x32xf32>
    %c0_8 = arith.constant 0 : index
    %c0_9 = arith.constant 0 : index
    %5 = vector.load %arg5[%c0_8, %c0_9] : memref<1x32xf32, #tpu.memory_space<vmem>>, vector<1x32xf32>
    %6 = vector.extract_strided_slice %1 {offsets = [0, 0], sizes = [42, 200], strides = [1, 1]} : vector<42x400xf32> to vector<42x200xf32>
    %cst = arith.constant dense<0.000000e+00> : vector<42x704xf32>
    %7 = tpu.matmul %6, %2, %cst {dimension_numbers = #tpu.dot_dimension_numbers<[1], [0], [0], [1], [0, 0, 1, 1], [], []>} : vector<42x200xf32>, vector<200x704xf32>, vector<42x704xf32> -> vector<42x704xf32>
    %8 = vector.broadcast %3 : vector<1x704xf32> to vector<42x704xf32>
    %9 = arith.addf %7, %8 : vector<42x704xf32>
    %cst_10 = arith.constant 0.000000e+00 : f32
    %10 = vector.broadcast %cst_10 : f32 to vector<42x704xf32>
    %11 = arith.maximumf %9, %10 : vector<42x704xf32>
    %12 = vector.extract_strided_slice %11 {offsets = [0, 0], sizes = [42, 64], strides = [1, 1]} : vector<42x704xf32> to vector<42x64xf32>
    %13 = vector.extract_strided_slice %11 {offsets = [0, 64], sizes = [42, 64], strides = [1, 1]} : vector<42x704xf32> to vector<42x64xf32>
    %14 = arith.maximumf %12, %13 : vector<42x64xf32>
    %15 = vector.extract_strided_slice %11 {offsets = [0, 128], sizes = [42, 64], strides = [1, 1]} : vector<42x704xf32> to vector<42x64xf32>
    %16 = arith.maximumf %14, %15 : vector<42x64xf32>
    %17 = vector.extract_strided_slice %11 {offsets = [0, 128], sizes = [42, 64], strides = [1, 1]} : vector<42x704xf32> to vector<42x64xf32>
    %18 = vector.extract_strided_slice %11 {offsets = [0, 192], sizes = [42, 64], strides = [1, 1]} : vector<42x704xf32> to vector<42x64xf32>
    %19 = arith.maximumf %17, %18 : vector<42x64xf32>
    %20 = vector.extract_strided_slice %11 {offsets = [0, 256], sizes = [42, 64], strides = [1, 1]} : vector<42x704xf32> to vector<42x64xf32>
    %21 = arith.maximumf %19, %20 : vector<42x64xf32>
    %22 = vector.extract_strided_slice %11 {offsets = [0, 256], sizes = [42, 64], strides = [1, 1]} : vector<42x704xf32> to vector<42x64xf32>
    %23 = vector.extract_strided_slice %11 {offsets = [0, 320], sizes = [42, 64], strides = [1, 1]} : vector<42x704xf32> to vector<42x64xf32>
    %24 = arith.maximumf %22, %23 : vector<42x64xf32>
    %25 = vector.extract_strided_slice %11 {offsets = [0, 384], sizes = [42, 64], strides = [1, 1]} : vector<42x704xf32> to vector<42x64xf32>
    %26 = arith.maximumf %24, %25 : vector<42x64xf32>
    %27 = vector.extract_strided_slice %11 {offsets = [0, 384], sizes = [42, 64], strides = [1, 1]} : vector<42x704xf32> to vector<42x64xf32>
    %28 = vector.extract_strided_slice %11 {offsets = [0, 448], sizes = [42, 64], strides = [1, 1]} : vector<42x704xf32> to vector<42x64xf32>
    %29 = arith.maximumf %27, %28 : vector<42x64xf32>
    %30 = vector.extract_strided_slice %11 {offsets = [0, 512], sizes = [42, 64], strides = [1, 1]} : vector<42x704xf32> to vector<42x64xf32>
    %31 = arith.maximumf %29, %30 : vector<42x64xf32>
    %32 = vector.extract_strided_slice %11 {offsets = [0, 512], sizes = [42, 64], strides = [1, 1]} : vector<42x704xf32> to vector<42x64xf32>
    %33 = vector.extract_strided_slice %11 {offsets = [0, 576], sizes = [42, 64], strides = [1, 1]} : vector<42x704xf32> to vector<42x64xf32>
    %34 = arith.maximumf %32, %33 : vector<42x64xf32>
    %35 = vector.extract_strided_slice %11 {offsets = [0, 640], sizes = [42, 64], strides = [1, 1]} : vector<42x704xf32> to vector<42x64xf32>
    %36 = arith.maximumf %34, %35 : vector<42x64xf32>
    %37 = tpu.concatenate %16, %21, %26, %31, %36 in 1 : vector<42x64xf32>, vector<42x64xf32>, vector<42x64xf32>, vector<42x64xf32>, vector<42x64xf32> -> vector<42x320xf32>
    %cst_11 = arith.constant dense<0.000000e+00> : vector<42x32xf32>
    %38 = tpu.matmul %37, %4, %cst_11 {dimension_numbers = #tpu.dot_dimension_numbers<[1], [0], [0], [1], [0, 0, 1, 1], [], []>} : vector<42x320xf32>, vector<320x32xf32>, vector<42x32xf32> -> vector<42x32xf32>
    %39 = vector.broadcast %5 : vector<1x32xf32> to vector<42x32xf32>
    %40 = arith.addf %38, %39 : vector<42x32xf32>
    %cst_12 = arith.constant 0.000000e+00 : f32
    %41 = vector.broadcast %cst_12 : f32 to vector<42x32xf32>
    %42 = arith.maximumf %40, %41 : vector<42x32xf32>
    %43 = vector.extract_strided_slice %1 {offsets = [0, 200], sizes = [42, 200], strides = [1, 1]} : vector<42x400xf32> to vector<42x200xf32>
    %cst_13 = arith.constant dense<0.000000e+00> : vector<42x704xf32>
    %44 = tpu.matmul %43, %2, %cst_13 {dimension_numbers = #tpu.dot_dimension_numbers<[1], [0], [0], [1], [0, 0, 1, 1], [], []>} : vector<42x200xf32>, vector<200x704xf32>, vector<42x704xf32> -> vector<42x704xf32>
    %45 = vector.broadcast %3 : vector<1x704xf32> to vector<42x704xf32>
    %46 = arith.addf %44, %45 : vector<42x704xf32>
    %cst_14 = arith.constant 0.000000e+00 : f32
    %47 = vector.broadcast %cst_14 : f32 to vector<42x704xf32>
    %48 = arith.maximumf %46, %47 : vector<42x704xf32>
    %49 = vector.extract_strided_slice %48 {offsets = [0, 0], sizes = [42, 64], strides = [1, 1]} : vector<42x704xf32> to vector<42x64xf32>
    %50 = vector.extract_strided_slice %48 {offsets = [0, 64], sizes = [42, 64], strides = [1, 1]} : vector<42x704xf32> to vector<42x64xf32>
    %51 = arith.maximumf %49, %50 : vector<42x64xf32>
    %52 = vector.extract_strided_slice %48 {offsets = [0, 128], sizes = [42, 64], strides = [1, 1]} : vector<42x704xf32> to vector<42x64xf32>
    %53 = arith.maximumf %51, %52 : vector<42x64xf32>
    %54 = vector.extract_strided_slice %48 {offsets = [0, 128], sizes = [42, 64], strides = [1, 1]} : vector<42x704xf32> to vector<42x64xf32>
    %55 = vector.extract_strided_slice %48 {offsets = [0, 192], sizes = [42, 64], strides = [1, 1]} : vector<42x704xf32> to vector<42x64xf32>
    %56 = arith.maximumf %54, %55 : vector<42x64xf32>
    %57 = vector.extract_strided_slice %48 {offsets = [0, 256], sizes = [42, 64], strides = [1, 1]} : vector<42x704xf32> to vector<42x64xf32>
    %58 = arith.maximumf %56, %57 : vector<42x64xf32>
    %59 = vector.extract_strided_slice %48 {offsets = [0, 256], sizes = [42, 64], strides = [1, 1]} : vector<42x704xf32> to vector<42x64xf32>
    %60 = vector.extract_strided_slice %48 {offsets = [0, 320], sizes = [42, 64], strides = [1, 1]} : vector<42x704xf32> to vector<42x64xf32>
    %61 = arith.maximumf %59, %60 : vector<42x64xf32>
    %62 = vector.extract_strided_slice %48 {offsets = [0, 384], sizes = [42, 64], strides = [1, 1]} : vector<42x704xf32> to vector<42x64xf32>
    %63 = arith.maximumf %61, %62 : vector<42x64xf32>
    %64 = vector.extract_strided_slice %48 {offsets = [0, 384], sizes = [42, 64], strides = [1, 1]} : vector<42x704xf32> to vector<42x64xf32>
    %65 = vector.extract_strided_slice %48 {offsets = [0, 448], sizes = [42, 64], strides = [1, 1]} : vector<42x704xf32> to vector<42x64xf32>
    %66 = arith.maximumf %64, %65 : vector<42x64xf32>
    %67 = vector.extract_strided_slice %48 {offsets = [0, 512], sizes = [42, 64], strides = [1, 1]} : vector<42x704xf32> to vector<42x64xf32>
    %68 = arith.maximumf %66, %67 : vector<42x64xf32>
    %69 = vector.extract_strided_slice %48 {offsets = [0, 512], sizes = [42, 64], strides = [1, 1]} : vector<42x704xf32> to vector<42x64xf32>
    %70 = vector.extract_strided_slice %48 {offsets = [0, 576], sizes = [42, 64], strides = [1, 1]} : vector<42x704xf32> to vector<42x64xf32>
    %71 = arith.maximumf %69, %70 : vector<42x64xf32>
    %72 = vector.extract_strided_slice %48 {offsets = [0, 640], sizes = [42, 64], strides = [1, 1]} : vector<42x704xf32> to vector<42x64xf32>
    %73 = arith.maximumf %71, %72 : vector<42x64xf32>
    %74 = tpu.concatenate %53, %58, %63, %68, %73 in 1 : vector<42x64xf32>, vector<42x64xf32>, vector<42x64xf32>, vector<42x64xf32>, vector<42x64xf32> -> vector<42x320xf32>
    %cst_15 = arith.constant dense<0.000000e+00> : vector<42x32xf32>
    %75 = tpu.matmul %74, %4, %cst_15 {dimension_numbers = #tpu.dot_dimension_numbers<[1], [0], [0], [1], [0, 0, 1, 1], [], []>} : vector<42x320xf32>, vector<320x32xf32>, vector<42x32xf32> -> vector<42x32xf32>
    %76 = vector.broadcast %5 : vector<1x32xf32> to vector<42x32xf32>
    %77 = arith.addf %75, %76 : vector<42x32xf32>
    %cst_16 = arith.constant 0.000000e+00 : f32
    %78 = vector.broadcast %cst_16 : f32 to vector<42x32xf32>
    %79 = arith.maximumf %77, %78 : vector<42x32xf32>
    %80 = arith.maximumf %42, %79 : vector<42x32xf32>
    %c0_17 = arith.constant 0 : index
    %c0_18 = arith.constant 0 : index
    %c0_19 = arith.constant 0 : index
    %81 = vector.load %arg6[%c0_17, %c0_18, %c0_19] : memref<1x42x32xf32, #tpu.memory_space<vmem>>, vector<1x42x32xf32>
    %82 = vector.shape_cast %81 : vector<1x42x32xf32> to vector<42x32xf32>
    %83 = vector.shape_cast %80 : vector<42x32xf32> to vector<1x42x32xf32>
    tpu.vector_store %arg6[%c0_17, %c0_18, %c0_19], %83 {strides = array<i32>} : memref<1x42x32xf32, #tpu.memory_space<vmem>>, vector<1x42x32xf32>,
    return
  }
  func.func @transform_0(%arg0: i32) -> (i32, i32, i32) {
    %c0_i32 = arith.constant 0 : i32
    %c0_i32_0 = arith.constant 0 : i32
    %c0_i32_1 = arith.constant 0 : i32
    return %arg0, %c0_i32, %c0_i32_0 : i32, i32, i32
  }
  func.func @transform_1(%arg0: i32) -> (i32, i32) {
    %c0_i32 = arith.constant 0 : i32
    %c0_i32_0 = arith.constant 0 : i32
    %c0_i32_1 = arith.constant 0 : i32
    return %c0_i32, %c0_i32_0 : i32, i32
  }
  func.func @transform_2(%arg0: i32) -> (i32, i32) {
    %c0_i32 = arith.constant 0 : i32
    %c0_i32_0 = arith.constant 0 : i32
    %c0_i32_1 = arith.constant 0 : i32
    return %c0_i32, %c0_i32_0 : i32, i32
  }
  func.func @transform_3(%arg0: i32) -> (i32, i32) {
    %c0_i32 = arith.constant 0 : i32
    %c0_i32_0 = arith.constant 0 : i32
    %c0_i32_1 = arith.constant 0 : i32
    return %c0_i32, %c0_i32_0 : i32, i32
  }
  func.func @transform_4(%arg0: i32) -> (i32, i32) {
    %c0_i32 = arith.constant 0 : i32
    %c0_i32_0 = arith.constant 0 : i32
    %c0_i32_1 = arith.constant 0 : i32
    return %c0_i32, %c0_i32_0 : i32, i32
  }
  func.func @transform_5(%arg0: i32) -> (i32, i32, i32) {
    %c0_i32 = arith.constant 0 : i32
    %c0_i32_0 = arith.constant 0 : i32
    %c0_i32_1 = arith.constant 0 : i32
    return %arg0, %c0_i32, %c0_i32_0 : i32, i32, i32
  }
}

module attributes {stable_mosaic.version = 11 : i64} {
  func.func @_fc_stack_kernel(%arg0: i32, %arg1: memref<2x1344xf32, #tpu.memory_space<vmem>>, %arg2: memref<1344x512xf32, #tpu.memory_space<vmem>>, %arg3: memref<1x512xf32, #tpu.memory_space<vmem>>, %arg4: memref<512x64xf32, #tpu.memory_space<vmem>>, %arg5: memref<1x64xf32, #tpu.memory_space<vmem>>, %arg6: memref<64x3xf32, #tpu.memory_space<vmem>>, %arg7: memref<1x3xf32, #tpu.memory_space<vmem>>, %arg8: memref<2x3xf32, #tpu.memory_space<vmem>>) attributes {dimension_semantics = [#tpu.dimension_semantics<arbitrary>], iteration_bounds = array<i64: 1>, scalar_prefetch = 0 : i64, scratch_operands = 0 : i64, tpu.core_type = #tpu.core_type<tc>, window_params = [{pipeline_mode = #tpu.pipeline_mode<synchronous>, transform_indices = @transform_0, window_bounds = array<i64: 2, 1344>}, {pipeline_mode = #tpu.pipeline_mode<synchronous>, transform_indices = @transform_1, window_bounds = array<i64: 1344, 512>}, {pipeline_mode = #tpu.pipeline_mode<synchronous>, transform_indices = @transform_2, window_bounds = array<i64: 1, 512>}, {pipeline_mode = #tpu.pipeline_mode<synchronous>, transform_indices = @transform_3, window_bounds = array<i64: 512, 64>}, {pipeline_mode = #tpu.pipeline_mode<synchronous>, transform_indices = @transform_4, window_bounds = array<i64: 1, 64>}, {pipeline_mode = #tpu.pipeline_mode<synchronous>, transform_indices = @transform_5, window_bounds = array<i64: 64, 3>}, {pipeline_mode = #tpu.pipeline_mode<synchronous>, transform_indices = @transform_6, window_bounds = array<i64: 1, 3>}, {pipeline_mode = #tpu.pipeline_mode<synchronous>, transform_indices = @transform_7, window_bounds = array<i64: 2, 3>}]} {
    %c0 = arith.constant 0 : index
    %c0_0 = arith.constant 0 : index
    %0 = vector.load %arg1[%c0, %c0_0] : memref<2x1344xf32, #tpu.memory_space<vmem>>, vector<2x1344xf32>
    %c0_1 = arith.constant 0 : index
    %c0_2 = arith.constant 0 : index
    %1 = vector.load %arg2[%c0_1, %c0_2] : memref<1344x512xf32, #tpu.memory_space<vmem>>, vector<1344x512xf32>
    %cst = arith.constant dense<0.000000e+00> : vector<2x512xf32>
    %2 = tpu.matmul %0, %1, %cst {dimension_numbers = #tpu.dot_dimension_numbers<[1], [0], [0], [1], [0, 0, 1, 1], [], []>} : vector<2x1344xf32>, vector<1344x512xf32>, vector<2x512xf32> -> vector<2x512xf32>
    %c0_3 = arith.constant 0 : index
    %c0_4 = arith.constant 0 : index
    %3 = vector.load %arg3[%c0_3, %c0_4] : memref<1x512xf32, #tpu.memory_space<vmem>>, vector<1x512xf32>
    %4 = vector.broadcast %3 : vector<1x512xf32> to vector<2x512xf32>
    %5 = arith.addf %2, %4 : vector<2x512xf32>
    %cst_5 = arith.constant 0.000000e+00 : f32
    %6 = vector.broadcast %cst_5 : f32 to vector<2x512xf32>
    %7 = arith.maximumf %5, %6 : vector<2x512xf32>
    %c0_6 = arith.constant 0 : index
    %c0_7 = arith.constant 0 : index
    %8 = vector.load %arg4[%c0_6, %c0_7] : memref<512x64xf32, #tpu.memory_space<vmem>>, vector<512x64xf32>
    %cst_8 = arith.constant dense<0.000000e+00> : vector<2x64xf32>
    %9 = tpu.matmul %7, %8, %cst_8 {dimension_numbers = #tpu.dot_dimension_numbers<[1], [0], [0], [1], [0, 0, 1, 1], [], []>} : vector<2x512xf32>, vector<512x64xf32>, vector<2x64xf32> -> vector<2x64xf32>
    %c0_9 = arith.constant 0 : index
    %c0_10 = arith.constant 0 : index
    %10 = vector.load %arg5[%c0_9, %c0_10] : memref<1x64xf32, #tpu.memory_space<vmem>>, vector<1x64xf32>
    %11 = vector.broadcast %10 : vector<1x64xf32> to vector<2x64xf32>
    %12 = arith.addf %9, %11 : vector<2x64xf32>
    %cst_11 = arith.constant 0.000000e+00 : f32
    %13 = vector.broadcast %cst_11 : f32 to vector<2x64xf32>
    %14 = arith.maximumf %12, %13 : vector<2x64xf32>
    %c0_12 = arith.constant 0 : index
    %c0_13 = arith.constant 0 : index
    %15 = vector.load %arg6[%c0_12, %c0_13] : memref<64x3xf32, #tpu.memory_space<vmem>>, vector<64x3xf32>
    %cst_14 = arith.constant dense<0.000000e+00> : vector<2x3xf32>
    %16 = tpu.matmul %14, %15, %cst_14 {dimension_numbers = #tpu.dot_dimension_numbers<[1], [0], [0], [1], [0, 0, 1, 1], [], []>} : vector<2x64xf32>, vector<64x3xf32>, vector<2x3xf32> -> vector<2x3xf32>
    %c0_15 = arith.constant 0 : index
    %c0_16 = arith.constant 0 : index
    %17 = vector.load %arg7[%c0_15, %c0_16] : memref<1x3xf32, #tpu.memory_space<vmem>>, vector<1x3xf32>
    %18 = vector.broadcast %17 : vector<1x3xf32> to vector<2x3xf32>
    %19 = arith.addf %16, %18 : vector<2x3xf32>
    %c0_17 = arith.constant 0 : index
    %c0_18 = arith.constant 0 : index
    %20 = vector.load %arg8[%c0_17, %c0_18] : memref<2x3xf32, #tpu.memory_space<vmem>>, vector<2x3xf32>
    tpu.vector_store %arg8[%c0_17, %c0_18], %19 {strides = array<i32>} : memref<2x3xf32, #tpu.memory_space<vmem>>, vector<2x3xf32>,
    return
  }
  func.func @transform_0(%arg0: i32) -> (i32, i32) {
    %c0_i32 = arith.constant 0 : i32
    %c0_i32_0 = arith.constant 0 : i32
    %c0_i32_1 = arith.constant 0 : i32
    return %c0_i32, %c0_i32_0 : i32, i32
  }
  func.func @transform_1(%arg0: i32) -> (i32, i32) {
    %c0_i32 = arith.constant 0 : i32
    %c0_i32_0 = arith.constant 0 : i32
    %c0_i32_1 = arith.constant 0 : i32
    return %c0_i32, %c0_i32_0 : i32, i32
  }
  func.func @transform_2(%arg0: i32) -> (i32, i32) {
    %c0_i32 = arith.constant 0 : i32
    %c0_i32_0 = arith.constant 0 : i32
    %c0_i32_1 = arith.constant 0 : i32
    return %c0_i32, %c0_i32_0 : i32, i32
  }
  func.func @transform_3(%arg0: i32) -> (i32, i32) {
    %c0_i32 = arith.constant 0 : i32
    %c0_i32_0 = arith.constant 0 : i32
    %c0_i32_1 = arith.constant 0 : i32
    return %c0_i32, %c0_i32_0 : i32, i32
  }
  func.func @transform_4(%arg0: i32) -> (i32, i32) {
    %c0_i32 = arith.constant 0 : i32
    %c0_i32_0 = arith.constant 0 : i32
    %c0_i32_1 = arith.constant 0 : i32
    return %c0_i32, %c0_i32_0 : i32, i32
  }
  func.func @transform_5(%arg0: i32) -> (i32, i32) {
    %c0_i32 = arith.constant 0 : i32
    %c0_i32_0 = arith.constant 0 : i32
    %c0_i32_1 = arith.constant 0 : i32
    return %c0_i32, %c0_i32_0 : i32, i32
  }
  func.func @transform_6(%arg0: i32) -> (i32, i32) {
    %c0_i32 = arith.constant 0 : i32
    %c0_i32_0 = arith.constant 0 : i32
    %c0_i32_1 = arith.constant 0 : i32
    return %c0_i32, %c0_i32_0 : i32, i32
  }
  func.func @transform_7(%arg0: i32) -> (i32, i32) {
    %c0_i32 = arith.constant 0 : i32
    %c0_i32_0 = arith.constant 0 : i32
    %c0_i32_1 = arith.constant 0 : i32
    return %c0_i32, %c0_i32_0 : i32, i32
  }
}

</mosaic_0001>

<llo_original>
// kernel: fuel_cell_net_forward.2
$region0: #{fuel_cell_net_forward.2}
  #allocation0 [shape = 'u32[]', space=smem, size = 0x4, offset = 0x4, fixed_abs, tag = 'smem constant byte address 0x4 - core index']
  #allocation1 [shape = 'u32[144,128]{1,0:T(1,128)}', space=vmem, size = 0x12000, scoped, tag = 'internal scratch']
  %s0 = inlined_call_operand.vmem [shape: f32[2,42,400], index: 0, kind: input, shape index: {}]
  %s1 = inlined_call_operand.hbm [shape: f32[200,704], index: 1, kind: input, shape index: {}]
  %s2 = inlined_call_operand.hbm [shape: f32[1,704], index: 2, kind: input, shape index: {}]
  %s3 = inlined_call_operand.vmem [shape: f32[320,32], index: 3, kind: input, shape index: {}]
  %s4 = inlined_call_operand.hbm [shape: f32[1,32], index: 4, kind: input, shape index: {}]
  %s5 = inlined_call_operand.vmem [shape: f32[2,42,32], index: 5, kind: output, shape index: {}]
  %s6 = sld [smem:[#allocation0]]
  $region65: #{fuel_cell_net_forward.2} parent=0
    _
  %s8 = ssub.s32 1, %s6
  %s9 = scalar_select 0, %s8, %s6
  $region1: #{fuel_cell_net_forward.2} parent=0
    #allocation2 [shape = 'u8[614400]{0}', space=vmem, size = 0x96000, scoped, tag = 'input window, operand 1, single buffered']
    #allocation3 [shape = 's32[2]{0}', space=sflag, size = 0x8, scoped, tag = 'scoped memory for fuel_cell_net_forward.2']
    #allocation4 [shape = 'u8[3072]{0}', space=vmem, size = 0xc00, scoped, tag = 'input window, operand 2, single buffered']
    #allocation5 [shape = 's32[1]{0}', space=sflag, size = 0x4, scoped, tag = 'scoped memory for fuel_cell_net_forward.2']
    #allocation6 [shape = 'u8[512]{0}', space=vmem, size = 0x400, scoped, tag = 'input window, operand 4, single buffered']
    %10 = vsyncpa [#allocation3], 0
    %11 = vsyncpa [#allocation5], 0
    loop: start=0, step=1, limit=4
    $region2: #{fuel_cell_net_forward.2} parent=1 // loop_pre_header
      _
    $region3: #{fuel_cell_net_forward.2} parent=1 // loop_header
      %s13 = sphi 0, %s17
      %p14 = scmp.ge.s32.totalorder %s13, 4
      %s23 = sphi 0, %s25
      %s26 = sphi 0, %s23
      %s27 = sphi 0, %s26
      %s43 = sphi 0, %s27
      %s47 = sphi 0, %s47
      %s49 = sphi 0, %s47
      %s50 = sphi 0, %s49
      %s64 = sphi 0, %s50
      %s68 = sphi 0, %s68
      %s70 = sphi 0, %s68
      %s71 = sphi 0, %s70
      %s85 = sphi 0, %s71
      %s89 = sphi 0, %s89
      %s91 = sphi 0, %s89
      %s92 = sphi 0, %s91
      %s106 = sphi 0, %s92
      %s110 = sphi 0, %s110
      %s112 = sphi 0, %s110
      %s113 = sphi 0, %s112
      %s127 = sphi 0, %s113
      %s133 = sphi 0, %s135
      %s136 = sphi 0, %s133
      %s137 = sphi 0, %s136
      %s153 = sphi 0, %s137
    $region4: #{fuel_cell_net_forward.2} parent=1 // loop_header_branch
      %16 = sbr.rel (%p14) target = $region8
    $region5: #{fuel_cell_net_forward.2} parent=1 // loop_body
      %s18 = ssub.s32 %s13, 1
      %s19 = ssub.s32 %s13, 2
      %s20 = sadd.s32 %s13, 1
      %s21 = ssub.s32 %s13, %s20
      %p22 = scmp.eq.s32.totalorder %s21, 0
      %s24 = sadd.s32 %s23, 1
      %s25 = scalar_select %p22, %s23, %s24
      %p28 = pneg %p22
      %p29 = scmp.eq.s32.totalorder %s13, 1
      %p30 = por %p28, %p29
      %p31 = scmp.ne.s32.totalorder %s23, %s26
      %p32 = scmp.eq.s32.totalorder %s13, 0
      %p33 = por %p31, %p32
      %p34 = scmp.ne.s32.totalorder %s23, %s26
      %p35 = scmp.eq.s32.totalorder %s18, 1
      %p36 = por %p34, %p35
      %p37 = scmp.ne.s32.totalorder %s26, %s27
      %p38 = scmp.eq.s32.totalorder %s18, 0
      %p39 = por %p37, %p38
      %p40 = scmp.ne.s32.totalorder %s26, %s27
      %p41 = scmp.eq.s32.totalorder %s19, 1
      %p42 = por %p40, %p41
      %p44 = scmp.ne.s32.totalorder %s27, %s43
      %p45 = scmp.eq.s32.totalorder %s19, 0
      %p46 = por %p44, %p45
      %s48 = sadd.s32 %s47, 1
      %p51 = scmp.eq.s32.totalorder %s13, 1
      %p52 = scmp.ne.s32.totalorder %s47, %s49
      %p53 = scmp.eq.s32.totalorder %s13, 0
      %p54 = por %p52, %p53
      %p55 = scmp.ne.s32.totalorder %s47, %s49
      %p56 = scmp.eq.s32.totalorder %s18, 1
      %p57 = por %p55, %p56
      %p58 = scmp.ne.s32.totalorder %s49, %s50
      %p59 = scmp.eq.s32.totalorder %s18, 0
      %p60 = por %p58, %p59
      %p61 = scmp.ne.s32.totalorder %s49, %s50
      %p62 = scmp.eq.s32.totalorder %s19, 1
      %p63 = por %p61, %p62
      %p65 = scmp.ne.s32.totalorder %s50, %s64
      %p66 = scmp.eq.s32.totalorder %s19, 0
      %p67 = por %p65, %p66
      %s69 = sadd.s32 %s68, 1
      %p72 = scmp.eq.s32.totalorder %s13, 1
      %p73 = scmp.ne.s32.totalorder %s68, %s70
      %p74 = scmp.eq.s32.totalorder %s13, 0
      %p75 = por %p73, %p74
      %p76 = scmp.ne.s32.totalorder %s68, %s70
      %p77 = scmp.eq.s32.totalorder %s18, 1
      %p78 = por %p76, %p77
      %p79 = scmp.ne.s32.totalorder %s70, %s71
      %p80 = scmp.eq.s32.totalorder %s18, 0
      %p81 = por %p79, %p80
      %p82 = scmp.ne.s32.totalorder %s70, %s71
      %p83 = scmp.eq.s32.totalorder %s19, 1
      %p84 = por %p82, %p83
      %p86 = scmp.ne.s32.totalorder %s71, %s85
      %p87 = scmp.eq.s32.totalorder %s19, 0
      %p88 = por %p86, %p87
      %s90 = sadd.s32 %s89, 1
      %p93 = scmp.eq.s32.totalorder %s13, 1
      %p94 = scmp.ne.s32.totalorder %s89, %s91
      %p95 = scmp.eq.s32.totalorder %s13, 0
      %p96 = por %p94, %p95
      %p97 = scmp.ne.s32.totalorder %s89, %s91
      %p98 = scmp.eq.s32.totalorder %s18, 1
      %p99 = por %p97, %p98
      %p100 = scmp.ne.s32.totalorder %s91, %s92
      %p101 = scmp.eq.s32.totalorder %s18, 0
      %p102 = por %p100, %p101
      %p103 = scmp.ne.s32.totalorder %s91, %s92
      %p104 = scmp.eq.s32.totalorder %s19, 1
      %p105 = por %p103, %p104
      %p107 = scmp.ne.s32.totalorder %s92, %s106
      %p108 = scmp.eq.s32.totalorder %s19, 0
      %p109 = por %p107, %p108
      %s111 = sadd.s32 %s110, 1
      %p114 = scmp.eq.s32.totalorder %s13, 1
      %p115 = scmp.ne.s32.totalorder %s110, %s112
      %p116 = scmp.eq.s32.totalorder %s13, 0
      %p117 = por %p115, %p116
      %p118 = scmp.ne.s32.totalorder %s110, %s112
      %p119 = scmp.eq.s32.totalorder %s18, 1
      %p120 = por %p118, %p119
      %p121 = scmp.ne.s32.totalorder %s112, %s113
      %p122 = scmp.eq.s32.totalorder %s18, 0
      %p123 = por %p121, %p122
      %p124 = scmp.ne.s32.totalorder %s112, %s113
      %p125 = scmp.eq.s32.totalorder %s19, 1
      %p126 = por %p124, %p125
      %p128 = scmp.ne.s32.totalorder %s113, %s127
      %p129 = scmp.eq.s32.totalorder %s19, 0
      %p130 = por %p128, %p129
      %s131 = ssub.s32 %s13, %s20
      %p132 = scmp.eq.s32.totalorder %s131, 0
      %s134 = sadd.s32 %s133, 1
      %s135 = scalar_select %p132, %s133, %s134
      %p138 = pneg %p132
      %p139 = scmp.eq.s32.totalorder %s13, 1
      %p140 = por %p138, %p139
      %p141 = scmp.ne.s32.totalorder %s133, %s136
      %p142 = scmp.eq.s32.totalorder %s13, 0
      %p143 = por %p141, %p142
      %p144 = scmp.ne.s32.totalorder %s133, %s136
      %p145 = scmp.eq.s32.totalorder %s18, 1
      %p146 = por %p144, %p145
      %p147 = scmp.ne.s32.totalorder %s136, %s137
      %p148 = scmp.eq.s32.totalorder %s18, 0
      %p149 = por %p147, %p148
      %p150 = scmp.ne.s32.totalorder %s136, %s137
      %p151 = scmp.eq.s32.totalorder %s19, 1
      %p152 = por %p150, %p151
      %p154 = scmp.ne.s32.totalorder %s137, %s153
      %p155 = scmp.eq.s32.totalorder %s19, 0
      %p156 = por %p154, %p155
      %p157 = scmp.le.s32.totalorder 1, %s13
      %p158 = scmp.lt.s32.totalorder %s13, 3
      %p159 = pnand %p157, %p158
      %p160 = pneg %p159
      // Predicated region
      $region9: #{fuel_cell_net_forward.2} parent=5 // pred_check
        _
      $region10: #{fuel_cell_net_forward.2} parent=5 // pred_check_branch
        %162 = sbr.rel (%p159) target = $region12
      $region11: #{fuel_cell_net_forward.2} parent=5 // pred_region
        %s163 = ssub.s32 %s13, 1
        // Predicated region
        $region13: #{fuel_cell_net_forward.2} parent=11 // pred_check
          %p164 = pneg %p60
        $region14: #{fuel_cell_net_forward.2} parent=11 // pred_check_branch
          %166 = sbr.rel (%p164) target = $region16
        $region15: #{fuel_cell_net_forward.2} parent=11 // pred_region
          %s168 = ssub.s32 19200, 19200
          %169 = vsyncadd [#allocation3], %s168
          %s170 = sshll.u32 [#allocation2], 4
          %s171 = int_to_ptr.vmem [resolvable:$true] %s170
          %176 = dma.hbm_to_vmem [thread:$0]  %s1, 19200, %s171, [#allocation3], 768, 768, 48
        $region16: #{fuel_cell_net_forward.2} parent=11 // pred_fallthru
          _
        // Predicated region
        $region17: #{fuel_cell_net_forward.2} parent=11 // pred_check
          %p177 = pneg %p81
        $region18: #{fuel_cell_net_forward.2} parent=11 // pred_check_branch
          %179 = sbr.rel (%p177) target = $region20
        $region19: #{fuel_cell_net_forward.2} parent=11 // pred_region
          %s181 = ssub.s32 96, 96
          %182 = vsyncadd [#allocation5], %s181
          %s184 = sshll.u32 [#allocation4], 4
          %s185 = int_to_ptr.vmem [resolvable:$true] %s184
          %187 = dma.hbm_to_vmem [thread:$0]  %s2, 96, %s185, [#allocation5]
        $region20: #{fuel_cell_net_forward.2} parent=11 // pred_fallthru
          _
        // Predicated region
        $region21: #{fuel_cell_net_forward.2} parent=11 // pred_check
          %p188 = pneg %p102
        $region22: #{fuel_cell_net_forward.2} parent=11 // pred_check_branch
          %190 = sbr.rel (%p188) target = $region24
        $region23: #{fuel_cell_net_forward.2} parent=11 // pred_region
          _
        $region24: #{fuel_cell_net_forward.2} parent=11 // pred_fallthru
          _
        // Predicated region
        $region25: #{fuel_cell_net_forward.2} parent=11 // pred_check
          %p191 = pneg %p123
        $region26: #{fuel_cell_net_forward.2} parent=11 // pred_check_branch
          %193 = sbr.rel (%p191) target = $region28
        $region27: #{fuel_cell_net_forward.2} parent=11 // pred_region
          %s195 = ssub.s32 16, 16
          %196 = vsyncadd [#allocation5], %s195
          %s198 = sshll.u32 [#allocation6], 4
          %s199 = int_to_ptr.vmem [resolvable:$true] %s198
          %201 = dma.hbm_to_vmem [thread:$0]  %s4, 16, %s199, [#allocation5]
        $region28: #{fuel_cell_net_forward.2} parent=11 // pred_fallthru
          _
      $region12: #{fuel_cell_net_forward.2} parent=5 // pred_fallthru
        _
      %p202 = scmp.lt.s32.totalorder %s13, 2
      // Predicated region
      $region29: #{fuel_cell_net_forward.2} parent=5 // pred_check
        %p203 = pneg %p202
      $region30: #{fuel_cell_net_forward.2} parent=5 // pred_check_branch
        %205 = sbr.rel (%p203) target = $region32
      $region31: #{fuel_cell_net_forward.2} parent=5 // pred_region
        // Predicated region
        $region33: #{fuel_cell_net_forward.2} parent=31 // pred_check
          %p206 = pneg %p33
        $region34: #{fuel_cell_net_forward.2} parent=31 // pred_check_branch
          %208 = sbr.rel (%p206) target = $region36
        $region35: #{fuel_cell_net_forward.2} parent=31 // pred_region
          %p209 = scmp.lt.s32.totalorder %s13, 1
          %s210 = scalar_select %p209, %s13, 1
          %s211 = smul.addr %s210, 24
          %s212 = smul.addr %s211, 8
          %s213 = scalar_lea.vmem %s0, %s212
        $region36: #{fuel_cell_net_forward.2} parent=31 // pred_fallthru
          _
      $region32: #{fuel_cell_net_forward.2} parent=5 // pred_fallthru
        _
      %p214 = scmp.le.s32.totalorder 1, %s13
      %p215 = scmp.lt.s32.totalorder %s13, 3
      %p216 = pnand %p214, %p215
      %p217 = pneg %p216
      // Predicated region
      $region37: #{fuel_cell_net_forward.2} parent=5 // pred_check
        _
      $region38: #{fuel_cell_net_forward.2} parent=5 // pred_check_branch
        %219 = sbr.rel (%p216) target = $region40
      $region39: #{fuel_cell_net_forward.2} parent=5 // pred_region
        %s220 = ssub.s32 %s13, 1
        // Predicated region
        $region41: #{fuel_cell_net_forward.2} parent=39 // pred_check
          %p221 = pneg %p60
        $region42: #{fuel_cell_net_forward.2} parent=39 // pred_check_branch
          %223 = sbr.rel (%p221) target = $region44
        $region43: #{fuel_cell_net_forward.2} parent=39 // pred_region
          %224 = dma.done [#allocation3], 19200
        $region44: #{fuel_cell_net_forward.2} parent=39 // pred_fallthru
          _
        // Predicated region
        $region45: #{fuel_cell_net_forward.2} parent=39 // pred_check
          %p225 = pneg %p81
        $region46: #{fuel_cell_net_forward.2} parent=39 // pred_check_branch
          %227 = sbr.rel (%p225) target = $region48
        $region47: #{fuel_cell_net_forward.2} parent=39 // pred_region
          %228 = dma.done [#allocation5], 96
        $region48: #{fuel_cell_net_forward.2} parent=39 // pred_fallthru
          _
        // Predicated region
        $region49: #{fuel_cell_net_forward.2} parent=39 // pred_check
          %p229 = pneg %p123
        $region50: #{fuel_cell_net_forward.2} parent=39 // pred_check_branch
          %231 = sbr.rel (%p229) target = $region52
        $region51: #{fuel_cell_net_forward.2} parent=39 // pred_region
          %232 = dma.done [#allocation5], 16
        $region52: #{fuel_cell_net_forward.2} parent=39 // pred_fallthru
          _
        %p233 = scmp.lt.s32.totalorder %s18, 1
        %s234 = scalar_select %p233, %s18, 1
        %s235 = smul.addr %s234, 24
        %s236 = smul.addr %s235, 8
        %s237 = scalar_lea.vmem %s0, %s236
        %p238 = pneg %p39
        %p239 = pneg %p36
        %p240 = pneg %p60
        %p241 = pneg %p57
        %p242 = pneg %p81
        %p243 = pneg %p78
        %p244 = pneg %p102
        %p245 = pneg %p99
        %p246 = pneg %p123
        %p247 = pneg %p120
        %p248 = pneg %p149
        %p249 = pneg %p146
        %p250 = scmp.lt.s32.totalorder %s18, 1
        %s251 = scalar_select %p250, %s18, 1
        %s252 = smul.addr %s251, 6
        %s253 = smul.addr %s252, 8
        %s254 = scalar_lea.vmem %s5, %s253
        %p255 = scmp.lt.s32.totalorder %s18, 1
        %s256 = scalar_select %p255, %s18, 1
        %s257 = smul.addr %s256, 24
        %s258 = smul.addr %s257, 8
        %s259 = scalar_lea.vmem %s0, %s258
        %p260 = scmp.lt.s32.totalorder %s18, 1
        %s261 = scalar_select %p260, %s18, 1
        %s262 = smul.addr %s261, 6
        %s263 = smul.addr %s262, 8
        %s264 = scalar_lea.vmem %s5, %s263
        %v265 = vld [vmem:[%s259] sm:$0xff]
        %v266 = vld [vmem:[%s259 + $0x8] sm:$0xff]
        %v267 = vld [vmem:[%s259 + $0x10] sm:$0xff]
        %v268 = vld [vmem:[%s259 + $0x18] sm:$0xff]
        %v269 = vld [vmem:[%s259 + $0x20] sm:$0xff]
        %v270 = vld [vmem:[%s259 + $0x28] sm:$0xff]
        %v271 = vld [vmem:[%s259 + $0x30] sm:$0xff]
        %v272 = vld [vmem:[%s259 + $0x38] sm:$0xff]
        %v273 = vld [vmem:[%s259 + $0x40] sm:$0xff]
        %v274 = vld [vmem:[%s259 + $0x48] sm:$0xff]
        %v275 = vld [vmem:[%s259 + $0x50] sm:$0xff]
        %v276 = vld [vmem:[%s259 + $0x58] sm:$0xff]
        %v277 = vld [vmem:[%s259 + $0x60] sm:$0xff]
        %v278 = vld [vmem:[%s259 + $0x68] sm:$0xff]
        %v279 = vld [vmem:[%s259 + $0x70] sm:$0xff]
        %v280 = vld [vmem:[%s259 + $0x78] sm:$0xff]
        %v281 = vld [vmem:[%s259 + $0x80] sm:$0xff]
        %v282 = vld [vmem:[%s259 + $0x88] sm:$0xff]
        %v283 = vld [vmem:[%s259 + $0x90] sm:$0xff]
        %v284 = vld [vmem:[%s259 + $0x98] sm:$0xff]
        %v285 = vld [vmem:[%s259 + $0xa0] sm:$0x3]
        %v286 = vld [vmem:[%s259 + $0xa8] sm:$0x3]
        %v287 = vld [vmem:[%s259 + $0xb0] sm:$0x3]
        %v288 = vld [vmem:[%s259 + $0xb8] sm:$0x3]
        %v289 = vld [vmem:[#allocation2] sm:$0xff]
        %v290 = vld [vmem:[#allocation2 + $0x8] sm:$0xff]
        %v291 = vld [vmem:[#allocation2 + $0x10] sm:$0xff]
        %v292 = vld [vmem:[#allocation2 + $0x18] sm:$0xff]
        %v293 = vld [vmem:[#allocation2 + $0x20] sm:$0xff]
        %v294 = vld [vmem:[#allocation2 + $0x28] sm:$0xff]
        %v295 = vld [vmem:[#allocation2 + $0x30] sm:$0xff]
        %v296 = vld [vmem:[#allocation2 + $0x38] sm:$0xff]
        %v297 = vld [vmem:[#allocation2 + $0x40] sm:$0xff]
        %v298 = vld [vmem:[#allocation2 + $0x48] sm:$0xff]
        %v299 = vld [vmem:[#allocation2 + $0x50] sm:$0xff]
        %v300 = vld [vmem:[#allocation2 + $0x58] sm:$0xff]
        %v301 = vld [vmem:[#allocation2 + $0x60] sm:$0xff]
        %v302 = vld [vmem:[#allocation2 + $0x68] sm:$0xff]
        %v303 = vld [vmem:[#allocation2 + $0x70] sm:$0xff]
        %v304 = vld [vmem:[#allocation2 + $0x78] sm:$0xff]
        %v305 = vld [vmem:[#allocation2 + $0x80] sm:$0xff]
        %v306 = vld [vmem:[#allocation2 + $0x88] sm:$0xff]
        %v307 = vld [vmem:[#allocation2 + $0x90] sm:$0xff]
        %v308 = vld [vmem:[#allocation2 + $0x98] sm:$0xff]
        %v309 = vld [vmem:[#allocation2 + $0xa0] sm:$0xff]
        %v310 = vld [vmem:[#allocation2 + $0xa8] sm:$0xff]
        %v311 = vld [vmem:[#allocation2 + $0xb0] sm:$0xff]
        %v312 = vld [vmem:[#allocation2 + $0xb8] sm:$0xff]
        %v313 = vld [vmem:[#allocation2 + $0xc0] sm:$0xff]
        %v314 = vld [vmem:[#allocation2 + $0xc8] sm:$0xff]
        %v315 = vld [vmem:[#allocation2 + $0xd0] sm:$0xff]
        %v316 = vld [vmem:[#allocation2 + $0xd8] sm:$0xff]
        %v317 = vld [vmem:[#allocation2 + $0xe0] sm:$0xff]
        %v318 = vld [vmem:[#allocation2 + $0xe8] sm:$0xff]
        %v319 = vld [vmem:[#allocation2 + $0xf0] sm:$0xff]
        %v320 = vld [vmem:[#allocation2 + $0xf8] sm:$0xff]
        %v321 = vld [vmem:[#allocation2 + $0x100] sm:$0xff]
        %v322 = vld [vmem:[#allocation2 + $0x108] sm:$0xff]
        %v323 = vld [vmem:[#allocation2 + $0x110] sm:$0xff]
        %v324 = vld [vmem:[#allocation2 + $0x118] sm:$0xff]
        %v325 = vld [vmem:[#allocation2 + $0x120] sm:$0xff]
        %v326 = vld [vmem:[#allocation2 + $0x128] sm:$0xff]
        %v327 = vld [vmem:[#allocation2 + $0x130] sm:$0xff]
        %v328 = vld [vmem:[#allocation2 + $0x138] sm:$0xff]
        %v329 = vld [vmem:[#allocation2 + $0x140] sm:$0xff]
        %v330 = vld [vmem:[#allocation2 + $0x148] sm:$0xff]
        %v331 = vld [vmem:[#allocation2 + $0x150] sm:$0xff]
        %v332 = vld [vmem:[#allocation2 + $0x158] sm:$0xff]
        %v333 = vld [vmem:[#allocation2 + $0x160] sm:$0xff]
        %v334 = vld [vmem:[#allocation2 + $0x168] sm:$0xff]
        %v335 = vld [vmem:[#allocation2 + $0x170] sm:$0xff]
        %v336 = vld [vmem:[#allocation2 + $0x178] sm:$0xff]
        %v337 = vld [vmem:[#allocation2 + $0x180] sm:$0xff]
        %v338 = vld [vmem:[#allocation2 + $0x188] sm:$0xff]
        %v339 = vld [vmem:[#allocation2 + $0x190] sm:$0xff]
        %v340 = vld [vmem:[#allocation2 + $0x198] sm:$0xff]
        %v341 = vld [vmem:[#allocation2 + $0x1a0] sm:$0xff]
        %v342 = vld [vmem:[#allocation2 + $0x1a8] sm:$0xff]
        %v343 = vld [vmem:[#allocation2 + $0x1b0] sm:$0xff]
        %v344 = vld [vmem:[#allocation2 + $0x1b8] sm:$0xff]
        %v345 = vld [vmem:[#allocation2 + $0x1c0] sm:$0xff]
        %v346 = vld [vmem:[#allocation2 + $0x1c8] sm:$0xff]
        %v347 = vld [vmem:[#allocation2 + $0x1d0] sm:$0xff]
        %v348 = vld [vmem:[#allocation2 + $0x1d8] sm:$0xff]
        %v349 = vld [vmem:[#allocation2 + $0x1e0] sm:$0xff]
        %v350 = vld [vmem:[#allocation2 + $0x1e8] sm:$0xff]
        %v351 = vld [vmem:[#allocation2 + $0x1f0] sm:$0xff]
        %v352 = vld [vmem:[#allocation2 + $0x1f8] sm:$0xff]
        %v353 = vld [vmem:[#allocation2 + $0x200] sm:$0xff]
        %v354 = vld [vmem:[#allocation2 + $0x208] sm:$0xff]
        %v355 = vld [vmem:[#allocation2 + $0x210] sm:$0xff]
        %v356 = vld [vmem:[#allocation2 + $0x218] sm:$0xff]
        %v357 = vld [vmem:[#allocation2 + $0x220] sm:$0xff]
        %v358 = vld [vmem:[#allocation2 + $0x228] sm:$0xff]
        %v359 = vld [vmem:[#allocation2 + $0x230] sm:$0xff]
        %v360 = vld [vmem:[#allocation2 + $0x238] sm:$0xff]
        %v361 = vld [vmem:[#allocation2 + $0x240] sm:$0xff]
        %v362 = vld [vmem:[#allocation2 + $0x248] sm:$0xff]
        %v363 = vld [vmem:[#allocation2 + $0x250] sm:$0xff]
        %v364 = vld [vmem:[#allocation2 + $0x258] sm:$0xff]
        %v365 = vld [vmem:[#allocation2 + $0x260] sm:$0xff]
        %v366 = vld [vmem:[#allocation2 + $0x268] sm:$0xff]
        %v367 = vld [vmem:[#allocation2 + $0x270] sm:$0xff]
        %v368 = vld [vmem:[#allocation2 + $0x278] sm:$0xff]
        %v369 = vld [vmem:[#allocation2 + $0x280] sm:$0xff]
        %v370 = vld [vmem:[#allocation2 + $0x288] sm:$0xff]
        %v371 = vld [vmem:[#allocation2 + $0x290] sm:$0xff]
        %v372 = vld [vmem:[#allocation2 + $0x298] sm:$0xff]
        %v373 = vld [vmem:[#allocation2 + $0x2a0] sm:$0xff]
        %v374 = vld [vmem:[#allocation2 + $0x2a8] sm:$0xff]
        %v375 = vld [vmem:[#allocation2 + $0x2b0] sm:$0xff]
        %v376 = vld [vmem:[#allocation2 + $0x2b8] sm:$0xff]
        %v377 = vld [vmem:[#allocation2 + $0x2c0] sm:$0xff]
        %v378 = vld [vmem:[#allocation2 + $0x2c8] sm:$0xff]
        %v379 = vld [vmem:[#allocation2 + $0x2d0] sm:$0xff]
        %v380 = vld [vmem:[#allocation2 + $0x2d8] sm:$0xff]
        %v381 = vld [vmem:[#allocation2 + $0x2e0] sm:$0xff]
        %v382 = vld [vmem:[#allocation2 + $0x2e8] sm:$0xff]
        %v383 = vld [vmem:[#allocation2 + $0x2f0] sm:$0xff]
        %v384 = vld [vmem:[#allocation2 + $0x2f8] sm:$0xff]
        %v385 = vld [vmem:[#allocation2 + $0x300] sm:$0xff]
        %v386 = vld [vmem:[#allocation2 + $0x308] sm:$0xff]
        %v387 = vld [vmem:[#allocation2 + $0x310] sm:$0xff]
        %v388 = vld [vmem:[#allocation2 + $0x318] sm:$0xff]
        %v389 = vld [vmem:[#allocation2 + $0x320] sm:$0xff]
        %v390 = vld [vmem:[#allocation2 + $0x328] sm:$0xff]
        %v391 = vld [vmem:[#allocation2 + $0x330] sm:$0xff]
        %v392 = vld [vmem:[#allocation2 + $0x338] sm:$0xff]
        %v393 = vld [vmem:[#allocation2 + $0x340] sm:$0xff]
        %v394 = vld [vmem:[#allocation2 + $0x348] sm:$0xff]
        %v395 = vld [vmem:[#allocation2 + $0x350] sm:$0xff]
        %v396 = vld [vmem:[#allocation2 + $0x358] sm:$0xff]
        %v397 = vld [vmem:[#allocation2 + $0x360] sm:$0xff]
        %v398 = vld [vmem:[#allocation2 + $0x368] sm:$0xff]
        %v399 = vld [vmem:[#allocation2 + $0x370] sm:$0xff]
        %v400 = vld [vmem:[#allocation2 + $0x378] sm:$0xff]
        %v401 = vld [vmem:[#allocation2 + $0x380] sm:$0xff]
        %v402 = vld [vmem:[#allocation2 + $0x388] sm:$0xff]
        %v403 = vld [vmem:[#allocation2 + $0x390] sm:$0xff]
        %v404 = vld [vmem:[#allocation2 + $0x398] sm:$0xff]
        %v405 = vld [vmem:[#allocation2 + $0x3a0] sm:$0xff]
        %v406 = vld [vmem:[#allocation2 + $0x3a8] sm:$0xff]
        %v407 = vld [vmem:[#allocation2 + $0x3b0] sm:$0xff]
        %v408 = vld [vmem:[#allocation2 + $0x3b8] sm:$0xff]
        %v409 = vld [vmem:[#allocation2 + $0x3c0] sm:$0xff]
        %v410 = vld [vmem:[#allocation2 + $0x3c8] sm:$0xff]
        %v411 = vld [vmem:[#allocation2 + $0x3d0] sm:$0xff]
        %v412 = vld [vmem:[#allocation2 + $0x3d8] sm:$0xff]
        %v413 = vld [vmem:[#allocation2 + $0x3e0] sm:$0xff]
        %v414 = vld [vmem:[#allocation2 + $0x3e8] sm:$0xff]
        %v415 = vld [vmem:[#allocation2 + $0x3f0] sm:$0xff]
        %v416 = vld [vmem:[#allocation2 + $0x3f8] sm:$0xff]
        %v417 = vld [vmem:[#allocation2 + $0x400] sm:$0xff]
        %v418 = vld [vmem:[#allocation2 + $0x408] sm:$0xff]
        %v419 = vld [vmem:[#allocation2 + $0x410] sm:$0xff]
        %v420 = vld [vmem:[#allocation2 + $0x418] sm:$0xff]
        %v421 = vld [vmem:[#allocation2 + $0x420] sm:$0xff]
        %v422 = vld [vmem:[#allocation2 + $0x428] sm:$0xff]
        %v423 = vld [vmem:[#allocation2 + $0x430] sm:$0xff]
        %v424 = vld [vmem:[#allocation2 + $0x438] sm:$0xff]
        %v425 = vld [vmem:[#allocation2 + $0x440] sm:$0xff]
        %v426 = vld [vmem:[#allocation2 + $0x448] sm:$0xff]
        %v427 = vld [vmem:[#allocation2 + $0x450] sm:$0xff]
        %v428 = vld [vmem:[#allocation2 + $0x458] sm:$0xff]
        %v429 = vld [vmem:[#allocation2 + $0x460] sm:$0xff]
        %v430 = vld [vmem:[#allocation2 + $0x468] sm:$0xff]
        %v431 = vld [vmem:[#allocation2 + $0x470] sm:$0xff]
        %v432 = vld [vmem:[#allocation2 + $0x478] sm:$0xff]
        %v433 = vld [vmem:[#allocation2 + $0x480] sm:$0xff]
        %v434 = vld [vmem:[#allocation2 + $0x488] sm:$0xff]
        %v435 = vld [vmem:[#allocation2 + $0x490] sm:$0xff]
        %v436 = vld [vmem:[#allocation2 + $0x498] sm:$0xff]
        %v437 = vld [vmem:[#allocation2 + $0x4a0] sm:$0xff]
        %v438 = vld [vmem:[#allocation2 + $0x4a8] sm:$0xff]
        %v439 = vld [vmem:[#allocation4] sm:$0x3f]
        %v440 = vld [vmem:[%s3] sm:$0xff]
        %v441 = vld [vmem:[%s3 + $0x8] sm:$0xff]
        %v442 = vld [vmem:[%s3 + $0x10] sm:$0xff]
        %v443 = vld [vmem:[%s3 + $0x18] sm:$0xff]
        %v444 = vld [vmem:[%s3 + $0x20] sm:$0xff]
        %v445 = vld [vmem:[%s3 + $0x28] sm:$0xff]
        %v446 = vld [vmem:[%s3 + $0x30] sm:$0xff]
        %v447 = vld [vmem:[%s3 + $0x38] sm:$0xff]
        %v448 = vld [vmem:[%s3 + $0x40] sm:$0xff]
        %v449 = vld [vmem:[%s3 + $0x48] sm:$0xff]
        %v450 = vld [vmem:[%s3 + $0x50] sm:$0xff]
        %v451 = vld [vmem:[%s3 + $0x58] sm:$0xff]
        %v452 = vld [vmem:[%s3 + $0x60] sm:$0xff]
        %v453 = vld [vmem:[%s3 + $0x68] sm:$0xff]
        %v454 = vld [vmem:[%s3 + $0x70] sm:$0xff]
        %v455 = vld [vmem:[%s3 + $0x78] sm:$0xff]
        %v456 = vld [vmem:[%s3 + $0x80] sm:$0xff]
        %v457 = vld [vmem:[%s3 + $0x88] sm:$0xff]
        %v458 = vld [vmem:[%s3 + $0x90] sm:$0xff]
        %v459 = vld [vmem:[%s3 + $0x98] sm:$0xff]
        %v460 = vld [vmem:[%s3 + $0xa0] sm:$0xff]
        %v461 = vld [vmem:[%s3 + $0xa8] sm:$0xff]
        %v462 = vld [vmem:[%s3 + $0xb0] sm:$0xff]
        %v463 = vld [vmem:[%s3 + $0xb8] sm:$0xff]
        %v464 = vld [vmem:[%s3 + $0xc0] sm:$0xff]
        %v465 = vld [vmem:[%s3 + $0xc8] sm:$0xff]
        %v466 = vld [vmem:[%s3 + $0xd0] sm:$0xff]
        %v467 = vld [vmem:[%s3 + $0xd8] sm:$0xff]
        %v468 = vld [vmem:[%s3 + $0xe0] sm:$0xff]
        %v469 = vld [vmem:[%s3 + $0xe8] sm:$0xff]
        %v470 = vld [vmem:[%s3 + $0xf0] sm:$0xff]
        %v471 = vld [vmem:[%s3 + $0xf8] sm:$0xff]
        %v472 = vld [vmem:[%s3 + $0x100] sm:$0xff]
        %v473 = vld [vmem:[%s3 + $0x108] sm:$0xff]
        %v474 = vld [vmem:[%s3 + $0x110] sm:$0xff]
        %v475 = vld [vmem:[%s3 + $0x118] sm:$0xff]
        %v476 = vld [vmem:[%s3 + $0x120] sm:$0xff]
        %v477 = vld [vmem:[%s3 + $0x128] sm:$0xff]
        %v478 = vld [vmem:[%s3 + $0x130] sm:$0xff]
        %v479 = vld [vmem:[%s3 + $0x138] sm:$0xff]
        %v480 = vld [vmem:[#allocation6] sm:$0x1]
        %v482 = vlaneseq
        %v483 = vshrl.u32 %v482, 7
        %v484 = vsub.s32 0, %v483
        %v485 = vrot.slane %v439, %v484
        %v486 = vlaneseq
        %v487 = vshrl.u32 %v486, 7
        %v488 = vsub.s32 1, %v487
        %v489 = vrot.slane %v439, %v488
        %v490 = vlaneseq
        %v491 = vshrl.u32 %v490, 7
        %v492 = vsub.s32 2, %v491
        %v493 = vrot.slane %v439, %v492
        %v494 = vlaneseq
        %v495 = vshrl.u32 %v494, 7
        %v496 = vsub.s32 3, %v495
        %v497 = vrot.slane %v439, %v496
        %v498 = vlaneseq
        %v499 = vshrl.u32 %v498, 7
        %v500 = vsub.s32 4, %v499
        %v501 = vrot.slane %v439, %v500
        %v502 = vlaneseq
        %v503 = vshrl.u32 %v502, 7
        %v504 = vsub.s32 5, %v503
        %v505 = vrot.slane %v439, %v504
        %vm512 = vcmask 588800
        %v514 = vsel %vm512, %v266, 0
        %v517 = vsel %vm512, %v270, 0
        %v520 = vsel %vm512, %v274, 0
        %v523 = vsel %vm512, %v278, 0
        %v526 = vsel %vm512, %v282, 0
        %v529 = vsel %vm512, %v286, 0
        %531 = vmatprep.subr.mxu0 %v290
        %532 = vmatpush1.msra.mxu0 %v289
        %533 = vmatprep.subr.mxu0 %v296
        %534 = vmatpush1.msra.mxu0 %v295
        %535 = vmatprep.subr.mxu0 %v302
        %536 = vmatpush1.msra.mxu0 %v301
        %537 = vmatprep.subr.mxu0 %v308
        %538 = vmatpush1.msra.mxu0 %v307
        %539 = vmatprep.subr.mxu0 %v314
        %540 = vmatpush1.msra.mxu0 %v313
        %541 = vmatprep.subr.mxu0 %v320
        %542 = vmatpush1.msra.mxu0 %v319
        %543 = vmatprep.subr.mxu0 %v326
        %544 = vmatpush1.msra.mxu0 %v325
        %545 = vmatprep.subr.mxu0 %v332
        %546 = vmatpush1.msra.mxu0 %v331
        %547 = vmatprep.subr.mxu0 %v338
        %548 = vmatpush1.msra.mxu0 %v337
        %549 = vmatprep.subr.mxu0 %v344
        %550 = vmatpush1.msra.mxu0 %v343
        %551 = vmatprep.subr.mxu0 %v350
        %552 = vmatpush1.msra.mxu0 %v349
        %553 = vmatprep.subr.mxu0 %v356
        %554 = vmatpush1.msra.mxu0 %v355
        %555 = vmatprep.subr.mxu0 %v362
        %556 = vmatpush1.msra.mxu0 %v361
        %557 = vmatprep.subr.mxu0 %v368
        %558 = vmatpush1.msra.mxu0 %v367
        %559 = vmatprep.subr.mxu0 %v374
        %560 = vmatpush1.msra.mxu0 %v373
        %561 = vmatprep.subr.mxu0 %v380
        %562 = vmatpush1.msra.mxu0 %v379
        %563 = vmatprep.subr.mxu0 %v386
        %564 = vmatpush1.msra.mxu0 %v385
        %565 = vmatprep.subr.mxu0 %v392
        %566 = vmatpush1.msra.mxu0 %v391
        %567 = vmatprep.subr.mxu0 %v398
        %568 = vmatpush1.msra.mxu0 %v397
        %569 = vmatprep.subr.mxu0 %v404
        %570 = vmatpush1.msra.mxu0 %v403
        %571 = vmatprep.subr.mxu0 %v410
        %572 = vmatpush1.msra.mxu0 %v409
        %573 = vmatprep.subr.mxu0 %v416
        %574 = vmatpush1.msra.mxu0 %v415
        %575 = vmatprep.subr.mxu0 %v422
        %576 = vmatpush1.msra.mxu0 %v421
        %577 = vmatprep.subr.mxu0 %v428
        %578 = vmatpush1.msra.mxu0 %v427
        %579 = vmatprep.subr.mxu0 %v434
        %580 = vmatpush1.msra.mxu0 %v433
        %581 = vmatprep.subr.mxu0 0.0
        %582 = vmatpush1.msra.mxu0 0.0
        %583 = vmatprep.subr.mxu0 0.0
        %584 = vmatpush1.msra.mxu0 0.0
        %585 = vmatprep.subr.mxu0 0.0
        %586 = vmatpush1.msra.mxu0 0.0
        %587 = vmatprep.subr.mxu0 0.0
        %588 = vmatpush1.msra.mxu0 0.0
        %589 = vmatprep.subr.mxu0 0.0
        %590 = vmatpush1.msra.mxu0 0.0
        %591 = vmatprep.subr.mxu0 0.0
        %592 = vmatpush1.msra.mxu0 0.0
        %593 = vmatprep.subr.mxu0 0.0
        %594 = vmatpush1.msra.mxu0 0.0
        %595 = vmatprep.mubr.f32.mxu0 %v514
        %596 = vmatmul.mubr.f32.gmra.mrb[0].mxu0 %v265
        %v597 = vpop.f32.mrb[0].mxu0
        %v598 = vadd.f32 %v485, %v597
        %v599 = vpop.f32.mrb[0].mxu0
        %v600 = vadd.f32 %v489, %v599
        %601 = vmatprep.mubr.f32.mxu0 %v517
        %602 = vmatmul.mubr.f32.gmra.mrb[0].mxu0 %v269
        %v603 = vpop.f32.mrb[0].mxu0
        %v604 = vadd.f32 %v485, %v603
        %v605 = vpop.f32.mrb[0].mxu0
        %v606 = vadd.f32 %v489, %v605
        %607 = vmatprep.mubr.f32.mxu0 %v520
        %608 = vmatmul.mubr.f32.gmra.mrb[0].mxu0 %v273
        %v609 = vpop.f32.mrb[0].mxu0
        %v610 = vadd.f32 %v485, %v609
        %v611 = vpop.f32.mrb[0].mxu0
        %v612 = vadd.f32 %v489, %v611
        %613 = vmatprep.mubr.f32.mxu0 %v523
        %614 = vmatmul.mubr.f32.gmra.mrb[0].mxu0 %v277
        %v615 = vpop.f32.mrb[0].mxu0
        %v616 = vadd.f32 %v485, %v615
        %v617 = vpop.f32.mrb[0].mxu0
        %v618 = vadd.f32 %v489, %v617
        %619 = vmatprep.mubr.f32.mxu0 %v526
        %620 = vmatmul.mubr.f32.gmra.mrb[0].mxu0 %v281
        %v621 = vpop.f32.mrb[0].mxu0
        %v622 = vadd.f32 %v485, %v621
        %v623 = vpop.f32.mrb[0].mxu0
        %v624 = vadd.f32 %v489, %v623
        %625 = vmatprep.mubr.f32.mxu0 %v529
        %626 = vmatmul.mubr.f32.gmra.mrb[0].mxu0 %v285
        %v627 = vpop.f32.mrb[0].mxu0
        %v628 = vadd.f32 %v485, %v627
        %v629 = vpop.f32.mrb[0].mxu0
        %v630 = vadd.f32 %v489, %v629
        %631 = vdwg.mxu0
        %632 = vmatprep.subr.mxu0 %v292
        %633 = vmatpush1.msra.mxu0 %v291
        %634 = vmatprep.subr.mxu0 %v298
        %635 = vmatpush1.msra.mxu0 %v297
        %636 = vmatprep.subr.mxu0 %v304
        %637 = vmatpush1.msra.mxu0 %v303
        %638 = vmatprep.subr.mxu0 %v310
        %639 = vmatpush1.msra.mxu0 %v309
        %640 = vmatprep.subr.mxu0 %v316
        %641 = vmatpush1.msra.mxu0 %v315
        %642 = vmatprep.subr.mxu0 %v322
        %643 = vmatpush1.msra.mxu0 %v321
        %644 = vmatprep.subr.mxu0 %v328
        %645 = vmatpush1.msra.mxu0 %v327
        %646 = vmatprep.subr.mxu0 %v334
        %647 = vmatpush1.msra.mxu0 %v333
        %648 = vmatprep.subr.mxu0 %v340
        %649 = vmatpush1.msra.mxu0 %v339
        %650 = vmatprep.subr.mxu0 %v346
        %651 = vmatpush1.msra.mxu0 %v345
        %652 = vmatprep.subr.mxu0 %v352
        %653 = vmatpush1.msra.mxu0 %v351
        %654 = vmatprep.subr.mxu0 %v358
        %655 = vmatpush1.msra.mxu0 %v357
        %656 = vmatprep.subr.mxu0 %v364
        %657 = vmatpush1.msra.mxu0 %v363
        %658 = vmatprep.subr.mxu0 %v370
        %659 = vmatpush1.msra.mxu0 %v369
        %660 = vmatprep.subr.mxu0 %v376
        %661 = vmatpush1.msra.mxu0 %v375
        %662 = vmatprep.subr.mxu0 %v382
        %663 = vmatpush1.msra.mxu0 %v381
        %664 = vmatprep.subr.mxu0 %v388
        %665 = vmatpush1.msra.mxu0 %v387
        %666 = vmatprep.subr.mxu0 %v394
        %667 = vmatpush1.msra.mxu0 %v393
        %668 = vmatprep.subr.mxu0 %v400
        %669 = vmatpush1.msra.mxu0 %v399
        %670 = vmatprep.subr.mxu0 %v406
        %671 = vmatpush1.msra.mxu0 %v405
        %672 = vmatprep.subr.mxu0 %v412
        %673 = vmatpush1.msra.mxu0 %v411
        %674 = vmatprep.subr.mxu0 %v418
        %675 = vmatpush1.msra.mxu0 %v417
        %676 = vmatprep.subr.mxu0 %v424
        %677 = vmatpush1.msra.mxu0 %v423
        %678 = vmatprep.subr.mxu0 %v430
        %679 = vmatpush1.msra.mxu0 %v429
        %680 = vmatprep.subr.mxu0 %v436
        %681 = vmatpush1.msra.mxu0 %v435
        %682 = vmatprep.subr.mxu0 0.0
        %683 = vmatpush1.msra.mxu0 0.0
        %684 = vmatprep.subr.mxu0 0.0
        %685 = vmatpush1.msra.mxu0 0.0
        %686 = vmatprep.subr.mxu0 0.0
        %687 = vmatpush1.msra.mxu0 0.0
        %688 = vmatprep.subr.mxu0 0.0
        %689 = vmatpush1.msra.mxu0 0.0
        %690 = vmatprep.subr.mxu0 0.0
        %691 = vmatpush1.msra.mxu0 0.0
        %692 = vmatprep.subr.mxu0 0.0
        %693 = vmatpush1.msra.mxu0 0.0
        %694 = vmatprep.subr.mxu0 0.0
        %695 = vmatpush1.msra.mxu0 0.0
        %696 = vmatprep.mubr.f32.mxu0 %v514
        %697 = vmatmul.mubr.f32.gmra.mrb[0].mxu0 %v265
        %v698 = vpop.f32.mrb[0].mxu0
        %v699 = vadd.f32 %v493, %v698
        %v700 = vpop.f32.mrb[0].mxu0
        %v701 = vadd.f32 %v497, %v700
        %702 = vmatprep.mubr.f32.mxu0 %v517
        %703 = vmatmul.mubr.f32.gmra.mrb[0].mxu0 %v269
        %v704 = vpop.f32.mrb[0].mxu0
        %v705 = vadd.f32 %v493, %v704
        %v706 = vpop.f32.mrb[0].mxu0
        %v707 = vadd.f32 %v497, %v706
        %708 = vmatprep.mubr.f32.mxu0 %v520
        %709 = vmatmul.mubr.f32.gmra.mrb[0].mxu0 %v273
        %v710 = vpop.f32.mrb[0].mxu0
        %v711 = vadd.f32 %v493, %v710
        %v712 = vpop.f32.mrb[0].mxu0
        %v713 = vadd.f32 %v497, %v712
        %714 = vmatprep.mubr.f32.mxu0 %v523
        %715 = vmatmul.mubr.f32.gmra.mrb[0].mxu0 %v277
        %v716 = vpop.f32.mrb[0].mxu0
        %v717 = vadd.f32 %v493, %v716
        %v718 = vpop.f32.mrb[0].mxu0
        %v719 = vadd.f32 %v497, %v718
        %720 = vmatprep.mubr.f32.mxu0 %v526
        %721 = vmatmul.mubr.f32.gmra.mrb[0].mxu0 %v281
        %v722 = vpop.f32.mrb[0].mxu0
        %v723 = vadd.f32 %v493, %v722
        %v724 = vpop.f32.mrb[0].mxu0
        %v725 = vadd.f32 %v497, %v724
        %726 = vmatprep.mubr.f32.mxu0 %v529
        %727 = vmatmul.mubr.f32.gmra.mrb[0].mxu0 %v285
        %v728 = vpop.f32.mrb[0].mxu0
        %v729 = vadd.f32 %v493, %v728
        %v730 = vpop.f32.mrb[0].mxu0
        %v731 = vadd.f32 %v497, %v730
        %732 = vdwg.mxu0
        %733 = vmatprep.subr.mxu0 %v294
        %734 = vmatpush1.msra.mxu0 %v293
        %735 = vmatprep.subr.mxu0 %v300
        %736 = vmatpush1.msra.mxu0 %v299
        %737 = vmatprep.subr.mxu0 %v306
        %738 = vmatpush1.msra.mxu0 %v305
        %739 = vmatprep.subr.mxu0 %v312
        %740 = vmatpush1.msra.mxu0 %v311
        %741 = vmatprep.subr.mxu0 %v318
        %742 = vmatpush1.msra.mxu0 %v317
        %743 = vmatprep.subr.mxu0 %v324
        %744 = vmatpush1.msra.mxu0 %v323
        %745 = vmatprep.subr.mxu0 %v330
        %746 = vmatpush1.msra.mxu0 %v329
        %747 = vmatprep.subr.mxu0 %v336
        %748 = vmatpush1.msra.mxu0 %v335
        %749 = vmatprep.subr.mxu0 %v342
        %750 = vmatpush1.msra.mxu0 %v341
        %751 = vmatprep.subr.mxu0 %v348
        %752 = vmatpush1.msra.mxu0 %v347
        %753 = vmatprep.subr.mxu0 %v354
        %754 = vmatpush1.msra.mxu0 %v353
        %755 = vmatprep.subr.mxu0 %v360
        %756 = vmatpush1.msra.mxu0 %v359
        %757 = vmatprep.subr.mxu0 %v366
        %758 = vmatpush1.msra.mxu0 %v365
        %759 = vmatprep.subr.mxu0 %v372
        %760 = vmatpush1.msra.mxu0 %v371
        %761 = vmatprep.subr.mxu0 %v378
        %762 = vmatpush1.msra.mxu0 %v377
        %763 = vmatprep.subr.mxu0 %v384
        %764 = vmatpush1.msra.mxu0 %v383
        %765 = vmatprep.subr.mxu0 %v390
        %766 = vmatpush1.msra.mxu0 %v389
        %767 = vmatprep.subr.mxu0 %v396
        %768 = vmatpush1.msra.mxu0 %v395
        %769 = vmatprep.subr.mxu0 %v402
        %770 = vmatpush1.msra.mxu0 %v401
        %771 = vmatprep.subr.mxu0 %v408
        %772 = vmatpush1.msra.mxu0 %v407
        %773 = vmatprep.subr.mxu0 %v414
        %774 = vmatpush1.msra.mxu0 %v413
        %775 = vmatprep.subr.mxu0 %v420
        %776 = vmatpush1.msra.mxu0 %v419
        %777 = vmatprep.subr.mxu0 %v426
        %778 = vmatpush1.msra.mxu0 %v425
        %779 = vmatprep.subr.mxu0 %v432
        %780 = vmatpush1.msra.mxu0 %v431
        %781 = vmatprep.subr.mxu0 %v438
        %782 = vmatpush1.msra.mxu0 %v437
        %783 = vmatprep.subr.mxu0 0.0
        %784 = vmatpush1.msra.mxu0 0.0
        %785 = vmatprep.subr.mxu0 0.0
        %786 = vmatpush1.msra.mxu0 0.0
        %787 = vmatprep.subr.mxu0 0.0
        %788 = vmatpush1.msra.mxu0 0.0
        %789 = vmatprep.subr.mxu0 0.0
        %790 = vmatpush1.msra.mxu0 0.0
        %791 = vmatprep.subr.mxu0 0.0
        %792 = vmatpush1.msra.mxu0 0.0
        %793 = vmatprep.subr.mxu0 0.0
        %794 = vmatpush1.msra.mxu0 0.0
        %795 = vmatprep.subr.mxu0 0.0
        %796 = vmatpush1.msra.mxu0 0.0
        %797 = vmatprep.mubr.f32.mxu0 %v514
        %798 = vmatmul.mubr.f32.gmra.mrb[0].mxu0 %v265
        %v799 = vpop.f32.mrb[0].mxu0
        %v800 = vadd.f32 %v501, %v799
        %v801 = vpop.f32.mrb[0].mxu0
        %v802 = vadd.f32 %v505, %v801
        %803 = vmatprep.mubr.f32.mxu0 %v517
        %804 = vmatmul.mubr.f32.gmra.mrb[0].mxu0 %v269
        %v805 = vpop.f32.mrb[0].mxu0
        %v806 = vadd.f32 %v501, %v805
        %v807 = vpop.f32.mrb[0].mxu0
        %v808 = vadd.f32 %v505, %v807
        %809 = vmatprep.mubr.f32.mxu0 %v520
        %810 = vmatmul.mubr.f32.gmra.mrb[0].mxu0 %v273
        %v811 = vpop.f32.mrb[0].mxu0
        %v812 = vadd.f32 %v501, %v811
        %v813 = vpop.f32.mrb[0].mxu0
        %v814 = vadd.f32 %v505, %v813
        %815 = vmatprep.mubr.f32.mxu0 %v523
        %816 = vmatmul.mubr.f32.gmra.mrb[0].mxu0 %v277
        %v817 = vpop.f32.mrb[0].mxu0
        %v818 = vadd.f32 %v501, %v817
        %v819 = vpop.f32.mrb[0].mxu0
        %v820 = vadd.f32 %v505, %v819
        %821 = vmatprep.mubr.f32.mxu0 %v526
        %822 = vmatmul.mubr.f32.gmra.mrb[0].mxu0 %v281
        %v823 = vpop.f32.mrb[0].mxu0
        %v824 = vadd.f32 %v501, %v823
        %v825 = vpop.f32.mrb[0].mxu0
        %v826 = vadd.f32 %v505, %v825
        %827 = vmatprep.mubr.f32.mxu0 %v529
        %828 = vmatmul.mubr.f32.gmra.mrb[0].mxu0 %v285
        %v829 = vpop.f32.mrb[0].mxu0
        %v830 = vadd.f32 %v501, %v829
        %v831 = vpop.f32.mrb[0].mxu0
        %v832 = vadd.f32 %v505, %v831
        %833 = vdwg.mxu0
        %v834 = vmax.f32 %v598, 0.0
        %v835 = vmax.f32 %v600, 0.0
        %v836 = vmax.f32 %v699, 0.0
        %v837 = vmax.f32 %v701, 0.0
        %v838 = vmax.f32 %v800, 0.0
        %v839 = vmax.f32 %v802, 0.0
        %v840 = vmax.f32 %v604, 0.0
        %v841 = vmax.f32 %v606, 0.0
        %v842 = vmax.f32 %v705, 0.0
        %v843 = vmax.f32 %v707, 0.0
        %v844 = vmax.f32 %v806, 0.0
        %v845 = vmax.f32 %v808, 0.0
        %v846 = vmax.f32 %v610, 0.0
        %v847 = vmax.f32 %v612, 0.0
        %v848 = vmax.f32 %v711, 0.0
        %v849 = vmax.f32 %v713, 0.0
        %v850 = vmax.f32 %v812, 0.0
        %v851 = vmax.f32 %v814, 0.0
        %v852 = vmax.f32 %v616, 0.0
        %v853 = vmax.f32 %v618, 0.0
        %v854 = vmax.f32 %v717, 0.0
        %v855 = vmax.f32 %v719, 0.0
        %v856 = vmax.f32 %v818, 0.0
        %v857 = vmax.f32 %v820, 0.0
        %v858 = vmax.f32 %v622, 0.0
        %v859 = vmax.f32 %v624, 0.0
        %v860 = vmax.f32 %v723, 0.0
        %v861 = vmax.f32 %v725, 0.0
        %v862 = vmax.f32 %v824, 0.0
        %v863 = vmax.f32 %v826, 0.0
        %v864 = vmax.f32 %v628, 0.0
        %v865 = vmax.f32 %v630, 0.0
        %v866 = vmax.f32 %v729, 0.0
        %v867 = vmax.f32 %v731, 0.0
        %v868 = vmax.f32 %v830, 0.0
        %v869 = vmax.f32 %v832, 0.0
        %876 = vrot.lane.b32.xlu0 %v834, 64
        %v877 = vpop.permute.xlu0 %876
        %878 = vrot.lane.b32.xlu0 %v840, 64
        %v879 = vpop.permute.xlu0 %878
        %880 = vrot.lane.b32.xlu0 %v846, 64
        %v881 = vpop.permute.xlu0 %880
        %882 = vrot.lane.b32.xlu0 %v852, 64
        %v883 = vpop.permute.xlu0 %882
        %884 = vrot.lane.b32.xlu0 %v858, 64
        %v885 = vpop.permute.xlu0 %884
        %886 = vrot.lane.b32.xlu0 %v864, 64
        %v887 = vpop.permute.xlu0 %886
        %v894 = vmax.f32 %v834, %v877
        %v895 = vmax.f32 %v840, %v879
        %v896 = vmax.f32 %v846, %v881
        %v897 = vmax.f32 %v852, %v883
        %v898 = vmax.f32 %v858, %v885
        %v899 = vmax.f32 %v864, %v887
        %v900 = vmax.f32 %v894, %v835
        %v901 = vmax.f32 %v895, %v841
        %v902 = vmax.f32 %v896, %v847
        %v903 = vmax.f32 %v897, %v853
        %v904 = vmax.f32 %v898, %v859
        %v905 = vmax.f32 %v899, %v865
        %912 = vrot.lane.b32.xlu0 %v835, 64
        %v913 = vpop.permute.xlu0 %912
        %914 = vrot.lane.b32.xlu0 %v841, 64
        %v915 = vpop.permute.xlu0 %914
        %916 = vrot.lane.b32.xlu0 %v847, 64
        %v917 = vpop.permute.xlu0 %916
        %918 = vrot.lane.b32.xlu0 %v853, 64
        %v919 = vpop.permute.xlu0 %918
        %920 = vrot.lane.b32.xlu0 %v859, 64
        %v921 = vpop.permute.xlu0 %920
        %922 = vrot.lane.b32.xlu0 %v865, 64
        %v923 = vpop.permute.xlu0 %922
        %v930 = vmax.f32 %v835, %v913
        %v931 = vmax.f32 %v841, %v915
        %v932 = vmax.f32 %v847, %v917
        %v933 = vmax.f32 %v853, %v919
        %v934 = vmax.f32 %v859, %v921
        %v935 = vmax.f32 %v865, %v923
        %v936 = vmax.f32 %v930, %v836
        %v937 = vmax.f32 %v931, %v842
        %v938 = vmax.f32 %v932, %v848
        %v939 = vmax.f32 %v933, %v854
        %v940 = vmax.f32 %v934, %v860
        %v941 = vmax.f32 %v935, %v866
        %948 = vrot.lane.b32.xlu0 %v836, 64
        %v949 = vpop.permute.xlu0 %948
        %950 = vrot.lane.b32.xlu0 %v842, 64
        %v951 = vpop.permute.xlu0 %950
        %952 = vrot.lane.b32.xlu0 %v848, 64
        %v953 = vpop.permute.xlu0 %952
        %954 = vrot.lane.b32.xlu0 %v854, 64
        %v955 = vpop.permute.xlu0 %954
        %956 = vrot.lane.b32.xlu0 %v860, 64
        %v957 = vpop.permute.xlu0 %956
        %958 = vrot.lane.b32.xlu0 %v866, 64
        %v959 = vpop.permute.xlu0 %958
        %v966 = vmax.f32 %v836, %v949
        %v967 = vmax.f32 %v842, %v951
        %v968 = vmax.f32 %v848, %v953
        %v969 = vmax.f32 %v854, %v955
        %v970 = vmax.f32 %v860, %v957
        %v971 = vmax.f32 %v866, %v959
        %v972 = vmax.f32 %v966, %v837
        %v973 = vmax.f32 %v967, %v843
        %v974 = vmax.f32 %v968, %v849
        %v975 = vmax.f32 %v969, %v855
        %v976 = vmax.f32 %v970, %v861
        %v977 = vmax.f32 %v971, %v867
        %984 = vrot.lane.b32.xlu0 %v837, 64
        %v985 = vpop.permute.xlu0 %984
        %986 = vrot.lane.b32.xlu0 %v843, 64
        %v987 = vpop.permute.xlu0 %986
        %988 = vrot.lane.b32.xlu0 %v849, 64
        %v989 = vpop.permute.xlu0 %988
        %990 = vrot.lane.b32.xlu0 %v855, 64
        %v991 = vpop.permute.xlu0 %990
        %992 = vrot.lane.b32.xlu0 %v861, 64
        %v993 = vpop.permute.xlu0 %992
        %994 = vrot.lane.b32.xlu0 %v867, 64
        %v995 = vpop.permute.xlu0 %994
        %v1002 = vmax.f32 %v837, %v985
        %v1003 = vmax.f32 %v843, %v987
        %v1004 = vmax.f32 %v849, %v989
        %v1005 = vmax.f32 %v855, %v991
        %v1006 = vmax.f32 %v861, %v993
        %v1007 = vmax.f32 %v867, %v995
        %v1008 = vmax.f32 %v1002, %v838
        %v1009 = vmax.f32 %v1003, %v844
        %v1010 = vmax.f32 %v1004, %v850
        %v1011 = vmax.f32 %v1005, %v856
        %v1012 = vmax.f32 %v1006, %v862
        %v1013 = vmax.f32 %v1007, %v868
        %1020 = vrot.lane.b32.xlu0 %v838, 64
        %v1021 = vpop.permute.xlu0 %1020
        %1022 = vrot.lane.b32.xlu0 %v844, 64
        %v1023 = vpop.permute.xlu0 %1022
        %1024 = vrot.lane.b32.xlu0 %v850, 64
        %v1025 = vpop.permute.xlu0 %1024
        %1026 = vrot.lane.b32.xlu0 %v856, 64
        %v1027 = vpop.permute.xlu0 %1026
        %1028 = vrot.lane.b32.xlu0 %v862, 64
        %v1029 = vpop.permute.xlu0 %1028
        %1030 = vrot.lane.b32.xlu0 %v868, 64
        %v1031 = vpop.permute.xlu0 %1030
        %v1038 = vmax.f32 %v838, %v1021
        %v1039 = vmax.f32 %v844, %v1023
        %v1040 = vmax.f32 %v850, %v1025
        %v1041 = vmax.f32 %v856, %v1027
        %v1042 = vmax.f32 %v862, %v1029
        %v1043 = vmax.f32 %v868, %v1031
        %v1044 = vmax.f32 %v1038, %v839
        %v1045 = vmax.f32 %v1039, %v845
        %v1046 = vmax.f32 %v1040, %v851
        %v1047 = vmax.f32 %v1041, %v857
        %v1048 = vmax.f32 %v1042, %v863
        %v1049 = vmax.f32 %v1043, %v869
        %1056 = vrot.lane.b32.xlu0 %v936, 64
        %v1057 = vpop.permute.xlu0 %1056
        %1058 = vrot.lane.b32.xlu0 %v937, 64
        %v1059 = vpop.permute.xlu0 %1058
        %1060 = vrot.lane.b32.xlu0 %v938, 64
        %v1061 = vpop.permute.xlu0 %1060
        %1062 = vrot.lane.b32.xlu0 %v939, 64
        %v1063 = vpop.permute.xlu0 %1062
        %1064 = vrot.lane.b32.xlu0 %v940, 64
        %v1065 = vpop.permute.xlu0 %1064
        %1066 = vrot.lane.b32.xlu0 %v941, 64
        %v1067 = vpop.permute.xlu0 %1066
        %1080 = vrot.lane.b32.xlu0 %v1008, 64
        %v1081 = vpop.permute.xlu0 %1080
        %1082 = vrot.lane.b32.xlu0 %v1009, 64
        %v1083 = vpop.permute.xlu0 %1082
        %1084 = vrot.lane.b32.xlu0 %v1010, 64
        %v1085 = vpop.permute.xlu0 %1084
        %1086 = vrot.lane.b32.xlu0 %v1011, 64
        %v1087 = vpop.permute.xlu0 %1086
        %1088 = vrot.lane.b32.xlu0 %v1012, 64
        %v1089 = vpop.permute.xlu0 %1088
        %1090 = vrot.lane.b32.xlu0 %v1013, 64
        %v1091 = vpop.permute.xlu0 %1090
        %vm1098 = vcmask 523264
        %v1099 = vsel %vm1098, %v900, %v1057
        %v1100 = vsel %vm1098, %v901, %v1059
        %v1101 = vsel %vm1098, %v902, %v1061
        %v1102 = vsel %vm1098, %v903, %v1063
        %v1103 = vsel %vm1098, %v904, %v1065
        %v1104 = vsel %vm1098, %v905, %v1067
        %v1105 = vsel %vm1098, %v972, %v1081
        %v1106 = vsel %vm1098, %v973, %v1083
        %v1107 = vsel %vm1098, %v974, %v1085
        %v1108 = vsel %vm1098, %v975, %v1087
        %v1109 = vsel %vm1098, %v976, %v1089
        %v1110 = vsel %vm1098, %v977, %v1091
        %v1112 = vlaneseq
        %v1113 = vshrl.u32 %v1112, 7
        %v1114 = vsub.s32 0, %v1113
        %v1115 = vrot.slane %v480, %v1114
        %v1118 = vsel %vm1098, %v1044, 0
        %v1121 = vsel %vm1098, %v1045, 0
        %v1124 = vsel %vm1098, %v1046, 0
        %v1127 = vsel %vm1098, %v1047, 0
        %v1130 = vsel %vm1098, %v1048, 0
        %v1133 = vsel %vm1098, %v1049, 0
        %1135 = vmatprep.subr.mxu0 0.0
        %1136 = vmatpush1.msra.mxu0 %v440
        %1137 = vmatprep.subr.mxu0 0.0
        %1138 = vmatpush1.msra.mxu0 %v441
        %1139 = vmatprep.subr.mxu0 0.0
        %1140 = vmatpush1.msra.mxu0 %v442
        %1141 = vmatprep.subr.mxu0 0.0
        %1142 = vmatpush1.msra.mxu0 %v443
        %1143 = vmatprep.subr.mxu0 0.0
        %1144 = vmatpush1.msra.mxu0 %v444
        %1145 = vmatprep.subr.mxu0 0.0
        %1146 = vmatpush1.msra.mxu0 %v445
        %1147 = vmatprep.subr.mxu0 0.0
        %1148 = vmatpush1.msra.mxu0 %v446
        %1149 = vmatprep.subr.mxu0 0.0
        %1150 = vmatpush1.msra.mxu0 %v447
        %1151 = vmatprep.subr.mxu0 0.0
        %1152 = vmatpush1.msra.mxu0 %v448
        %1153 = vmatprep.subr.mxu0 0.0
        %1154 = vmatpush1.msra.mxu0 %v449
        %1155 = vmatprep.subr.mxu0 0.0
        %1156 = vmatpush1.msra.mxu0 %v450
        %1157 = vmatprep.subr.mxu0 0.0
        %1158 = vmatpush1.msra.mxu0 %v451
        %1159 = vmatprep.subr.mxu0 0.0
        %1160 = vmatpush1.msra.mxu0 %v452
        %1161 = vmatprep.subr.mxu0 0.0
        %1162 = vmatpush1.msra.mxu0 %v453
        %1163 = vmatprep.subr.mxu0 0.0
        %1164 = vmatpush1.msra.mxu0 %v454
        %1165 = vmatprep.subr.mxu0 0.0
        %1166 = vmatpush1.msra.mxu0 %v455
        %1167 = vmatprep.subr.mxu0 0.0
        %1168 = vmatpush1.msra.mxu0 %v456
        %1169 = vmatprep.subr.mxu0 0.0
        %1170 = vmatpush1.msra.mxu0 %v457
        %1171 = vmatprep.subr.mxu0 0.0
        %1172 = vmatpush1.msra.mxu0 %v458
        %1173 = vmatprep.subr.mxu0 0.0
        %1174 = vmatpush1.msra.mxu0 %v459
        %1175 = vmatprep.subr.mxu0 0.0
        %1176 = vmatpush1.msra.mxu0 %v460
        %1177 = vmatprep.subr.mxu0 0.0
        %1178 = vmatpush1.msra.mxu0 %v461
        %1179 = vmatprep.subr.mxu0 0.0
        %1180 = vmatpush1.msra.mxu0 %v462
        %1181 = vmatprep.subr.mxu0 0.0
        %1182 = vmatpush1.msra.mxu0 %v463
        %1183 = vmatprep.subr.mxu0 0.0
        %1184 = vmatpush1.msra.mxu0 %v464
        %1185 = vmatprep.subr.mxu0 0.0
        %1186 = vmatpush1.msra.mxu0 %v465
        %1187 = vmatprep.subr.mxu0 0.0
        %1188 = vmatpush1.msra.mxu0 %v466
        %1189 = vmatprep.subr.mxu0 0.0
        %1190 = vmatpush1.msra.mxu0 %v467
        %1191 = vmatprep.subr.mxu0 0.0
        %1192 = vmatpush1.msra.mxu0 %v468
        %1193 = vmatprep.subr.mxu0 0.0
        %1194 = vmatpush1.msra.mxu0 %v469
        %1195 = vmatprep.subr.mxu0 0.0
        %1196 = vmatpush1.msra.mxu0 %v470
        %1197 = vmatprep.subr.mxu0 0.0
        %1198 = vmatpush1.msra.mxu0 %v471
        %1199 = vmatprep.mubr.f32.mxu0 %v1105
        %1200 = vmatmul.mubr.f32.gmra.mrb[0].mxu0 %v1099
        %v1201 = vpop.f32.mrb[0].mxu0
        %v1202 = vadd.f32 %v1115, %v1201
        %v1203 = vpop.f32.mrb[0].mxu0
        %1204 = vmatprep.mubr.f32.mxu0 %v1106
        %1205 = vmatmul.mubr.f32.gmra.mrb[0].mxu0 %v1100
        %v1206 = vpop.f32.mrb[0].mxu0
        %v1207 = vadd.f32 %v1115, %v1206
        %v1208 = vpop.f32.mrb[0].mxu0
        %1209 = vmatprep.mubr.f32.mxu0 %v1107
        %1210 = vmatmul.mubr.f32.gmra.mrb[0].mxu0 %v1101
        %v1211 = vpop.f32.mrb[0].mxu0
        %v1212 = vadd.f32 %v1115, %v1211
        %v1213 = vpop.f32.mrb[0].mxu0
        %1214 = vmatprep.mubr.f32.mxu0 %v1108
        %1215 = vmatmul.mubr.f32.gmra.mrb[0].mxu0 %v1102
        %v1216 = vpop.f32.mrb[0].mxu0
        %v1217 = vadd.f32 %v1115, %v1216
        %v1218 = vpop.f32.mrb[0].mxu0
        %1219 = vmatprep.mubr.f32.mxu0 %v1109
        %1220 = vmatmul.mubr.f32.gmra.mrb[0].mxu0 %v1103
        %v1221 = vpop.f32.mrb[0].mxu0
        %v1222 = vadd.f32 %v1115, %v1221
        %v1223 = vpop.f32.mrb[0].mxu0
        %1224 = vmatprep.mubr.f32.mxu0 %v1110
        %1225 = vmatmul.mubr.f32.gmra.mrb[0].mxu0 %v1104
        %v1226 = vpop.f32.mrb[0].mxu0
        %v1227 = vadd.f32 %v1115, %v1226
        %v1228 = vpop.f32.mrb[0].mxu0
        %1229 = vdwg.mxu0
        %1230 = vmatprep.subr.mxu0 0.0
        %1231 = vmatpush1.msra.mxu0 %v472
        %1232 = vmatprep.subr.mxu0 0.0
        %1233 = vmatpush1.msra.mxu0 %v473
        %1234 = vmatprep.subr.mxu0 0.0
        %1235 = vmatpush1.msra.mxu0 %v474
        %1236 = vmatprep.subr.mxu0 0.0
        %1237 = vmatpush1.msra.mxu0 %v475
        %1238 = vmatprep.subr.mxu0 0.0
        %1239 = vmatpush1.msra.mxu0 %v476
        %1240 = vmatprep.subr.mxu0 0.0
        %1241 = vmatpush1.msra.mxu0 %v477
        %1242 = vmatprep.subr.mxu0 0.0
        %1243 = vmatpush1.msra.mxu0 %v478
        %1244 = vmatprep.subr.mxu0 0.0
        %1245 = vmatpush1.msra.mxu0 %v479
        %1246 = vmatprep.subr.mxu0 0.0
        %1247 = vmatpush1.msra.mxu0 0.0
        %1248 = vmatprep.subr.mxu0 0.0
        %1249 = vmatpush1.msra.mxu0 0.0
        %1250 = vmatprep.subr.mxu0 0.0
        %1251 = vmatpush1.msra.mxu0 0.0
        %1252 = vmatprep.subr.mxu0 0.0
        %1253 = vmatpush1.msra.mxu0 0.0
        %1254 = vmatprep.subr.mxu0 0.0
        %1255 = vmatpush1.msra.mxu0 0.0
        %1256 = vmatprep.subr.mxu0 0.0
        %1257 = vmatpush1.msra.mxu0 0.0
        %1258 = vmatprep.subr.mxu0 0.0
        %1259 = vmatpush1.msra.mxu0 0.0
        %1260 = vmatprep.subr.mxu0 0.0
        %1261 = vmatpush1.msra.mxu0 0.0
        %1262 = vmatprep.subr.mxu0 0.0
        %1263 = vmatpush1.msra.mxu0 0.0
        %1264 = vmatprep.subr.mxu0 0.0
        %1265 = vmatpush1.msra.mxu0 0.0
        %1266 = vmatprep.subr.mxu0 0.0
        %1267 = vmatpush1.msra.mxu0 0.0
        %1268 = vmatprep.subr.mxu0 0.0
        %1269 = vmatpush1.msra.mxu0 0.0
        %1270 = vmatprep.subr.mxu0 0.0
        %1271 = vmatpush1.msra.mxu0 0.0
        %1272 = vmatprep.subr.mxu0 0.0
        %1273 = vmatpush1.msra.mxu0 0.0
        %1274 = vmatprep.subr.mxu0 0.0
        %1275 = vmatpush1.msra.mxu0 0.0
        %1276 = vmatprep.subr.mxu0 0.0
        %1277 = vmatpush1.msra.mxu0 0.0
        %1278 = vmatprep.subr.mxu0 0.0
        %1279 = vmatpush1.msra.mxu0 0.0
        %1280 = vmatprep.subr.mxu0 0.0
        %1281 = vmatpush1.msra.mxu0 0.0
        %1282 = vmatprep.subr.mxu0 0.0
        %1283 = vmatpush1.msra.mxu0 0.0
        %1284 = vmatprep.subr.mxu0 0.0
        %1285 = vmatpush1.msra.mxu0 0.0
        %1286 = vmatprep.subr.mxu0 0.0
        %1287 = vmatpush1.msra.mxu0 0.0
        %1288 = vmatprep.subr.mxu0 0.0
        %1289 = vmatpush1.msra.mxu0 0.0
        %1290 = vmatprep.subr.mxu0 0.0
        %1291 = vmatpush1.msra.mxu0 0.0
        %1292 = vmatprep.subr.mxu0 0.0
        %1293 = vmatpush1.msra.mxu0 0.0
        %1294 = vmatprep.mubr.f32.mxu0 0.0
        %1295 = vmatmul.mubr.f32.gmra.mrb[0].mxu0 %v1118
        %v1296 = vpop.f32.mrb[0].mxu0
        %v1297 = vadd.f32 %v1202, %v1296
        %v1298 = vpop.f32.mrb[0].mxu0
        %1299 = vmatprep.mubr.f32.mxu0 0.0
        %1300 = vmatmul.mubr.f32.gmra.mrb[0].mxu0 %v1121
        %v1301 = vpop.f32.mrb[0].mxu0
        %v1302 = vadd.f32 %v1207, %v1301
        %v1303 = vpop.f32.mrb[0].mxu0
        %1304 = vmatprep.mubr.f32.mxu0 0.0
        %1305 = vmatmul.mubr.f32.gmra.mrb[0].mxu0 %v1124
        %v1306 = vpop.f32.mrb[0].mxu0
        %v1307 = vadd.f32 %v1212, %v1306
        %v1308 = vpop.f32.mrb[0].mxu0
        %1309 = vmatprep.mubr.f32.mxu0 0.0
        %1310 = vmatmul.mubr.f32.gmra.mrb[0].mxu0 %v1127
        %v1311 = vpop.f32.mrb[0].mxu0
        %v1312 = vadd.f32 %v1217, %v1311
        %v1313 = vpop.f32.mrb[0].mxu0
        %1314 = vmatprep.mubr.f32.mxu0 0.0
        %1315 = vmatmul.mubr.f32.gmra.mrb[0].mxu0 %v1130
        %v1316 = vpop.f32.mrb[0].mxu0
        %v1317 = vadd.f32 %v1222, %v1316
        %v1318 = vpop.f32.mrb[0].mxu0
        %1319 = vmatprep.mubr.f32.mxu0 0.0
        %1320 = vmatmul.mubr.f32.gmra.mrb[0].mxu0 %v1133
        %v1321 = vpop.f32.mrb[0].mxu0
        %v1322 = vadd.f32 %v1227, %v1321
        %v1323 = vpop.f32.mrb[0].mxu0
        %1324 = vdwg.mxu0
        %v1325 = vmax.f32 %v1297, 0.0
        %v1326 = vmax.f32 %v1302, 0.0
        %v1327 = vmax.f32 %v1307, 0.0
        %v1328 = vmax.f32 %v1312, 0.0
        %v1329 = vmax.f32 %v1317, 0.0
        %v1330 = vmax.f32 %v1322, 0.0
        %1343 = vrot.lane.b32.xlu0 %v266, 56
        %v1344 = vpop.permute.xlu0 %1343
        %1345 = vrot.lane.b32.xlu0 %v267, 56
        %v1346 = vpop.permute.xlu0 %1345
        %1347 = vrot.lane.b32.xlu0 %v268, 56
        %v1348 = vpop.permute.xlu0 %1347
        %1349 = vrot.lane.b32.xlu0 %v270, 56
        %v1350 = vpop.permute.xlu0 %1349
        %1351 = vrot.lane.b32.xlu0 %v271, 56
        %v1352 = vpop.permute.xlu0 %1351
        %1353 = vrot.lane.b32.xlu0 %v272, 56
        %v1354 = vpop.permute.xlu0 %1353
        %1355 = vrot.lane.b32.xlu0 %v274, 56
        %v1356 = vpop.permute.xlu0 %1355
        %1357 = vrot.lane.b32.xlu0 %v275, 56
        %v1358 = vpop.permute.xlu0 %1357
        %1359 = vrot.lane.b32.xlu0 %v276, 56
        %v1360 = vpop.permute.xlu0 %1359
        %1361 = vrot.lane.b32.xlu0 %v278, 56
        %v1362 = vpop.permute.xlu0 %1361
        %1363 = vrot.lane.b32.xlu0 %v279, 56
        %v1364 = vpop.permute.xlu0 %1363
        %1365 = vrot.lane.b32.xlu0 %v280, 56
        %v1366 = vpop.permute.xlu0 %1365
        %1367 = vrot.lane.b32.xlu0 %v282, 56
        %v1368 = vpop.permute.xlu0 %1367
        %1369 = vrot.lane.b32.xlu0 %v283, 56
        %v1370 = vpop.permute.xlu0 %1369
        %1371 = vrot.lane.b32.xlu0 %v284, 56
        %v1372 = vpop.permute.xlu0 %1371
        %1373 = vrot.lane.b32.xlu0 %v286, 56
        %v1374 = vpop.permute.xlu0 %1373
        %1375 = vrot.lane.b32.xlu0 %v287, 56
        %v1376 = vpop.permute.xlu0 %1375
        %1377 = vrot.lane.b32.xlu0 %v288, 56
        %v1378 = vpop.permute.xlu0 %1377
        %vm1379 = vcmask 457728
        %v1380 = vsel %vm1379, %v1344, %v1346
        %v1381 = vsel %vm1379, %v1346, %v1348
        %v1382 = vsel %vm1379, %v1350, %v1352
        %v1383 = vsel %vm1379, %v1352, %v1354
        %v1384 = vsel %vm1379, %v1356, %v1358
        %v1385 = vsel %vm1379, %v1358, %v1360
        %v1386 = vsel %vm1379, %v1362, %v1364
        %v1387 = vsel %vm1379, %v1364, %v1366
        %v1388 = vsel %vm1379, %v1368, %v1370
        %v1389 = vsel %vm1379, %v1370, %v1372
        %v1390 = vsel %vm1379, %v1374, %v1376
        %v1391 = vsel %vm1379, %v1376, %v1378
        %v1398 = vsel %vm512, %v1381, 0
        %v1400 = vsel %vm512, %v1383, 0
        %v1402 = vsel %vm512, %v1385, 0
        %v1404 = vsel %vm512, %v1387, 0
        %v1406 = vsel %vm512, %v1389, 0
        %v1408 = vsel %vm512, %v1391, 0
        %1410 = vmatprep.subr.mxu0 %v290
        %1411 = vmatpush1.msra.mxu0 %v289
        %1412 = vmatprep.subr.mxu0 %v296
        %1413 = vmatpush1.msra.mxu0 %v295
        %1414 = vmatprep.subr.mxu0 %v302
        %1415 = vmatpush1.msra.mxu0 %v301
        %1416 = vmatprep.subr.mxu0 %v308
        %1417 = vmatpush1.msra.mxu0 %v307
        %1418 = vmatprep.subr.mxu0 %v314
        %1419 = vmatpush1.msra.mxu0 %v313
        %1420 = vmatprep.subr.mxu0 %v320
        %1421 = vmatpush1.msra.mxu0 %v319
        %1422 = vmatprep.subr.mxu0 %v326
        %1423 = vmatpush1.msra.mxu0 %v325
        %1424 = vmatprep.subr.mxu0 %v332
        %1425 = vmatpush1.msra.mxu0 %v331
        %1426 = vmatprep.subr.mxu0 %v338
        %1427 = vmatpush1.msra.mxu0 %v337
        %1428 = vmatprep.subr.mxu0 %v344
        %1429 = vmatpush1.msra.mxu0 %v343
        %1430 = vmatprep.subr.mxu0 %v350
        %1431 = vmatpush1.msra.mxu0 %v349
        %1432 = vmatprep.subr.mxu0 %v356
        %1433 = vmatpush1.msra.mxu0 %v355
        %1434 = vmatprep.subr.mxu0 %v362
        %1435 = vmatpush1.msra.mxu0 %v361
        %1436 = vmatprep.subr.mxu0 %v368
        %1437 = vmatpush1.msra.mxu0 %v367
        %1438 = vmatprep.subr.mxu0 %v374
        %1439 = vmatpush1.msra.mxu0 %v373
        %1440 = vmatprep.subr.mxu0 %v380
        %1441 = vmatpush1.msra.mxu0 %v379
        %1442 = vmatprep.subr.mxu0 %v386
        %1443 = vmatpush1.msra.mxu0 %v385
        %1444 = vmatprep.subr.mxu0 %v392
        %1445 = vmatpush1.msra.mxu0 %v391
        %1446 = vmatprep.subr.mxu0 %v398
        %1447 = vmatpush1.msra.mxu0 %v397
        %1448 = vmatprep.subr.mxu0 %v404
        %1449 = vmatpush1.msra.mxu0 %v403
        %1450 = vmatprep.subr.mxu0 %v410
        %1451 = vmatpush1.msra.mxu0 %v409
        %1452 = vmatprep.subr.mxu0 %v416
        %1453 = vmatpush1.msra.mxu0 %v415
        %1454 = vmatprep.subr.mxu0 %v422
        %1455 = vmatpush1.msra.mxu0 %v421
        %1456 = vmatprep.subr.mxu0 %v428
        %1457 = vmatpush1.msra.mxu0 %v427
        %1458 = vmatprep.subr.mxu0 %v434
        %1459 = vmatpush1.msra.mxu0 %v433
        %1460 = vmatprep.subr.mxu0 0.0
        %1461 = vmatpush1.msra.mxu0 0.0
        %1462 = vmatprep.subr.mxu0 0.0
        %1463 = vmatpush1.msra.mxu0 0.0
        %1464 = vmatprep.subr.mxu0 0.0
        %1465 = vmatpush1.msra.mxu0 0.0
        %1466 = vmatprep.subr.mxu0 0.0
        %1467 = vmatpush1.msra.mxu0 0.0
        %1468 = vmatprep.subr.mxu0 0.0
        %1469 = vmatpush1.msra.mxu0 0.0
        %1470 = vmatprep.subr.mxu0 0.0
        %1471 = vmatpush1.msra.mxu0 0.0
        %1472 = vmatprep.subr.mxu0 0.0
        %1473 = vmatpush1.msra.mxu0 0.0
        %1474 = vmatprep.mubr.f32.mxu0 %v1398
        %1475 = vmatmul.mubr.f32.gmra.mrb[0].mxu0 %v1380
        %v1476 = vpop.f32.mrb[0].mxu0
        %v1477 = vadd.f32 %v485, %v1476
        %v1478 = vpop.f32.mrb[0].mxu0
        %v1479 = vadd.f32 %v489, %v1478
        %1480 = vmatprep.mubr.f32.mxu0 %v1400
        %1481 = vmatmul.mubr.f32.gmra.mrb[0].mxu0 %v1382
        %v1482 = vpop.f32.mrb[0].mxu0
        %v1483 = vadd.f32 %v485, %v1482
        %v1484 = vpop.f32.mrb[0].mxu0
        %v1485 = vadd.f32 %v489, %v1484
        %1486 = vmatprep.mubr.f32.mxu0 %v1402
        %1487 = vmatmul.mubr.f32.gmra.mrb[0].mxu0 %v1384
        %v1488 = vpop.f32.mrb[0].mxu0
        %v1489 = vadd.f32 %v485, %v1488
        %v1490 = vpop.f32.mrb[0].mxu0
        %v1491 = vadd.f32 %v489, %v1490
        %1492 = vmatprep.mubr.f32.mxu0 %v1404
        %1493 = vmatmul.mubr.f32.gmra.mrb[0].mxu0 %v1386
        %v1494 = vpop.f32.mrb[0].mxu0
        %v1495 = vadd.f32 %v485, %v1494
        %v1496 = vpop.f32.mrb[0].mxu0
        %v1497 = vadd.f32 %v489, %v1496
        %1498 = vmatprep.mubr.f32.mxu0 %v1406
        %1499 = vmatmul.mubr.f32.gmra.mrb[0].mxu0 %v1388
        %v1500 = vpop.f32.mrb[0].mxu0
        %v1501 = vadd.f32 %v485, %v1500
        %v1502 = vpop.f32.mrb[0].mxu0
        %v1503 = vadd.f32 %v489, %v1502
        %1504 = vmatprep.mubr.f32.mxu0 %v1408
        %1505 = vmatmul.mubr.f32.gmra.mrb[0].mxu0 %v1390
        %v1506 = vpop.f32.mrb[0].mxu0
        %v1507 = vadd.f32 %v485, %v1506
        %v1508 = vpop.f32.mrb[0].mxu0
        %v1509 = vadd.f32 %v489, %v1508
        %1510 = vdwg.mxu0
        %1511 = vmatprep.subr.mxu0 %v292
        %1512 = vmatpush1.msra.mxu0 %v291
        %1513 = vmatprep.subr.mxu0 %v298
        %1514 = vmatpush1.msra.mxu0 %v297
        %1515 = vmatprep.subr.mxu0 %v304
        %1516 = vmatpush1.msra.mxu0 %v303
        %1517 = vmatprep.subr.mxu0 %v310
        %1518 = vmatpush1.msra.mxu0 %v309
        %1519 = vmatprep.subr.mxu0 %v316
        %1520 = vmatpush1.msra.mxu0 %v315
        %1521 = vmatprep.subr.mxu0 %v322
        %1522 = vmatpush1.msra.mxu0 %v321
        %1523 = vmatprep.subr.mxu0 %v328
        %1524 = vmatpush1.msra.mxu0 %v327
        %1525 = vmatprep.subr.mxu0 %v334
        %1526 = vmatpush1.msra.mxu0 %v333
        %1527 = vmatprep.subr.mxu0 %v340
        %1528 = vmatpush1.msra.mxu0 %v339
        %1529 = vmatprep.subr.mxu0 %v346
        %1530 = vmatpush1.msra.mxu0 %v345
        %1531 = vmatprep.subr.mxu0 %v352
        %1532 = vmatpush1.msra.mxu0 %v351
        %1533 = vmatprep.subr.mxu0 %v358
        %1534 = vmatpush1.msra.mxu0 %v357
        %1535 = vmatprep.subr.mxu0 %v364
        %1536 = vmatpush1.msra.mxu0 %v363
        %1537 = vmatprep.subr.mxu0 %v370
        %1538 = vmatpush1.msra.mxu0 %v369
        %1539 = vmatprep.subr.mxu0 %v376
        %1540 = vmatpush1.msra.mxu0 %v375
        %1541 = vmatprep.subr.mxu0 %v382
        %1542 = vmatpush1.msra.mxu0 %v381
        %1543 = vmatprep.subr.mxu0 %v388
        %1544 = vmatpush1.msra.mxu0 %v387
        %1545 = vmatprep.subr.mxu0 %v394
        %1546 = vmatpush1.msra.mxu0 %v393
        %1547 = vmatprep.subr.mxu0 %v400
        %1548 = vmatpush1.msra.mxu0 %v399
        %1549 = vmatprep.subr.mxu0 %v406
        %1550 = vmatpush1.msra.mxu0 %v405
        %1551 = vmatprep.subr.mxu0 %v412
        %1552 = vmatpush1.msra.mxu0 %v411
        %1553 = vmatprep.subr.mxu0 %v418
        %1554 = vmatpush1.msra.mxu0 %v417
        %1555 = vmatprep.subr.mxu0 %v424
        %1556 = vmatpush1.msra.mxu0 %v423
        %1557 = vmatprep.subr.mxu0 %v430
        %1558 = vmatpush1.msra.mxu0 %v429
        %1559 = vmatprep.subr.mxu0 %v436
        %1560 = vmatpush1.msra.mxu0 %v435
        %1561 = vmatprep.subr.mxu0 0.0
        %1562 = vmatpush1.msra.mxu0 0.0
        %1563 = vmatprep.subr.mxu0 0.0
        %1564 = vmatpush1.msra.mxu0 0.0
        %1565 = vmatprep.subr.mxu0 0.0
        %1566 = vmatpush1.msra.mxu0 0.0
        %1567 = vmatprep.subr.mxu0 0.0
        %1568 = vmatpush1.msra.mxu0 0.0
        %1569 = vmatprep.subr.mxu0 0.0
        %1570 = vmatpush1.msra.mxu0 0.0
        %1571 = vmatprep.subr.mxu0 0.0
        %1572 = vmatpush1.msra.mxu0 0.0
        %1573 = vmatprep.subr.mxu0 0.0
        %1574 = vmatpush1.msra.mxu0 0.0
        %1575 = vmatprep.mubr.f32.mxu0 %v1398
        %1576 = vmatmul.mubr.f32.gmra.mrb[0].mxu0 %v1380
        %v1577 = vpop.f32.mrb[0].mxu0
        %v1578 = vadd.f32 %v493, %v1577
        %v1579 = vpop.f32.mrb[0].mxu0
        %v1580 = vadd.f32 %v497, %v1579
        %1581 = vmatprep.mubr.f32.mxu0 %v1400
        %1582 = vmatmul.mubr.f32.gmra.mrb[0].mxu0 %v1382
        %v1583 = vpop.f32.mrb[0].mxu0
        %v1584 = vadd.f32 %v493, %v1583
        %v1585 = vpop.f32.mrb[0].mxu0
        %v1586 = vadd.f32 %v497, %v1585
        %1587 = vmatprep.mubr.f32.mxu0 %v1402
        %1588 = vmatmul.mubr.f32.gmra.mrb[0].mxu0 %v1384
        %v1589 = vpop.f32.mrb[0].mxu0
        %v1590 = vadd.f32 %v493, %v1589
        %v1591 = vpop.f32.mrb[0].mxu0
        %v1592 = vadd.f32 %v497, %v1591
        %1593 = vmatprep.mubr.f32.mxu0 %v1404
        %1594 = vmatmul.mubr.f32.gmra.mrb[0].mxu0 %v1386
        %v1595 = vpop.f32.mrb[0].mxu0
        %v1596 = vadd.f32 %v493, %v1595
        %v1597 = vpop.f32.mrb[0].mxu0
        %v1598 = vadd.f32 %v497, %v1597
        %1599 = vmatprep.mubr.f32.mxu0 %v1406
        %1600 = vmatmul.mubr.f32.gmra.mrb[0].mxu0 %v1388
        %v1601 = vpop.f32.mrb[0].mxu0
        %v1602 = vadd.f32 %v493, %v1601
        %v1603 = vpop.f32.mrb[0].mxu0
        %v1604 = vadd.f32 %v497, %v1603
        %1605 = vmatprep.mubr.f32.mxu0 %v1408
        %1606 = vmatmul.mubr.f32.gmra.mrb[0].mxu0 %v1390
        %v1607 = vpop.f32.mrb[0].mxu0
        %v1608 = vadd.f32 %v493, %v1607
        %v1609 = vpop.f32.mrb[0].mxu0
        %v1610 = vadd.f32 %v497, %v1609
        %1611 = vdwg.mxu0
        %1612 = vmatprep.subr.mxu0 %v294
        %1613 = vmatpush1.msra.mxu0 %v293
        %1614 = vmatprep.subr.mxu0 %v300
        %1615 = vmatpush1.msra.mxu0 %v299
        %1616 = vmatprep.subr.mxu0 %v306
        %1617 = vmatpush1.msra.mxu0 %v305
        %1618 = vmatprep.subr.mxu0 %v312
        %1619 = vmatpush1.msra.mxu0 %v311
        %1620 = vmatprep.subr.mxu0 %v318
        %1621 = vmatpush1.msra.mxu0 %v317
        %1622 = vmatprep.subr.mxu0 %v324
        %1623 = vmatpush1.msra.mxu0 %v323
        %1624 = vmatprep.subr.mxu0 %v330
        %1625 = vmatpush1.msra.mxu0 %v329
        %1626 = vmatprep.subr.mxu0 %v336
        %1627 = vmatpush1.msra.mxu0 %v335
        %1628 = vmatprep.subr.mxu0 %v342
        %1629 = vmatpush1.msra.mxu0 %v341
        %1630 = vmatprep.subr.mxu0 %v348
        %1631 = vmatpush1.msra.mxu0 %v347
        %1632 = vmatprep.subr.mxu0 %v354
        %1633 = vmatpush1.msra.mxu0 %v353
        %1634 = vmatprep.subr.mxu0 %v360
        %1635 = vmatpush1.msra.mxu0 %v359
        %1636 = vmatprep.subr.mxu0 %v366
        %1637 = vmatpush1.msra.mxu0 %v365
        %1638 = vmatprep.subr.mxu0 %v372
        %1639 = vmatpush1.msra.mxu0 %v371
        %1640 = vmatprep.subr.mxu0 %v378
        %1641 = vmatpush1.msra.mxu0 %v377
        %1642 = vmatprep.subr.mxu0 %v384
        %1643 = vmatpush1.msra.mxu0 %v383
        %1644 = vmatprep.subr.mxu0 %v390
        %1645 = vmatpush1.msra.mxu0 %v389
        %1646 = vmatprep.subr.mxu0 %v396
        %1647 = vmatpush1.msra.mxu0 %v395
        %1648 = vmatprep.subr.mxu0 %v402
        %1649 = vmatpush1.msra.mxu0 %v401
        %1650 = vmatprep.subr.mxu0 %v408
        %1651 = vmatpush1.msra.mxu0 %v407
        %1652 = vmatprep.subr.mxu0 %v414
        %1653 = vmatpush1.msra.mxu0 %v413
        %1654 = vmatprep.subr.mxu0 %v420
        %1655 = vmatpush1.msra.mxu0 %v419
        %1656 = vmatprep.subr.mxu0 %v426
        %1657 = vmatpush1.msra.mxu0 %v425
        %1658 = vmatprep.subr.mxu0 %v432
        %1659 = vmatpush1.msra.mxu0 %v431
        %1660 = vmatprep.subr.mxu0 %v438
        %1661 = vmatpush1.msra.mxu0 %v437
        %1662 = vmatprep.subr.mxu0 0.0
        %1663 = vmatpush1.msra.mxu0 0.0
        %1664 = vmatprep.subr.mxu0 0.0
        %1665 = vmatpush1.msra.mxu0 0.0
        %1666 = vmatprep.subr.mxu0 0.0
        %1667 = vmatpush1.msra.mxu0 0.0
        %1668 = vmatprep.subr.mxu0 0.0
        %1669 = vmatpush1.msra.mxu0 0.0
        %1670 = vmatprep.subr.mxu0 0.0
        %1671 = vmatpush1.msra.mxu0 0.0
        %1672 = vmatprep.subr.mxu0 0.0
        %1673 = vmatpush1.msra.mxu0 0.0
        %1674 = vmatprep.subr.mxu0 0.0
        %1675 = vmatpush1.msra.mxu0 0.0
        %1676 = vmatprep.mubr.f32.mxu0 %v1398
        %1677 = vmatmul.mubr.f32.gmra.mrb[0].mxu0 %v1380
        %v1678 = vpop.f32.mrb[0].mxu0
        %v1679 = vadd.f32 %v501, %v1678
        %v1680 = vpop.f32.mrb[0].mxu0
        %v1681 = vadd.f32 %v505, %v1680
        %1682 = vmatprep.mubr.f32.mxu0 %v1400
        %1683 = vmatmul.mubr.f32.gmra.mrb[0].mxu0 %v1382
        %v1684 = vpop.f32.mrb[0].mxu0
        %v1685 = vadd.f32 %v501, %v1684
        %v1686 = vpop.f32.mrb[0].mxu0
        %v1687 = vadd.f32 %v505, %v1686
        %1688 = vmatprep.mubr.f32.mxu0 %v1402
        %1689 = vmatmul.mubr.f32.gmra.mrb[0].mxu0 %v1384
        %v1690 = vpop.f32.mrb[0].mxu0
        %v1691 = vadd.f32 %v501, %v1690
        %v1692 = vpop.f32.mrb[0].mxu0
        %v1693 = vadd.f32 %v505, %v1692
        %1694 = vmatprep.mubr.f32.mxu0 %v1404
        %1695 = vmatmul.mubr.f32.gmra.mrb[0].mxu0 %v1386
        %v1696 = vpop.f32.mrb[0].mxu0
        %v1697 = vadd.f32 %v501, %v1696
        %v1698 = vpop.f32.mrb[0].mxu0
        %v1699 = vadd.f32 %v505, %v1698
        %1700 = vmatprep.mubr.f32.mxu0 %v1406
        %1701 = vmatmul.mubr.f32.gmra.mrb[0].mxu0 %v1388
        %v1702 = vpop.f32.mrb[0].mxu0
        %v1703 = vadd.f32 %v501, %v1702
        %v1704 = vpop.f32.mrb[0].mxu0
        %v1705 = vadd.f32 %v505, %v1704
        %1706 = vmatprep.mubr.f32.mxu0 %v1408
        %1707 = vmatmul.mubr.f32.gmra.mrb[0].mxu0 %v1390
        %v1708 = vpop.f32.mrb[0].mxu0
        %v1709 = vadd.f32 %v501, %v1708
        %v1710 = vpop.f32.mrb[0].mxu0
        %v1711 = vadd.f32 %v505, %v1710
        %1712 = vdwg.mxu0
        %v1713 = vmax.f32 %v1477, 0.0
        %v1714 = vmax.f32 %v1479, 0.0
        %v1715 = vmax.f32 %v1578, 0.0
        %v1716 = vmax.f32 %v1580, 0.0
        %v1717 = vmax.f32 %v1679, 0.0
        %v1718 = vmax.f32 %v1681, 0.0
        %v1719 = vmax.f32 %v1483, 0.0
        %v1720 = vmax.f32 %v1485, 0.0
        %v1721 = vmax.f32 %v1584, 0.0
        %v1722 = vmax.f32 %v1586, 0.0
        %v1723 = vmax.f32 %v1685, 0.0
        %v1724 = vmax.f32 %v1687, 0.0
        %v1725 = vmax.f32 %v1489, 0.0
        %v1726 = vmax.f32 %v1491, 0.0
        %v1727 = vmax.f32 %v1590, 0.0
        %v1728 = vmax.f32 %v1592, 0.0
        %v1729 = vmax.f32 %v1691, 0.0
        %v1730 = vmax.f32 %v1693, 0.0
        %v1731 = vmax.f32 %v1495, 0.0
        %v1732 = vmax.f32 %v1497, 0.0
        %v1733 = vmax.f32 %v1596, 0.0
        %v1734 = vmax.f32 %v1598, 0.0
        %v1735 = vmax.f32 %v1697, 0.0
        %v1736 = vmax.f32 %v1699, 0.0
        %v1737 = vmax.f32 %v1501, 0.0
        %v1738 = vmax.f32 %v1503, 0.0
        %v1739 = vmax.f32 %v1602, 0.0
        %v1740 = vmax.f32 %v1604, 0.0
        %v1741 = vmax.f32 %v1703, 0.0
        %v1742 = vmax.f32 %v1705, 0.0
        %v1743 = vmax.f32 %v1507, 0.0
        %v1744 = vmax.f32 %v1509, 0.0
        %v1745 = vmax.f32 %v1608, 0.0
        %v1746 = vmax.f32 %v1610, 0.0
        %v1747 = vmax.f32 %v1709, 0.0
        %v1748 = vmax.f32 %v1711, 0.0
        %1755 = vrot.lane.b32.xlu0 %v1713, 64
        %v1756 = vpop.permute.xlu0 %1755
        %1757 = vrot.lane.b32.xlu0 %v1719, 64
        %v1758 = vpop.permute.xlu0 %1757
        %1759 = vrot.lane.b32.xlu0 %v1725, 64
        %v1760 = vpop.permute.xlu0 %1759
        %1761 = vrot.lane.b32.xlu0 %v1731, 64
        %v1762 = vpop.permute.xlu0 %1761
        %1763 = vrot.lane.b32.xlu0 %v1737, 64
        %v1764 = vpop.permute.xlu0 %1763
        %1765 = vrot.lane.b32.xlu0 %v1743, 64
        %v1766 = vpop.permute.xlu0 %1765
        %v1773 = vmax.f32 %v1713, %v1756
        %v1774 = vmax.f32 %v1719, %v1758
        %v1775 = vmax.f32 %v1725, %v1760
        %v1776 = vmax.f32 %v1731, %v1762
        %v1777 = vmax.f32 %v1737, %v1764
        %v1778 = vmax.f32 %v1743, %v1766
        %v1779 = vmax.f32 %v1773, %v1714
        %v1780 = vmax.f32 %v1774, %v1720
        %v1781 = vmax.f32 %v1775, %v1726
        %v1782 = vmax.f32 %v1776, %v1732
        %v1783 = vmax.f32 %v1777, %v1738
        %v1784 = vmax.f32 %v1778, %v1744
        %1791 = vrot.lane.b32.xlu0 %v1714, 64
        %v1792 = vpop.permute.xlu0 %1791
        %1793 = vrot.lane.b32.xlu0 %v1720, 64
        %v1794 = vpop.permute.xlu0 %1793
        %1795 = vrot.lane.b32.xlu0 %v1726, 64
        %v1796 = vpop.permute.xlu0 %1795
        %1797 = vrot.lane.b32.xlu0 %v1732, 64
        %v1798 = vpop.permute.xlu0 %1797
        %1799 = vrot.lane.b32.xlu0 %v1738, 64
        %v1800 = vpop.permute.xlu0 %1799
        %1801 = vrot.lane.b32.xlu0 %v1744, 64
        %v1802 = vpop.permute.xlu0 %1801
        %v1809 = vmax.f32 %v1714, %v1792
        %v1810 = vmax.f32 %v1720, %v1794
        %v1811 = vmax.f32 %v1726, %v1796
        %v1812 = vmax.f32 %v1732, %v1798
        %v1813 = vmax.f32 %v1738, %v1800
        %v1814 = vmax.f32 %v1744, %v1802
        %v1815 = vmax.f32 %v1809, %v1715
        %v1816 = vmax.f32 %v1810, %v1721
        %v1817 = vmax.f32 %v1811, %v1727
        %v1818 = vmax.f32 %v1812, %v1733
        %v1819 = vmax.f32 %v1813, %v1739
        %v1820 = vmax.f32 %v1814, %v1745
        %1827 = vrot.lane.b32.xlu0 %v1715, 64
        %v1828 = vpop.permute.xlu0 %1827
        %1829 = vrot.lane.b32.xlu0 %v1721, 64
        %v1830 = vpop.permute.xlu0 %1829
        %1831 = vrot.lane.b32.xlu0 %v1727, 64
        %v1832 = vpop.permute.xlu0 %1831
        %1833 = vrot.lane.b32.xlu0 %v1733, 64
        %v1834 = vpop.permute.xlu0 %1833
        %1835 = vrot.lane.b32.xlu0 %v1739, 64
        %v1836 = vpop.permute.xlu0 %1835
        %1837 = vrot.lane.b32.xlu0 %v1745, 64
        %v1838 = vpop.permute.xlu0 %1837
        %v1845 = vmax.f32 %v1715, %v1828
        %v1846 = vmax.f32 %v1721, %v1830
        %v1847 = vmax.f32 %v1727, %v1832
        %v1848 = vmax.f32 %v1733, %v1834
        %v1849 = vmax.f32 %v1739, %v1836
        %v1850 = vmax.f32 %v1745, %v1838
        %v1851 = vmax.f32 %v1845, %v1716
        %v1852 = vmax.f32 %v1846, %v1722
        %v1853 = vmax.f32 %v1847, %v1728
        %v1854 = vmax.f32 %v1848, %v1734
        %v1855 = vmax.f32 %v1849, %v1740
        %v1856 = vmax.f32 %v1850, %v1746
        %1863 = vrot.lane.b32.xlu0 %v1716, 64
        %v1864 = vpop.permute.xlu0 %1863
        %1865 = vrot.lane.b32.xlu0 %v1722, 64
        %v1866 = vpop.permute.xlu0 %1865
        %1867 = vrot.lane.b32.xlu0 %v1728, 64
        %v1868 = vpop.permute.xlu0 %1867
        %1869 = vrot.lane.b32.xlu0 %v1734, 64
        %v1870 = vpop.permute.xlu0 %1869
        %1871 = vrot.lane.b32.xlu0 %v1740, 64
        %v1872 = vpop.permute.xlu0 %1871
        %1873 = vrot.lane.b32.xlu0 %v1746, 64
        %v1874 = vpop.permute.xlu0 %1873
        %v1881 = vmax.f32 %v1716, %v1864
        %v1882 = vmax.f32 %v1722, %v1866
        %v1883 = vmax.f32 %v1728, %v1868
        %v1884 = vmax.f32 %v1734, %v1870
        %v1885 = vmax.f32 %v1740, %v1872
        %v1886 = vmax.f32 %v1746, %v1874
        %v1887 = vmax.f32 %v1881, %v1717
        %v1888 = vmax.f32 %v1882, %v1723
        %v1889 = vmax.f32 %v1883, %v1729
        %v1890 = vmax.f32 %v1884, %v1735
        %v1891 = vmax.f32 %v1885, %v1741
        %v1892 = vmax.f32 %v1886, %v1747
        %1899 = vrot.lane.b32.xlu0 %v1717, 64
        %v1900 = vpop.permute.xlu0 %1899
        %1901 = vrot.lane.b32.xlu0 %v1723, 64
        %v1902 = vpop.permute.xlu0 %1901
        %1903 = vrot.lane.b32.xlu0 %v1729, 64
        %v1904 = vpop.permute.xlu0 %1903
        %1905 = vrot.lane.b32.xlu0 %v1735, 64
        %v1906 = vpop.permute.xlu0 %1905
        %1907 = vrot.lane.b32.xlu0 %v1741, 64
        %v1908 = vpop.permute.xlu0 %1907
        %1909 = vrot.lane.b32.xlu0 %v1747, 64
        %v1910 = vpop.permute.xlu0 %1909
        %v1917 = vmax.f32 %v1717, %v1900
        %v1918 = vmax.f32 %v1723, %v1902
        %v1919 = vmax.f32 %v1729, %v1904
        %v1920 = vmax.f32 %v1735, %v1906
        %v1921 = vmax.f32 %v1741, %v1908
        %v1922 = vmax.f32 %v1747, %v1910
        %v1923 = vmax.f32 %v1917, %v1718
        %v1924 = vmax.f32 %v1918, %v1724
        %v1925 = vmax.f32 %v1919, %v1730
        %v1926 = vmax.f32 %v1920, %v1736
        %v1927 = vmax.f32 %v1921, %v1742
        %v1928 = vmax.f32 %v1922, %v1748
        %1935 = vrot.lane.b32.xlu0 %v1815, 64
        %v1936 = vpop.permute.xlu0 %1935
        %1937 = vrot.lane.b32.xlu0 %v1816, 64
        %v1938 = vpop.permute.xlu0 %1937
        %1939 = vrot.lane.b32.xlu0 %v1817, 64
        %v1940 = vpop.permute.xlu0 %1939
        %1941 = vrot.lane.b32.xlu0 %v1818, 64
        %v1942 = vpop.permute.xlu0 %1941
        %1943 = vrot.lane.b32.xlu0 %v1819, 64
        %v1944 = vpop.permute.xlu0 %1943
        %1945 = vrot.lane.b32.xlu0 %v1820, 64
        %v1946 = vpop.permute.xlu0 %1945
        %1959 = vrot.lane.b32.xlu0 %v1887, 64
        %v1960 = vpop.permute.xlu0 %1959
        %1961 = vrot.lane.b32.xlu0 %v1888, 64
        %v1962 = vpop.permute.xlu0 %1961
        %1963 = vrot.lane.b32.xlu0 %v1889, 64
        %v1964 = vpop.permute.xlu0 %1963
        %1965 = vrot.lane.b32.xlu0 %v1890, 64
        %v1966 = vpop.permute.xlu0 %1965
        %1967 = vrot.lane.b32.xlu0 %v1891, 64
        %v1968 = vpop.permute.xlu0 %1967
        %1969 = vrot.lane.b32.xlu0 %v1892, 64
        %v1970 = vpop.permute.xlu0 %1969
        %v1977 = vsel %vm1098, %v1779, %v1936
        %v1978 = vsel %vm1098, %v1780, %v1938
        %v1979 = vsel %vm1098, %v1781, %v1940
        %v1980 = vsel %vm1098, %v1782, %v1942
        %v1981 = vsel %vm1098, %v1783, %v1944
        %v1982 = vsel %vm1098, %v1784, %v1946
        %v1983 = vsel %vm1098, %v1851, %v1960
        %v1984 = vsel %vm1098, %v1852, %v1962
        %v1985 = vsel %vm1098, %v1853, %v1964
        %v1986 = vsel %vm1098, %v1854, %v1966
        %v1987 = vsel %vm1098, %v1855, %v1968
        %v1988 = vsel %vm1098, %v1856, %v1970
        %v1990 = vsel %vm1098, %v1923, 0
        %v1993 = vsel %vm1098, %v1924, 0
        %v1996 = vsel %vm1098, %v1925, 0
        %v1999 = vsel %vm1098, %v1926, 0
        %v2002 = vsel %vm1098, %v1927, 0
        %v2005 = vsel %vm1098, %v1928, 0
        %2007 = vmatprep.subr.mxu0 0.0
        %2008 = vmatpush1.msra.mxu0 %v440
        %2009 = vmatprep.subr.mxu0 0.0
        %2010 = vmatpush1.msra.mxu0 %v441
        %2011 = vmatprep.subr.mxu0 0.0
        %2012 = vmatpush1.msra.mxu0 %v442
        %2013 = vmatprep.subr.mxu0 0.0
        %2014 = vmatpush1.msra.mxu0 %v443
        %2015 = vmatprep.subr.mxu0 0.0
        %2016 = vmatpush1.msra.mxu0 %v444
        %2017 = vmatprep.subr.mxu0 0.0
        %2018 = vmatpush1.msra.mxu0 %v445
        %2019 = vmatprep.subr.mxu0 0.0
        %2020 = vmatpush1.msra.mxu0 %v446
        %2021 = vmatprep.subr.mxu0 0.0
        %2022 = vmatpush1.msra.mxu0 %v447
        %2023 = vmatprep.subr.mxu0 0.0
        %2024 = vmatpush1.msra.mxu0 %v448
        %2025 = vmatprep.subr.mxu0 0.0
        %2026 = vmatpush1.msra.mxu0 %v449
        %2027 = vmatprep.subr.mxu0 0.0
        %2028 = vmatpush1.msra.mxu0 %v450
        %2029 = vmatprep.subr.mxu0 0.0
        %2030 = vmatpush1.msra.mxu0 %v451
        %2031 = vmatprep.subr.mxu0 0.0
        %2032 = vmatpush1.msra.mxu0 %v452
        %2033 = vmatprep.subr.mxu0 0.0
        %2034 = vmatpush1.msra.mxu0 %v453
        %2035 = vmatprep.subr.mxu0 0.0
        %2036 = vmatpush1.msra.mxu0 %v454
        %2037 = vmatprep.subr.mxu0 0.0
        %2038 = vmatpush1.msra.mxu0 %v455
        %2039 = vmatprep.subr.mxu0 0.0
        %2040 = vmatpush1.msra.mxu0 %v456
        %2041 = vmatprep.subr.mxu0 0.0
        %2042 = vmatpush1.msra.mxu0 %v457
        %2043 = vmatprep.subr.mxu0 0.0
        %2044 = vmatpush1.msra.mxu0 %v458
        %2045 = vmatprep.subr.mxu0 0.0
        %2046 = vmatpush1.msra.mxu0 %v459
        %2047 = vmatprep.subr.mxu0 0.0
        %2048 = vmatpush1.msra.mxu0 %v460
        %2049 = vmatprep.subr.mxu0 0.0
        %2050 = vmatpush1.msra.mxu0 %v461
        %2051 = vmatprep.subr.mxu0 0.0
        %2052 = vmatpush1.msra.mxu0 %v462
        %2053 = vmatprep.subr.mxu0 0.0
        %2054 = vmatpush1.msra.mxu0 %v463
        %2055 = vmatprep.subr.mxu0 0.0
        %2056 = vmatpush1.msra.mxu0 %v464
        %2057 = vmatprep.subr.mxu0 0.0
        %2058 = vmatpush1.msra.mxu0 %v465
        %2059 = vmatprep.subr.mxu0 0.0
        %2060 = vmatpush1.msra.mxu0 %v466
        %2061 = vmatprep.subr.mxu0 0.0
        %2062 = vmatpush1.msra.mxu0 %v467
        %2063 = vmatprep.subr.mxu0 0.0
        %2064 = vmatpush1.msra.mxu0 %v468
        %2065 = vmatprep.subr.mxu0 0.0
        %2066 = vmatpush1.msra.mxu0 %v469
        %2067 = vmatprep.subr.mxu0 0.0
        %2068 = vmatpush1.msra.mxu0 %v470
        %2069 = vmatprep.subr.mxu0 0.0
        %2070 = vmatpush1.msra.mxu0 %v471
        %2071 = vmatprep.mubr.f32.mxu0 %v1983
        %2072 = vmatmul.mubr.f32.gmra.mrb[0].mxu0 %v1977
        %v2073 = vpop.f32.mrb[0].mxu0
        %v2074 = vadd.f32 %v1115, %v2073
        %v2075 = vpop.f32.mrb[0].mxu0
        %2076 = vmatprep.mubr.f32.mxu0 %v1984
        %2077 = vmatmul.mubr.f32.gmra.mrb[0].mxu0 %v1978
        %v2078 = vpop.f32.mrb[0].mxu0
        %v2079 = vadd.f32 %v1115, %v2078
        %v2080 = vpop.f32.mrb[0].mxu0
        %2081 = vmatprep.mubr.f32.mxu0 %v1985
        %2082 = vmatmul.mubr.f32.gmra.mrb[0].mxu0 %v1979
        %v2083 = vpop.f32.mrb[0].mxu0
        %v2084 = vadd.f32 %v1115, %v2083
        %v2085 = vpop.f32.mrb[0].mxu0
        %2086 = vmatprep.mubr.f32.mxu0 %v1986
        %2087 = vmatmul.mubr.f32.gmra.mrb[0].mxu0 %v1980
        %v2088 = vpop.f32.mrb[0].mxu0
        %v2089 = vadd.f32 %v1115, %v2088
        %v2090 = vpop.f32.mrb[0].mxu0
        %2091 = vmatprep.mubr.f32.mxu0 %v1987
        %2092 = vmatmul.mubr.f32.gmra.mrb[0].mxu0 %v1981
        %v2093 = vpop.f32.mrb[0].mxu0
        %v2094 = vadd.f32 %v1115, %v2093
        %v2095 = vpop.f32.mrb[0].mxu0
        %2096 = vmatprep.mubr.f32.mxu0 %v1988
        %2097 = vmatmul.mubr.f32.gmra.mrb[0].mxu0 %v1982
        %v2098 = vpop.f32.mrb[0].mxu0
        %v2099 = vadd.f32 %v1115, %v2098
        %v2100 = vpop.f32.mrb[0].mxu0
        %2101 = vdwg.mxu0
        %2102 = vmatprep.subr.mxu0 0.0
        %2103 = vmatpush1.msra.mxu0 %v472
        %2104 = vmatprep.subr.mxu0 0.0
        %2105 = vmatpush1.msra.mxu0 %v473
        %2106 = vmatprep.subr.mxu0 0.0
        %2107 = vmatpush1.msra.mxu0 %v474
        %2108 = vmatprep.subr.mxu0 0.0
        %2109 = vmatpush1.msra.mxu0 %v475
        %2110 = vmatprep.subr.mxu0 0.0
        %2111 = vmatpush1.msra.mxu0 %v476
        %2112 = vmatprep.subr.mxu0 0.0
        %2113 = vmatpush1.msra.mxu0 %v477
        %2114 = vmatprep.subr.mxu0 0.0
        %2115 = vmatpush1.msra.mxu0 %v478
        %2116 = vmatprep.subr.mxu0 0.0
        %2117 = vmatpush1.msra.mxu0 %v479
        %2118 = vmatprep.subr.mxu0 0.0
        %2119 = vmatpush1.msra.mxu0 0.0
        %2120 = vmatprep.subr.mxu0 0.0
        %2121 = vmatpush1.msra.mxu0 0.0
        %2122 = vmatprep.subr.mxu0 0.0
        %2123 = vmatpush1.msra.mxu0 0.0
        %2124 = vmatprep.subr.mxu0 0.0
        %2125 = vmatpush1.msra.mxu0 0.0
        %2126 = vmatprep.subr.mxu0 0.0
        %2127 = vmatpush1.msra.mxu0 0.0
        %2128 = vmatprep.subr.mxu0 0.0
        %2129 = vmatpush1.msra.mxu0 0.0
        %2130 = vmatprep.subr.mxu0 0.0
        %2131 = vmatpush1.msra.mxu0 0.0
        %2132 = vmatprep.subr.mxu0 0.0
        %2133 = vmatpush1.msra.mxu0 0.0
        %2134 = vmatprep.subr.mxu0 0.0
        %2135 = vmatpush1.msra.mxu0 0.0
        %2136 = vmatprep.subr.mxu0 0.0
        %2137 = vmatpush1.msra.mxu0 0.0
        %2138 = vmatprep.subr.mxu0 0.0
        %2139 = vmatpush1.msra.mxu0 0.0
        %2140 = vmatprep.subr.mxu0 0.0
        %2141 = vmatpush1.msra.mxu0 0.0
        %2142 = vmatprep.subr.mxu0 0.0
        %2143 = vmatpush1.msra.mxu0 0.0
        %2144 = vmatprep.subr.mxu0 0.0
        %2145 = vmatpush1.msra.mxu0 0.0
        %2146 = vmatprep.subr.mxu0 0.0
        %2147 = vmatpush1.msra.mxu0 0.0
        %2148 = vmatprep.subr.mxu0 0.0
        %2149 = vmatpush1.msra.mxu0 0.0
        %2150 = vmatprep.subr.mxu0 0.0
        %2151 = vmatpush1.msra.mxu0 0.0
        %2152 = vmatprep.subr.mxu0 0.0
        %2153 = vmatpush1.msra.mxu0 0.0
        %2154 = vmatprep.subr.mxu0 0.0
        %2155 = vmatpush1.msra.mxu0 0.0
        %2156 = vmatprep.subr.mxu0 0.0
        %2157 = vmatpush1.msra.mxu0 0.0
        %2158 = vmatprep.subr.mxu0 0.0
        %2159 = vmatpush1.msra.mxu0 0.0
        %2160 = vmatprep.subr.mxu0 0.0
        %2161 = vmatpush1.msra.mxu0 0.0
        %2162 = vmatprep.subr.mxu0 0.0
        %2163 = vmatpush1.msra.mxu0 0.0
        %2164 = vmatprep.subr.mxu0 0.0
        %2165 = vmatpush1.msra.mxu0 0.0
        %2166 = vmatprep.mubr.f32.mxu0 0.0
        %2167 = vmatmul.mubr.f32.gmra.mrb[0].mxu0 %v1990
        %v2168 = vpop.f32.mrb[0].mxu0
        %v2169 = vadd.f32 %v2074, %v2168
        %v2170 = vpop.f32.mrb[0].mxu0
        %2171 = vmatprep.mubr.f32.mxu0 0.0
        %2172 = vmatmul.mubr.f32.gmra.mrb[0].mxu0 %v1993
        %v2173 = vpop.f32.mrb[0].mxu0
        %v2174 = vadd.f32 %v2079, %v2173
        %v2175 = vpop.f32.mrb[0].mxu0
        %2176 = vmatprep.mubr.f32.mxu0 0.0
        %2177 = vmatmul.mubr.f32.gmra.mrb[0].mxu0 %v1996
        %v2178 = vpop.f32.mrb[0].mxu0
        %v2179 = vadd.f32 %v2084, %v2178
        %v2180 = vpop.f32.mrb[0].mxu0
        %2181 = vmatprep.mubr.f32.mxu0 0.0
        %2182 = vmatmul.mubr.f32.gmra.mrb[0].mxu0 %v1999
        %v2183 = vpop.f32.mrb[0].mxu0
        %v2184 = vadd.f32 %v2089, %v2183
        %v2185 = vpop.f32.mrb[0].mxu0
        %2186 = vmatprep.mubr.f32.mxu0 0.0
        %2187 = vmatmul.mubr.f32.gmra.mrb[0].mxu0 %v2002
        %v2188 = vpop.f32.mrb[0].mxu0
        %v2189 = vadd.f32 %v2094, %v2188
        %v2190 = vpop.f32.mrb[0].mxu0
        %2191 = vmatprep.mubr.f32.mxu0 0.0
        %2192 = vmatmul.mubr.f32.gmra.mrb[0].mxu0 %v2005
        %v2193 = vpop.f32.mrb[0].mxu0
        %v2194 = vadd.f32 %v2099, %v2193
        %v2195 = vpop.f32.mrb[0].mxu0
        %2196 = vdwg.mxu0
        %v2197 = vmax.f32 %v2169, 0.0
        %v2198 = vmax.f32 %v2174, 0.0
        %v2199 = vmax.f32 %v2179, 0.0
        %v2200 = vmax.f32 %v2184, 0.0
        %v2201 = vmax.f32 %v2189, 0.0
        %v2202 = vmax.f32 %v2194, 0.0
        %v2203 = vmax.f32 %v1325, %v2197
        %v2204 = vmax.f32 %v1326, %v2198
        %v2205 = vmax.f32 %v1327, %v2199
        %v2206 = vmax.f32 %v1328, %v2200
        %v2207 = vmax.f32 %v1329, %v2201
        %v2208 = vmax.f32 %v1330, %v2202
        %vm2209 = vcmask 261120
        %2210 = vst.msk [vmem:[%s264] sm:$0xff] %vm2209, %v2203
        %2211 = vst.msk [vmem:[%s264 + $0x8] sm:$0xff] %vm2209, %v2204
        %2212 = vst.msk [vmem:[%s264 + $0x10] sm:$0xff] %vm2209, %v2205
        %2213 = vst.msk [vmem:[%s264 + $0x18] sm:$0xff] %vm2209, %v2206
        %2214 = vst.msk [vmem:[%s264 + $0x20] sm:$0xff] %vm2209, %v2207
        %vm2215 = vcmask 254976
        %2216 = vst.msk [vmem:[%s264 + $0x28] sm:$0x3] %vm2215, %v2208
        %p2217 = scmp.lt.s32.totalorder %s18, 1
        %s2218 = scalar_select %p2217, %s18, 1
        %s2219 = smul.addr %s2218, 6
        %s2220 = smul.addr %s2219, 8
        %s2221 = scalar_lea.vmem %s5, %s2220
        // Predicated region
        $region53: #{fuel_cell_net_forward.2} parent=39 // pred_check
          %p2222 = pneg %p146
        $region54: #{fuel_cell_net_forward.2} parent=39 // pred_check_branch
          %2224 = sbr.rel (%p2222) target = $region56
        $region55: #{fuel_cell_net_forward.2} parent=39 // pred_region
          _
        $region56: #{fuel_cell_net_forward.2} parent=39 // pred_fallthru
          _
      $region40: #{fuel_cell_net_forward.2} parent=5 // pred_fallthru
        _
      %p2225 = scmp.le.s32.totalorder 2, %s13
      // Predicated region
      $region57: #{fuel_cell_net_forward.2} parent=5 // pred_check
        %p2226 = pneg %p2225
      $region58: #{fuel_cell_net_forward.2} parent=5 // pred_check_branch
        %2228 = sbr.rel (%p2226) target = $region60
      $region59: #{fuel_cell_net_forward.2} parent=5 // pred_region
        %s2229 = ssub.s32 %s13, 2
        // Predicated region
        $region61: #{fuel_cell_net_forward.2} parent=59 // pred_check
          %p2230 = pneg %p152
        $region62: #{fuel_cell_net_forward.2} parent=59 // pred_check_branch
          %2232 = sbr.rel (%p2230) target = $region64
        $region63: #{fuel_cell_net_forward.2} parent=59 // pred_region
          %p2233 = scmp.lt.s32.totalorder %s19, 1
          %s2234 = scalar_select %p2233, %s19, 1
          %s2235 = smul.addr %s2234, 6
          %s2236 = smul.addr %s2235, 8
          %s2237 = scalar_lea.vmem %s5, %s2236
        $region64: #{fuel_cell_net_forward.2} parent=59 // pred_fallthru
          _
      $region60: #{fuel_cell_net_forward.2} parent=5 // pred_fallthru
        _
    $region6: #{fuel_cell_net_forward.2} parent=1 // loop_footer
      %s17 = sadd.s32 1, %s13
    $region7: #{fuel_cell_net_forward.2} parent=1 // loop_footer_branch
      %12 = sbr.rel target = $region3
    $region8: #{fuel_cell_net_forward.2} parent=1 // loop_exit
      _
    %2238 = vsyncpa [#allocation3], 1
    %s2239 = scalar_lea.sflag [#allocation3], 1
    %2240 = vsyncpa %s2239, 1
    %2241 = vsyncpa [#allocation5], 1

// kernel: fuel_cell_net_forward.3
$region0: #{fuel_cell_net_forward.3}
  #allocation0 [shape = 'u32[]', space=smem, size = 0x4, offset = 0x4, fixed_abs, tag = 'smem constant byte address 0x4 - core index']
  #allocation1 [shape = 'u32[144,128]{1,0:T(1,128)}', space=vmem, size = 0x12000, scoped, tag = 'internal scratch']
  %s0 = inlined_call_operand.vmem [shape: f32[2,1344], index: 0, kind: input, shape index: {}]
  %s1 = inlined_call_operand.hbm [shape: f32[1344,512], index: 1, kind: input, shape index: {}]
  %s2 = inlined_call_operand.hbm [shape: f32[1,512], index: 2, kind: input, shape index: {}]
  %s3 = inlined_call_operand.vmem [shape: f32[512,64], index: 3, kind: input, shape index: {}]
  %s4 = inlined_call_operand.hbm [shape: f32[1,64], index: 4, kind: input, shape index: {}]
  %s5 = inlined_call_operand.vmem [shape: f32[64,3], index: 5, kind: input, shape index: {}]
  %s6 = inlined_call_operand.hbm [shape: f32[1,3], index: 6, kind: input, shape index: {}]
  %s7 = inlined_call_operand.hbm [shape: f32[2,3], index: 7, kind: output, shape index: {}]
  %s8 = sld [smem:[#allocation0]]
  $region54: #{fuel_cell_net_forward.3} parent=0
    _
  %s10 = ssub.s32 1, %s8
  %s11 = scalar_select 0, %s10, %s8
  $region1: #{fuel_cell_net_forward.3} parent=0
    #allocation2 [shape = 'u8[2752512]{0}', space=vmem, size = 0x2a0000, scoped, tag = 'input window, operand 1, single buffered']
    #allocation3 [shape = 's32[1]{0}', space=sflag, size = 0x4, scoped, tag = 'scoped memory for fuel_cell_net_forward.3']
    #allocation4 [shape = 's32[1]{0}', space=sflag, size = 0x4, scoped, tag = 'scoped memory for fuel_cell_net_forward.3']
    #allocation5 [shape = 'u8[2048]{0}', space=vmem, size = 0x800, scoped, tag = 'input window, operand 2, single buffered']
    #allocation6 [shape = 's32[1]{0}', space=sflag, size = 0x4, scoped, tag = 'scoped memory for fuel_cell_net_forward.3']
    #allocation7 [shape = 'u8[512]{0}', space=vmem, size = 0x400, scoped, tag = 'input window, operand 4, single buffered']
    #allocation8 [shape = 'u8[512]{0}', space=vmem, size = 0x400, scoped, tag = 'input window, operand 6, single buffered']
    #allocation9 [shape = 's32[1]{0}', space=sflag, size = 0x4, scoped, tag = 'scoped memory for fuel_cell_net_forward.3']
    #allocation10 [shape = 'u8[1024]{0}', space=vmem, size = 0x400, scoped, tag = 'output window, operand 0, single buffered']
    %12 = vsyncpa [#allocation3], 0
    %13 = vsyncpa [#allocation6], 0
    %14 = vsyncpa [#allocation9], 0
    %15 = vsyncpa [#allocation4], 0
    // Predicated region
    $region2: #{fuel_cell_net_forward.3} parent=1 // pred_check
      _
    $region3: #{fuel_cell_net_forward.3} parent=1 // pred_check_branch
      %17 = sbr.rel (0) target = $region5
    $region4: #{fuel_cell_net_forward.3} parent=1 // pred_region
      _
    $region5: #{fuel_cell_net_forward.3} parent=1 // pred_fallthru
      _
    // Predicated region
    $region6: #{fuel_cell_net_forward.3} parent=1 // pred_check
      _
    $region7: #{fuel_cell_net_forward.3} parent=1 // pred_check_branch
      %19 = sbr.rel (0) target = $region9
    $region8: #{fuel_cell_net_forward.3} parent=1 // pred_region
      %s21 = ssub.s32 86016, 86016
      %22 = vsyncadd [#allocation3], %s21
      %s23 = sshll.u32 [#allocation2], 4
      %s24 = int_to_ptr.vmem [resolvable:$true] %s23
      %29 = dma.hbm_to_vmem [thread:$0]  %s1, 86016, %s24, [#allocation3], 512, 512, 32
    $region9: #{fuel_cell_net_forward.3} parent=1 // pred_fallthru
      _
    // Predicated region
    $region10: #{fuel_cell_net_forward.3} parent=1 // pred_check
      _
    $region11: #{fuel_cell_net_forward.3} parent=1 // pred_check_branch
      %31 = sbr.rel (0) target = $region13
    $region12: #{fuel_cell_net_forward.3} parent=1 // pred_region
      %s33 = ssub.s32 64, 64
      %34 = vsyncadd [#allocation6], %s33
      %s36 = sshll.u32 [#allocation5], 4
      %s37 = int_to_ptr.vmem [resolvable:$true] %s36
      %39 = dma.hbm_to_vmem [thread:$0]  %s2, 64, %s37, [#allocation6]
    $region13: #{fuel_cell_net_forward.3} parent=1 // pred_fallthru
      _
    // Predicated region
    $region14: #{fuel_cell_net_forward.3} parent=1 // pred_check
      _
    $region15: #{fuel_cell_net_forward.3} parent=1 // pred_check_branch
      %41 = sbr.rel (0) target = $region17
    $region16: #{fuel_cell_net_forward.3} parent=1 // pred_region
      _
    $region17: #{fuel_cell_net_forward.3} parent=1 // pred_fallthru
      _
    // Predicated region
    $region18: #{fuel_cell_net_forward.3} parent=1 // pred_check
      _
    $region19: #{fuel_cell_net_forward.3} parent=1 // pred_check_branch
      %43 = sbr.rel (0) target = $region21
    $region20: #{fuel_cell_net_forward.3} parent=1 // pred_region
      %s45 = ssub.s32 16, 16
      %46 = vsyncadd [#allocation6], %s45
      %s48 = sshll.u32 [#allocation7], 4
      %s49 = int_to_ptr.vmem [resolvable:$true] %s48
      %51 = dma.hbm_to_vmem [thread:$0]  %s4, 16, %s49, [#allocation6]
    $region21: #{fuel_cell_net_forward.3} parent=1 // pred_fallthru
      _
    // Predicated region
    $region22: #{fuel_cell_net_forward.3} parent=1 // pred_check
      _
    $region23: #{fuel_cell_net_forward.3} parent=1 // pred_check_branch
      %53 = sbr.rel (0) target = $region25
    $region24: #{fuel_cell_net_forward.3} parent=1 // pred_region
      _
    $region25: #{fuel_cell_net_forward.3} parent=1 // pred_fallthru
      _
    // Predicated region
    $region26: #{fuel_cell_net_forward.3} parent=1 // pred_check
      _
    $region27: #{fuel_cell_net_forward.3} parent=1 // pred_check_branch
      %55 = sbr.rel (0) target = $region29
    $region28: #{fuel_cell_net_forward.3} parent=1 // pred_region
      %s57 = ssub.s32 16, 16
      %58 = vsyncadd [#allocation9], %s57
      %s60 = sshll.u32 [#allocation8], 4
      %s61 = int_to_ptr.vmem [resolvable:$true] %s60
      %63 = dma.hbm_to_vmem [thread:$0]  %s6, 16, %s61, [#allocation9]
    $region29: #{fuel_cell_net_forward.3} parent=1 // pred_fallthru
      _
    // Predicated region
    $region30: #{fuel_cell_net_forward.3} parent=1 // pred_check
      _
    $region31: #{fuel_cell_net_forward.3} parent=1 // pred_check_branch
      %65 = sbr.rel (0) target = $region33
    $region32: #{fuel_cell_net_forward.3} parent=1 // pred_region
      %66 = dma.done [#allocation3], 86016
    $region33: #{fuel_cell_net_forward.3} parent=1 // pred_fallthru
      _
    // Predicated region
    $region34: #{fuel_cell_net_forward.3} parent=1 // pred_check
      _
    $region35: #{fuel_cell_net_forward.3} parent=1 // pred_check_branch
      %68 = sbr.rel (0) target = $region37
    $region36: #{fuel_cell_net_forward.3} parent=1 // pred_region
      %69 = dma.done [#allocation6], 64
    $region37: #{fuel_cell_net_forward.3} parent=1 // pred_fallthru
      _
    // Predicated region
    $region38: #{fuel_cell_net_forward.3} parent=1 // pred_check
      _
    $region39: #{fuel_cell_net_forward.3} parent=1 // pred_check_branch
      %71 = sbr.rel (0) target = $region41
    $region40: #{fuel_cell_net_forward.3} parent=1 // pred_region
      %72 = dma.done [#allocation6], 16
    $region41: #{fuel_cell_net_forward.3} parent=1 // pred_fallthru
      _
    // Predicated region
    $region42: #{fuel_cell_net_forward.3} parent=1 // pred_check
      _
    $region43: #{fuel_cell_net_forward.3} parent=1 // pred_check_branch
      %74 = sbr.rel (0) target = $region45
    $region44: #{fuel_cell_net_forward.3} parent=1 // pred_region
      %75 = dma.done [#allocation9], 16
    $region45: #{fuel_cell_net_forward.3} parent=1 // pred_fallthru
      _
    %v76 = vld [vmem:[%s0] sm:$0xff]
    %v77 = vld [vmem:[%s0 + $0x8] sm:$0xff]
    %v78 = vld [vmem:[%s0 + $0x10] sm:$0x3f]
    %v79 = vld [vmem:[#allocation2] sm:$0xff]
    %v80 = vld [vmem:[#allocation2 + $0x8] sm:$0xff]
    %v81 = vld [vmem:[#allocation2 + $0x10] sm:$0xff]
    %v82 = vld [vmem:[#allocation2 + $0x18] sm:$0xff]
    %v83 = vld [vmem:[#allocation2 + $0x20] sm:$0xff]
    %v84 = vld [vmem:[#allocation2 + $0x28] sm:$0xff]
    %v85 = vld [vmem:[#allocation2 + $0x30] sm:$0xff]
    %v86 = vld [vmem:[#allocation2 + $0x38] sm:$0xff]
    %v87 = vld [vmem:[#allocation2 + $0x40] sm:$0xff]
    %v88 = vld [vmem:[#allocation2 + $0x48] sm:$0xff]
    %v89 = vld [vmem:[#allocation2 + $0x50] sm:$0xff]
    %v90 = vld [vmem:[#allocation2 + $0x58] sm:$0xff]
    %v91 = vld [vmem:[#allocation2 + $0x60] sm:$0xff]
    %v92 = vld [vmem:[#allocation2 + $0x68] sm:$0xff]
    %v93 = vld [vmem:[#allocation2 + $0x70] sm:$0xff]
    %v94 = vld [vmem:[#allocation2 + $0x78] sm:$0xff]
    %v95 = vld [vmem:[#allocation2 + $0x80] sm:$0xff]
    %v96 = vld [vmem:[#allocation2 + $0x88] sm:$0xff]
    %v97 = vld [vmem:[#allocation2 + $0x90] sm:$0xff]
    %v98 = vld [vmem:[#allocation2 + $0x98] sm:$0xff]
    %v99 = vld [vmem:[#allocation2 + $0xa0] sm:$0xff]
    %v100 = vld [vmem:[#allocation2 + $0xa8] sm:$0xff]
    %v101 = vld [vmem:[#allocation2 + $0xb0] sm:$0xff]
    %v102 = vld [vmem:[#allocation2 + $0xb8] sm:$0xff]
    %v103 = vld [vmem:[#allocation2 + $0xc0] sm:$0xff]
    %v104 = vld [vmem:[#allocation2 + $0xc8] sm:$0xff]
    %v105 = vld [vmem:[#allocation2 + $0xd0] sm:$0xff]
    %v106 = vld [vmem:[#allocation2 + $0xd8] sm:$0xff]
    %v107 = vld [vmem:[#allocation2 + $0xe0] sm:$0xff]
    %v108 = vld [vmem:[#allocation2 + $0xe8] sm:$0xff]
    %v109 = vld [vmem:[#allocation2 + $0xf0] sm:$0xff]
    %v110 = vld [vmem:[#allocation2 + $0xf8] sm:$0xff]
    %v111 = vld [vmem:[#allocation2 + $0x100] sm:$0xff]
    %v112 = vld [vmem:[#allocation2 + $0x108] sm:$0xff]
    %v113 = vld [vmem:[#allocation2 + $0x110] sm:$0xff]
    %v114 = vld [vmem:[#allocation2 + $0x118] sm:$0xff]
    %v115 = vld [vmem:[#allocation2 + $0x120] sm:$0xff]
    %v116 = vld [vmem:[#allocation2 + $0x128] sm:$0xff]
    %v117 = vld [vmem:[#allocation2 + $0x130] sm:$0xff]
    %v118 = vld [vmem:[#allocation2 + $0x138] sm:$0xff]
    %v119 = vld [vmem:[#allocation2 + $0x140] sm:$0xff]
    %v120 = vld [vmem:[#allocation2 + $0x148] sm:$0xff]
    %v121 = vld [vmem:[#allocation2 + $0x150] sm:$0xff]
    %v122 = vld [vmem:[#allocation2 + $0x158] sm:$0xff]
    %v123 = vld [vmem:[#allocation2 + $0x160] sm:$0xff]
    %v124 = vld [vmem:[#allocation2 + $0x168] sm:$0xff]
    %v125 = vld [vmem:[#allocation2 + $0x170] sm:$0xff]
    %v126 = vld [vmem:[#allocation2 + $0x178] sm:$0xff]
    %v127 = vld [vmem:[#allocation2 + $0x180] sm:$0xff]
    %v128 = vld [vmem:[#allocation2 + $0x188] sm:$0xff]
    %v129 = vld [vmem:[#allocation2 + $0x190] sm:$0xff]
    %v130 = vld [vmem:[#allocation2 + $0x198] sm:$0xff]
    %v131 = vld [vmem:[#allocation2 + $0x1a0] sm:$0xff]
    %v132 = vld [vmem:[#allocation2 + $0x1a8] sm:$0xff]
    %v133 = vld [vmem:[#allocation2 + $0x1b0] sm:$0xff]
    %v134 = vld [vmem:[#allocation2 + $0x1b8] sm:$0xff]
    %v135 = vld [vmem:[#allocation2 + $0x1c0] sm:$0xff]
    %v136 = vld [vmem:[#allocation2 + $0x1c8] sm:$0xff]
    %v137 = vld [vmem:[#allocation2 + $0x1d0] sm:$0xff]
    %v138 = vld [vmem:[#allocation2 + $0x1d8] sm:$0xff]
    %v139 = vld [vmem:[#allocation2 + $0x1e0] sm:$0xff]
    %v140 = vld [vmem:[#allocation2 + $0x1e8] sm:$0xff]
    %v141 = vld [vmem:[#allocation2 + $0x1f0] sm:$0xff]
    %v142 = vld [vmem:[#allocation2 + $0x1f8] sm:$0xff]
    %v143 = vld [vmem:[#allocation2 + $0x200] sm:$0xff]
    %v144 = vld [vmem:[#allocation2 + $0x208] sm:$0xff]
    %v145 = vld [vmem:[#allocation2 + $0x210] sm:$0xff]
    %v146 = vld [vmem:[#allocation2 + $0x218] sm:$0xff]
    %v147 = vld [vmem:[#allocation2 + $0x220] sm:$0xff]
    %v148 = vld [vmem:[#allocation2 + $0x228] sm:$0xff]
    %v149 = vld [vmem:[#allocation2 + $0x230] sm:$0xff]
    %v150 = vld [vmem:[#allocation2 + $0x238] sm:$0xff]
    %v151 = vld [vmem:[#allocation2 + $0x240] sm:$0xff]
    %v152 = vld [vmem:[#allocation2 + $0x248] sm:$0xff]
    %v153 = vld [vmem:[#allocation2 + $0x250] sm:$0xff]
    %v154 = vld [vmem:[#allocation2 + $0x258] sm:$0xff]
    %v155 = vld [vmem:[#allocation2 + $0x260] sm:$0xff]
    %v156 = vld [vmem:[#allocation2 + $0x268] sm:$0xff]
    %v157 = vld [vmem:[#allocation2 + $0x270] sm:$0xff]
    %v158 = vld [vmem:[#allocation2 + $0x278] sm:$0xff]
    %v159 = vld [vmem:[#allocation2 + $0x280] sm:$0xff]
    %v160 = vld [vmem:[#allocation2 + $0x288] sm:$0xff]
    %v161 = vld [vmem:[#allocation2 + $0x290] sm:$0xff]
    %v162 = vld [vmem:[#allocation2 + $0x298] sm:$0xff]
    %v163 = vld [vmem:[#allocation2 + $0x2a0] sm:$0xff]
    %v164 = vld [vmem:[#allocation2 + $0x2a8] sm:$0xff]
    %v165 = vld [vmem:[#allocation2 + $0x2b0] sm:$0xff]
    %v166 = vld [vmem:[#allocation2 + $0x2b8] sm:$0xff]
    %v167 = vld [vmem:[#allocation2 + $0x2c0] sm:$0xff]
    %v168 = vld [vmem:[#allocation2 + $0x2c8] sm:$0xff]
    %v169 = vld [vmem:[#allocation2 + $0x2d0] sm:$0xff]
    %v170 = vld [vmem:[#allocation2 + $0x2d8] sm:$0xff]
    %v171 = vld [vmem:[#allocation2 + $0x2e0] sm:$0xff]
    %v172 = vld [vmem:[#allocation2 + $0x2e8] sm:$0xff]
    %v173 = vld [vmem:[#allocation2 + $0x2f0] sm:$0xff]
    %v174 = vld [vmem:[#allocation2 + $0x2f8] sm:$0xff]
    %v175 = vld [vmem:[#allocation2 + $0x300] sm:$0xff]
    %v176 = vld [vmem:[#allocation2 + $0x308] sm:$0xff]
    %v177 = vld [vmem:[#allocation2 + $0x310] sm:$0xff]
    %v178 = vld [vmem:[#allocation2 + $0x318] sm:$0xff]
    %v179 = vld [vmem:[#allocation2 + $0x320] sm:$0xff]
    %v180 = vld [vmem:[#allocation2 + $0x328] sm:$0xff]
    %v181 = vld [vmem:[#allocation2 + $0x330] sm:$0xff]
    %v182 = vld [vmem:[#allocation2 + $0x338] sm:$0xff]
    %v183 = vld [vmem:[#allocation2 + $0x340] sm:$0xff]
    %v184 = vld [vmem:[#allocation2 + $0x348] sm:$0xff]
    %v185 = vld [vmem:[#allocation2 + $0x350] sm:$0xff]
    %v186 = vld [vmem:[#allocation2 + $0x358] sm:$0xff]
    %v187 = vld [vmem:[#allocation2 + $0x360] sm:$0xff]
    %v188 = vld [vmem:[#allocation2 + $0x368] sm:$0xff]
    %v189 = vld [vmem:[#allocation2 + $0x370] sm:$0xff]
    %v190 = vld [vmem:[#allocation2 + $0x378] sm:$0xff]
    %v191 = vld [vmem:[#allocation2 + $0x380] sm:$0xff]
    %v192 = vld [vmem:[#allocation2 + $0x388] sm:$0xff]
    %v193 = vld [vmem:[#allocation2 + $0x390] sm:$0xff]
    %v194 = vld [vmem:[#allocation2 + $0x398] sm:$0xff]
    %v195 = vld [vmem:[#allocation2 + $0x3a0] sm:$0xff]
    %v196 = vld [vmem:[#allocation2 + $0x3a8] sm:$0xff]
    %v197 = vld [vmem:[#allocation2 + $0x3b0] sm:$0xff]
    %v198 = vld [vmem:[#allocation2 + $0x3b8] sm:$0xff]
    %v199 = vld [vmem:[#allocation2 + $0x3c0] sm:$0xff]
    %v200 = vld [vmem:[#allocation2 + $0x3c8] sm:$0xff]
    %v201 = vld [vmem:[#allocation2 + $0x3d0] sm:$0xff]
    %v202 = vld [vmem:[#allocation2 + $0x3d8] sm:$0xff]
    %v203 = vld [vmem:[#allocation2 + $0x3e0] sm:$0xff]
    %v204 = vld [vmem:[#allocation2 + $0x3e8] sm:$0xff]
    %v205 = vld [vmem:[#allocation2 + $0x3f0] sm:$0xff]
    %v206 = vld [vmem:[#allocation2 + $0x3f8] sm:$0xff]
    %v207 = vld [vmem:[#allocation2 + $0x400] sm:$0xff]
    %v208 = vld [vmem:[#allocation2 + $0x408] sm:$0xff]
    %v209 = vld [vmem:[#allocation2 + $0x410] sm:$0xff]
    %v210 = vld [vmem:[#allocation2 + $0x418] sm:$0xff]
    %v211 = vld [vmem:[#allocation2 + $0x420] sm:$0xff]
    %v212 = vld [vmem:[#allocation2 + $0x428] sm:$0xff]
    %v213 = vld [vmem:[#allocation2 + $0x430] sm:$0xff]
    %v214 = vld [vmem:[#allocation2 + $0x438] sm:$0xff]
    %v215 = vld [vmem:[#allocation2 + $0x440] sm:$0xff]
    %v216 = vld [vmem:[#allocation2 + $0x448] sm:$0xff]
    %v217 = vld [vmem:[#allocation2 + $0x450] sm:$0xff]
    %v218 = vld [vmem:[#allocation2 + $0x458] sm:$0xff]
    %v219 = vld [vmem:[#allocation2 + $0x460] sm:$0xff]
    %v220 = vld [vmem:[#allocation2 + $0x468] sm:$0xff]
    %v221 = vld [vmem:[#allocation2 + $0x470] sm:$0xff]
    %v222 = vld [vmem:[#allocation2 + $0x478] sm:$0xff]
    %v223 = vld [vmem:[#allocation2 + $0x480] sm:$0xff]
    %v224 = vld [vmem:[#allocation2 + $0x488] sm:$0xff]
    %v225 = vld [vmem:[#allocation2 + $0x490] sm:$0xff]
    %v226 = vld [vmem:[#allocation2 + $0x498] sm:$0xff]
    %v227 = vld [vmem:[#allocation2 + $0x4a0] sm:$0xff]
    %v228 = vld [vmem:[#allocation2 + $0x4a8] sm:$0xff]
    %v229 = vld [vmem:[#allocation2 + $0x4b0] sm:$0xff]
    %v230 = vld [vmem:[#allocation2 + $0x4b8] sm:$0xff]
    %v231 = vld [vmem:[#allocation2 + $0x4c0] sm:$0xff]
    %v232 = vld [vmem:[#allocation2 + $0x4c8] sm:$0xff]
    %v233 = vld [vmem:[#allocation2 + $0x4d0] sm:$0xff]
    %v234 = vld [vmem:[#allocation2 + $0x4d8] sm:$0xff]
    %v235 = vld [vmem:[#allocation2 + $0x4e0] sm:$0xff]
    %v236 = vld [vmem:[#allocation2 + $0x4e8] sm:$0xff]
    %v237 = vld [vmem:[#allocation2 + $0x4f0] sm:$0xff]
    %v238 = vld [vmem:[#allocation2 + $0x4f8] sm:$0xff]
    %v239 = vld [vmem:[#allocation2 + $0x500] sm:$0xff]
    %v240 = vld [vmem:[#allocation2 + $0x508] sm:$0xff]
    %v241 = vld [vmem:[#allocation2 + $0x510] sm:$0xff]
    %v242 = vld [vmem:[#allocation2 + $0x518] sm:$0xff]
    %v243 = vld [vmem:[#allocation2 + $0x520] sm:$0xff]
    %v244 = vld [vmem:[#allocation2 + $0x528] sm:$0xff]
    %v245 = vld [vmem:[#allocation2 + $0x530] sm:$0xff]
    %v246 = vld [vmem:[#allocation2 + $0x538] sm:$0xff]
    %v247 = vld [vmem:[#allocation2 + $0x540] sm:$0xff]
    %v248 = vld [vmem:[#allocation2 + $0x548] sm:$0xff]
    %v249 = vld [vmem:[#allocation2 + $0x550] sm:$0xff]
    %v250 = vld [vmem:[#allocation2 + $0x558] sm:$0xff]
    %v251 = vld [vmem:[#allocation2 + $0x560] sm:$0xff]
    %v252 = vld [vmem:[#allocation2 + $0x568] sm:$0xff]
    %v253 = vld [vmem:[#allocation2 + $0x570] sm:$0xff]
    %v254 = vld [vmem:[#allocation2 + $0x578] sm:$0xff]
    %v255 = vld [vmem:[#allocation2 + $0x580] sm:$0xff]
    %v256 = vld [vmem:[#allocation2 + $0x588] sm:$0xff]
    %v257 = vld [vmem:[#allocation2 + $0x590] sm:$0xff]
    %v258 = vld [vmem:[#allocation2 + $0x598] sm:$0xff]
    %v259 = vld [vmem:[#allocation2 + $0x5a0] sm:$0xff]
    %v260 = vld [vmem:[#allocation2 + $0x5a8] sm:$0xff]
    %v261 = vld [vmem:[#allocation2 + $0x5b0] sm:$0xff]
    %v262 = vld [vmem:[#allocation2 + $0x5b8] sm:$0xff]
    %v263 = vld [vmem:[#allocation2 + $0x5c0] sm:$0xff]
    %v264 = vld [vmem:[#allocation2 + $0x5c8] sm:$0xff]
    %v265 = vld [vmem:[#allocation2 + $0x5d0] sm:$0xff]
    %v266 = vld [vmem:[#allocation2 + $0x5d8] sm:$0xff]
    %v267 = vld [vmem:[#allocation2 + $0x5e0] sm:$0xff]
    %v268 = vld [vmem:[#allocation2 + $0x5e8] sm:$0xff]
    %v269 = vld [vmem:[#allocation2 + $0x5f0] sm:$0xff]
    %v270 = vld [vmem:[#allocation2 + $0x5f8] sm:$0xff]
    %v271 = vld [vmem:[#allocation2 + $0x600] sm:$0xff]
    %v272 = vld [vmem:[#allocation2 + $0x608] sm:$0xff]
    %v273 = vld [vmem:[#allocation2 + $0x610] sm:$0xff]
    %v274 = vld [vmem:[#allocation2 + $0x618] sm:$0xff]
    %v275 = vld [vmem:[#allocation2 + $0x620] sm:$0xff]
    %v276 = vld [vmem:[#allocation2 + $0x628] sm:$0xff]
    %v277 = vld [vmem:[#allocation2 + $0x630] sm:$0xff]
    %v278 = vld [vmem:[#allocation2 + $0x638] sm:$0xff]
    %v279 = vld [vmem:[#allocation2 + $0x640] sm:$0xff]
    %v280 = vld [vmem:[#allocation2 + $0x648] sm:$0xff]
    %v281 = vld [vmem:[#allocation2 + $0x650] sm:$0xff]
    %v282 = vld [vmem:[#allocation2 + $0x658] sm:$0xff]
    %v283 = vld [vmem:[#allocation2 + $0x660] sm:$0xff]
    %v284 = vld [vmem:[#allocation2 + $0x668] sm:$0xff]
    %v285 = vld [vmem:[#allocation2 + $0x670] sm:$0xff]
    %v286 = vld [vmem:[#allocation2 + $0x678] sm:$0xff]
    %v287 = vld [vmem:[#allocation2 + $0x680] sm:$0xff]
    %v288 = vld [vmem:[#allocation2 + $0x688] sm:$0xff]
    %v289 = vld [vmem:[#allocation2 + $0x690] sm:$0xff]
    %v290 = vld [vmem:[#allocation2 + $0x698] sm:$0xff]
    %v291 = vld [vmem:[#allocation2 + $0x6a0] sm:$0xff]
    %v292 = vld [vmem:[#allocation2 + $0x6a8] sm:$0xff]
    %v293 = vld [vmem:[#allocation2 + $0x6b0] sm:$0xff]
    %v294 = vld [vmem:[#allocation2 + $0x6b8] sm:$0xff]
    %v295 = vld [vmem:[#allocation2 + $0x6c0] sm:$0xff]
    %v296 = vld [vmem:[#allocation2 + $0x6c8] sm:$0xff]
    %v297 = vld [vmem:[#allocation2 + $0x6d0] sm:$0xff]
    %v298 = vld [vmem:[#allocation2 + $0x6d8] sm:$0xff]
    %v299 = vld [vmem:[#allocation2 + $0x6e0] sm:$0xff]
    %v300 = vld [vmem:[#allocation2 + $0x6e8] sm:$0xff]
    %v301 = vld [vmem:[#allocation2 + $0x6f0] sm:$0xff]
    %v302 = vld [vmem:[#allocation2 + $0x6f8] sm:$0xff]
    %v303 = vld [vmem:[#allocation2 + $0x700] sm:$0xff]
    %v304 = vld [vmem:[#allocation2 + $0x708] sm:$0xff]
    %v305 = vld [vmem:[#allocation2 + $0x710] sm:$0xff]
    %v306 = vld [vmem:[#allocation2 + $0x718] sm:$0xff]
    %v307 = vld [vmem:[#allocation2 + $0x720] sm:$0xff]
    %v308 = vld [vmem:[#allocation2 + $0x728] sm:$0xff]
    %v309 = vld [vmem:[#allocation2 + $0x730] sm:$0xff]
    %v310 = vld [vmem:[#allocation2 + $0x738] sm:$0xff]
    %v311 = vld [vmem:[#allocation2 + $0x740] sm:$0xff]
    %v312 = vld [vmem:[#allocation2 + $0x748] sm:$0xff]
    %v313 = vld [vmem:[#allocation2 + $0x750] sm:$0xff]
    %v314 = vld [vmem:[#allocation2 + $0x758] sm:$0xff]
    %v315 = vld [vmem:[#allocation2 + $0x760] sm:$0xff]
    %v316 = vld [vmem:[#allocation2 + $0x768] sm:$0xff]
    %v317 = vld [vmem:[#allocation2 + $0x770] sm:$0xff]
    %v318 = vld [vmem:[#allocation2 + $0x778] sm:$0xff]
    %v319 = vld [vmem:[#allocation2 + $0x780] sm:$0xff]
    %v320 = vld [vmem:[#allocation2 + $0x788] sm:$0xff]
    %v321 = vld [vmem:[#allocation2 + $0x790] sm:$0xff]
    %v322 = vld [vmem:[#allocation2 + $0x798] sm:$0xff]
    %v323 = vld [vmem:[#allocation2 + $0x7a0] sm:$0xff]
    %v324 = vld [vmem:[#allocation2 + $0x7a8] sm:$0xff]
    %v325 = vld [vmem:[#allocation2 + $0x7b0] sm:$0xff]
    %v326 = vld [vmem:[#allocation2 + $0x7b8] sm:$0xff]
    %v327 = vld [vmem:[#allocation2 + $0x7c0] sm:$0xff]
    %v328 = vld [vmem:[#allocation2 + $0x7c8] sm:$0xff]
    %v329 = vld [vmem:[#allocation2 + $0x7d0] sm:$0xff]
    %v330 = vld [vmem:[#allocation2 + $0x7d8] sm:$0xff]
    %v331 = vld [vmem:[#allocation2 + $0x7e0] sm:$0xff]
    %v332 = vld [vmem:[#allocation2 + $0x7e8] sm:$0xff]
    %v333 = vld [vmem:[#allocation2 + $0x7f0] sm:$0xff]
    %v334 = vld [vmem:[#allocation2 + $0x7f8] sm:$0xff]
    %v335 = vld [vmem:[#allocation2 + $0x800] sm:$0xff]
    %v336 = vld [vmem:[#allocation2 + $0x808] sm:$0xff]
    %v337 = vld [vmem:[#allocation2 + $0x810] sm:$0xff]
    %v338 = vld [vmem:[#allocation2 + $0x818] sm:$0xff]
    %v339 = vld [vmem:[#allocation2 + $0x820] sm:$0xff]
    %v340 = vld [vmem:[#allocation2 + $0x828] sm:$0xff]
    %v341 = vld [vmem:[#allocation2 + $0x830] sm:$0xff]
    %v342 = vld [vmem:[#allocation2 + $0x838] sm:$0xff]
    %v343 = vld [vmem:[#allocation2 + $0x840] sm:$0xff]
    %v344 = vld [vmem:[#allocation2 + $0x848] sm:$0xff]
    %v345 = vld [vmem:[#allocation2 + $0x850] sm:$0xff]
    %v346 = vld [vmem:[#allocation2 + $0x858] sm:$0xff]
    %v347 = vld [vmem:[#allocation2 + $0x860] sm:$0xff]
    %v348 = vld [vmem:[#allocation2 + $0x868] sm:$0xff]
    %v349 = vld [vmem:[#allocation2 + $0x870] sm:$0xff]
    %v350 = vld [vmem:[#allocation2 + $0x878] sm:$0xff]
    %v351 = vld [vmem:[#allocation2 + $0x880] sm:$0xff]
    %v352 = vld [vmem:[#allocation2 + $0x888] sm:$0xff]
    %v353 = vld [vmem:[#allocation2 + $0x890] sm:$0xff]
    %v354 = vld [vmem:[#allocation2 + $0x898] sm:$0xff]
    %v355 = vld [vmem:[#allocation2 + $0x8a0] sm:$0xff]
    %v356 = vld [vmem:[#allocation2 + $0x8a8] sm:$0xff]
    %v357 = vld [vmem:[#allocation2 + $0x8b0] sm:$0xff]
    %v358 = vld [vmem:[#allocation2 + $0x8b8] sm:$0xff]
    %v359 = vld [vmem:[#allocation2 + $0x8c0] sm:$0xff]
    %v360 = vld [vmem:[#allocation2 + $0x8c8] sm:$0xff]
    %v361 = vld [vmem:[#allocation2 + $0x8d0] sm:$0xff]
    %v362 = vld [vmem:[#allocation2 + $0x8d8] sm:$0xff]
    %v363 = vld [vmem:[#allocation2 + $0x8e0] sm:$0xff]
    %v364 = vld [vmem:[#allocation2 + $0x8e8] sm:$0xff]
    %v365 = vld [vmem:[#allocation2 + $0x8f0] sm:$0xff]
    %v366 = vld [vmem:[#allocation2 + $0x8f8] sm:$0xff]
    %v367 = vld [vmem:[#allocation2 + $0x900] sm:$0xff]
    %v368 = vld [vmem:[#allocation2 + $0x908] sm:$0xff]
    %v369 = vld [vmem:[#allocation2 + $0x910] sm:$0xff]
    %v370 = vld [vmem:[#allocation2 + $0x918] sm:$0xff]
    %v371 = vld [vmem:[#allocation2 + $0x920] sm:$0xff]
    %v372 = vld [vmem:[#allocation2 + $0x928] sm:$0xff]
    %v373 = vld [vmem:[#allocation2 + $0x930] sm:$0xff]
    %v374 = vld [vmem:[#allocation2 + $0x938] sm:$0xff]
    %v375 = vld [vmem:[#allocation2 + $0x940] sm:$0xff]
    %v376 = vld [vmem:[#allocation2 + $0x948] sm:$0xff]
    %v377 = vld [vmem:[#allocation2 + $0x950] sm:$0xff]
    %v378 = vld [vmem:[#allocation2 + $0x958] sm:$0xff]
    %v379 = vld [vmem:[#allocation2 + $0x960] sm:$0xff]
    %v380 = vld [vmem:[#allocation2 + $0x968] sm:$0xff]
    %v381 = vld [vmem:[#allocation2 + $0x970] sm:$0xff]
    %v382 = vld [vmem:[#allocation2 + $0x978] sm:$0xff]
    %v383 = vld [vmem:[#allocation2 + $0x980] sm:$0xff]
    %v384 = vld [vmem:[#allocation2 + $0x988] sm:$0xff]
    %v385 = vld [vmem:[#allocation2 + $0x990] sm:$0xff]
    %v386 = vld [vmem:[#allocation2 + $0x998] sm:$0xff]
    %v387 = vld [vmem:[#allocation2 + $0x9a0] sm:$0xff]
    %v388 = vld [vmem:[#allocation2 + $0x9a8] sm:$0xff]
    %v389 = vld [vmem:[#allocation2 + $0x9b0] sm:$0xff]
    %v390 = vld [vmem:[#allocation2 + $0x9b8] sm:$0xff]
    %v391 = vld [vmem:[#allocation2 + $0x9c0] sm:$0xff]
    %v392 = vld [vmem:[#allocation2 + $0x9c8] sm:$0xff]
    %v393 = vld [vmem:[#allocation2 + $0x9d0] sm:$0xff]
    %v394 = vld [vmem:[#allocation2 + $0x9d8] sm:$0xff]
    %v395 = vld [vmem:[#allocation2 + $0x9e0] sm:$0xff]
    %v396 = vld [vmem:[#allocation2 + $0x9e8] sm:$0xff]
    %v397 = vld [vmem:[#allocation2 + $0x9f0] sm:$0xff]
    %v398 = vld [vmem:[#allocation2 + $0x9f8] sm:$0xff]
    %v399 = vld [vmem:[#allocation2 + $0xa00] sm:$0xff]
    %v400 = vld [vmem:[#allocation2 + $0xa08] sm:$0xff]
    %v401 = vld [vmem:[#allocation2 + $0xa10] sm:$0xff]
    %v402 = vld [vmem:[#allocation2 + $0xa18] sm:$0xff]
    %v403 = vld [vmem:[#allocation2 + $0xa20] sm:$0xff]
    %v404 = vld [vmem:[#allocation2 + $0xa28] sm:$0xff]
    %v405 = vld [vmem:[#allocation2 + $0xa30] sm:$0xff]
    %v406 = vld [vmem:[#allocation2 + $0xa38] sm:$0xff]
    %v407 = vld [vmem:[#allocation2 + $0xa40] sm:$0xff]
    %v408 = vld [vmem:[#allocation2 + $0xa48] sm:$0xff]
    %v409 = vld [vmem:[#allocation2 + $0xa50] sm:$0xff]
    %v410 = vld [vmem:[#allocation2 + $0xa58] sm:$0xff]
    %v411 = vld [vmem:[#allocation2 + $0xa60] sm:$0xff]
    %v412 = vld [vmem:[#allocation2 + $0xa68] sm:$0xff]
    %v413 = vld [vmem:[#allocation2 + $0xa70] sm:$0xff]
    %v414 = vld [vmem:[#allocation2 + $0xa78] sm:$0xff]
    %v415 = vld [vmem:[#allocation2 + $0xa80] sm:$0xff]
    %v416 = vld [vmem:[#allocation2 + $0xa88] sm:$0xff]
    %v417 = vld [vmem:[#allocation2 + $0xa90] sm:$0xff]
    %v418 = vld [vmem:[#allocation2 + $0xa98] sm:$0xff]
    %v419 = vld [vmem:[#allocation2 + $0xaa0] sm:$0xff]
    %v420 = vld [vmem:[#allocation2 + $0xaa8] sm:$0xff]
    %v421 = vld [vmem:[#allocation2 + $0xab0] sm:$0xff]
    %v422 = vld [vmem:[#allocation2 + $0xab8] sm:$0xff]
    %v423 = vld [vmem:[#allocation2 + $0xac0] sm:$0xff]
    %v424 = vld [vmem:[#allocation2 + $0xac8] sm:$0xff]
    %v425 = vld [vmem:[#allocation2 + $0xad0] sm:$0xff]
    %v426 = vld [vmem:[#allocation2 + $0xad8] sm:$0xff]
    %v427 = vld [vmem:[#allocation2 + $0xae0] sm:$0xff]
    %v428 = vld [vmem:[#allocation2 + $0xae8] sm:$0xff]
    %v429 = vld [vmem:[#allocation2 + $0xaf0] sm:$0xff]
    %v430 = vld [vmem:[#allocation2 + $0xaf8] sm:$0xff]
    %v431 = vld [vmem:[#allocation2 + $0xb00] sm:$0xff]
    %v432 = vld [vmem:[#allocation2 + $0xb08] sm:$0xff]
    %v433 = vld [vmem:[#allocation2 + $0xb10] sm:$0xff]
    %v434 = vld [vmem:[#allocation2 + $0xb18] sm:$0xff]
    %v435 = vld [vmem:[#allocation2 + $0xb20] sm:$0xff]
    %v436 = vld [vmem:[#allocation2 + $0xb28] sm:$0xff]
    %v437 = vld [vmem:[#allocation2 + $0xb30] sm:$0xff]
    %v438 = vld [vmem:[#allocation2 + $0xb38] sm:$0xff]
    %v439 = vld [vmem:[#allocation2 + $0xb40] sm:$0xff]
    %v440 = vld [vmem:[#allocation2 + $0xb48] sm:$0xff]
    %v441 = vld [vmem:[#allocation2 + $0xb50] sm:$0xff]
    %v442 = vld [vmem:[#allocation2 + $0xb58] sm:$0xff]
    %v443 = vld [vmem:[#allocation2 + $0xb60] sm:$0xff]
    %v444 = vld [vmem:[#allocation2 + $0xb68] sm:$0xff]
    %v445 = vld [vmem:[#allocation2 + $0xb70] sm:$0xff]
    %v446 = vld [vmem:[#allocation2 + $0xb78] sm:$0xff]
    %v447 = vld [vmem:[#allocation2 + $0xb80] sm:$0xff]
    %v448 = vld [vmem:[#allocation2 + $0xb88] sm:$0xff]
    %v449 = vld [vmem:[#allocation2 + $0xb90] sm:$0xff]
    %v450 = vld [vmem:[#allocation2 + $0xb98] sm:$0xff]
    %v451 = vld [vmem:[#allocation2 + $0xba0] sm:$0xff]
    %v452 = vld [vmem:[#allocation2 + $0xba8] sm:$0xff]
    %v453 = vld [vmem:[#allocation2 + $0xbb0] sm:$0xff]
    %v454 = vld [vmem:[#allocation2 + $0xbb8] sm:$0xff]
    %v455 = vld [vmem:[#allocation2 + $0xbc0] sm:$0xff]
    %v456 = vld [vmem:[#allocation2 + $0xbc8] sm:$0xff]
    %v457 = vld [vmem:[#allocation2 + $0xbd0] sm:$0xff]
    %v458 = vld [vmem:[#allocation2 + $0xbd8] sm:$0xff]
    %v459 = vld [vmem:[#allocation2 + $0xbe0] sm:$0xff]
    %v460 = vld [vmem:[#allocation2 + $0xbe8] sm:$0xff]
    %v461 = vld [vmem:[#allocation2 + $0xbf0] sm:$0xff]
    %v462 = vld [vmem:[#allocation2 + $0xbf8] sm:$0xff]
    %v463 = vld [vmem:[#allocation2 + $0xc00] sm:$0xff]
    %v464 = vld [vmem:[#allocation2 + $0xc08] sm:$0xff]
    %v465 = vld [vmem:[#allocation2 + $0xc10] sm:$0xff]
    %v466 = vld [vmem:[#allocation2 + $0xc18] sm:$0xff]
    %v467 = vld [vmem:[#allocation2 + $0xc20] sm:$0xff]
    %v468 = vld [vmem:[#allocation2 + $0xc28] sm:$0xff]
    %v469 = vld [vmem:[#allocation2 + $0xc30] sm:$0xff]
    %v470 = vld [vmem:[#allocation2 + $0xc38] sm:$0xff]
    %v471 = vld [vmem:[#allocation2 + $0xc40] sm:$0xff]
    %v472 = vld [vmem:[#allocation2 + $0xc48] sm:$0xff]
    %v473 = vld [vmem:[#allocation2 + $0xc50] sm:$0xff]
    %v474 = vld [vmem:[#allocation2 + $0xc58] sm:$0xff]
    %v475 = vld [vmem:[#allocation2 + $0xc60] sm:$0xff]
    %v476 = vld [vmem:[#allocation2 + $0xc68] sm:$0xff]
    %v477 = vld [vmem:[#allocation2 + $0xc70] sm:$0xff]
    %v478 = vld [vmem:[#allocation2 + $0xc78] sm:$0xff]
    %v479 = vld [vmem:[#allocation2 + $0xc80] sm:$0xff]
    %v480 = vld [vmem:[#allocation2 + $0xc88] sm:$0xff]
    %v481 = vld [vmem:[#allocation2 + $0xc90] sm:$0xff]
    %v482 = vld [vmem:[#allocation2 + $0xc98] sm:$0xff]
    %v483 = vld [vmem:[#allocation2 + $0xca0] sm:$0xff]
    %v484 = vld [vmem:[#allocation2 + $0xca8] sm:$0xff]
    %v485 = vld [vmem:[#allocation2 + $0xcb0] sm:$0xff]
    %v486 = vld [vmem:[#allocation2 + $0xcb8] sm:$0xff]
    %v487 = vld [vmem:[#allocation2 + $0xcc0] sm:$0xff]
    %v488 = vld [vmem:[#allocation2 + $0xcc8] sm:$0xff]
    %v489 = vld [vmem:[#allocation2 + $0xcd0] sm:$0xff]
    %v490 = vld [vmem:[#allocation2 + $0xcd8] sm:$0xff]
    %v491 = vld [vmem:[#allocation2 + $0xce0] sm:$0xff]
    %v492 = vld [vmem:[#allocation2 + $0xce8] sm:$0xff]
    %v493 = vld [vmem:[#allocation2 + $0xcf0] sm:$0xff]
    %v494 = vld [vmem:[#allocation2 + $0xcf8] sm:$0xff]
    %v495 = vld [vmem:[#allocation2 + $0xd00] sm:$0xff]
    %v496 = vld [vmem:[#allocation2 + $0xd08] sm:$0xff]
    %v497 = vld [vmem:[#allocation2 + $0xd10] sm:$0xff]
    %v498 = vld [vmem:[#allocation2 + $0xd18] sm:$0xff]
    %v499 = vld [vmem:[#allocation2 + $0xd20] sm:$0xff]
    %v500 = vld [vmem:[#allocation2 + $0xd28] sm:$0xff]
    %v501 = vld [vmem:[#allocation2 + $0xd30] sm:$0xff]
    %v502 = vld [vmem:[#allocation2 + $0xd38] sm:$0xff]
    %v503 = vld [vmem:[#allocation2 + $0xd40] sm:$0xff]
    %v504 = vld [vmem:[#allocation2 + $0xd48] sm:$0xff]
    %v505 = vld [vmem:[#allocation2 + $0xd50] sm:$0xff]
    %v506 = vld [vmem:[#allocation2 + $0xd58] sm:$0xff]
    %v507 = vld [vmem:[#allocation2 + $0xd60] sm:$0xff]
    %v508 = vld [vmem:[#allocation2 + $0xd68] sm:$0xff]
    %v509 = vld [vmem:[#allocation2 + $0xd70] sm:$0xff]
    %v510 = vld [vmem:[#allocation2 + $0xd78] sm:$0xff]
    %v511 = vld [vmem:[#allocation2 + $0xd80] sm:$0xff]
    %v512 = vld [vmem:[#allocation2 + $0xd88] sm:$0xff]
    %v513 = vld [vmem:[#allocation2 + $0xd90] sm:$0xff]
    %v514 = vld [vmem:[#allocation2 + $0xd98] sm:$0xff]
    %v515 = vld [vmem:[#allocation2 + $0xda0] sm:$0xff]
    %v516 = vld [vmem:[#allocation2 + $0xda8] sm:$0xff]
    %v517 = vld [vmem:[#allocation2 + $0xdb0] sm:$0xff]
    %v518 = vld [vmem:[#allocation2 + $0xdb8] sm:$0xff]
    %v519 = vld [vmem:[#allocation2 + $0xdc0] sm:$0xff]
    %v520 = vld [vmem:[#allocation2 + $0xdc8] sm:$0xff]
    %v521 = vld [vmem:[#allocation2 + $0xdd0] sm:$0xff]
    %v522 = vld [vmem:[#allocation2 + $0xdd8] sm:$0xff]
    %v523 = vld [vmem:[#allocation2 + $0xde0] sm:$0xff]
    %v524 = vld [vmem:[#allocation2 + $0xde8] sm:$0xff]
    %v525 = vld [vmem:[#allocation2 + $0xdf0] sm:$0xff]
    %v526 = vld [vmem:[#allocation2 + $0xdf8] sm:$0xff]
    %v527 = vld [vmem:[#allocation2 + $0xe00] sm:$0xff]
    %v528 = vld [vmem:[#allocation2 + $0xe08] sm:$0xff]
    %v529 = vld [vmem:[#allocation2 + $0xe10] sm:$0xff]
    %v530 = vld [vmem:[#allocation2 + $0xe18] sm:$0xff]
    %v531 = vld [vmem:[#allocation2 + $0xe20] sm:$0xff]
    %v532 = vld [vmem:[#allocation2 + $0xe28] sm:$0xff]
    %v533 = vld [vmem:[#allocation2 + $0xe30] sm:$0xff]
    %v534 = vld [vmem:[#allocation2 + $0xe38] sm:$0xff]
    %v535 = vld [vmem:[#allocation2 + $0xe40] sm:$0xff]
    %v536 = vld [vmem:[#allocation2 + $0xe48] sm:$0xff]
    %v537 = vld [vmem:[#allocation2 + $0xe50] sm:$0xff]
    %v538 = vld [vmem:[#allocation2 + $0xe58] sm:$0xff]
    %v539 = vld [vmem:[#allocation2 + $0xe60] sm:$0xff]
    %v540 = vld [vmem:[#allocation2 + $0xe68] sm:$0xff]
    %v541 = vld [vmem:[#allocation2 + $0xe70] sm:$0xff]
    %v542 = vld [vmem:[#allocation2 + $0xe78] sm:$0xff]
    %v543 = vld [vmem:[#allocation2 + $0xe80] sm:$0xff]
    %v544 = vld [vmem:[#allocation2 + $0xe88] sm:$0xff]
    %v545 = vld [vmem:[#allocation2 + $0xe90] sm:$0xff]
    %v546 = vld [vmem:[#allocation2 + $0xe98] sm:$0xff]
    %v547 = vld [vmem:[#allocation2 + $0xea0] sm:$0xff]
    %v548 = vld [vmem:[#allocation2 + $0xea8] sm:$0xff]
    %v549 = vld [vmem:[#allocation2 + $0xeb0] sm:$0xff]
    %v550 = vld [vmem:[#allocation2 + $0xeb8] sm:$0xff]
    %v551 = vld [vmem:[#allocation2 + $0xec0] sm:$0xff]
    %v552 = vld [vmem:[#allocation2 + $0xec8] sm:$0xff]
    %v553 = vld [vmem:[#allocation2 + $0xed0] sm:$0xff]
    %v554 = vld [vmem:[#allocation2 + $0xed8] sm:$0xff]
    %v555 = vld [vmem:[#allocation2 + $0xee0] sm:$0xff]
    %v556 = vld [vmem:[#allocation2 + $0xee8] sm:$0xff]
    %v557 = vld [vmem:[#allocation2 + $0xef0] sm:$0xff]
    %v558 = vld [vmem:[#allocation2 + $0xef8] sm:$0xff]
    %v559 = vld [vmem:[#allocation2 + $0xf00] sm:$0xff]
    %v560 = vld [vmem:[#allocation2 + $0xf08] sm:$0xff]
    %v561 = vld [vmem:[#allocation2 + $0xf10] sm:$0xff]
    %v562 = vld [vmem:[#allocation2 + $0xf18] sm:$0xff]
    %v563 = vld [vmem:[#allocation2 + $0xf20] sm:$0xff]
    %v564 = vld [vmem:[#allocation2 + $0xf28] sm:$0xff]
    %v565 = vld [vmem:[#allocation2 + $0xf30] sm:$0xff]
    %v566 = vld [vmem:[#allocation2 + $0xf38] sm:$0xff]
    %v567 = vld [vmem:[#allocation2 + $0xf40] sm:$0xff]
    %v568 = vld [vmem:[#allocation2 + $0xf48] sm:$0xff]
    %v569 = vld [vmem:[#allocation2 + $0xf50] sm:$0xff]
    %v570 = vld [vmem:[#allocation2 + $0xf58] sm:$0xff]
    %v571 = vld [vmem:[#allocation2 + $0xf60] sm:$0xff]
    %v572 = vld [vmem:[#allocation2 + $0xf68] sm:$0xff]
    %v573 = vld [vmem:[#allocation2 + $0xf70] sm:$0xff]
    %v574 = vld [vmem:[#allocation2 + $0xf78] sm:$0xff]
    %v575 = vld [vmem:[#allocation2 + $0xf80] sm:$0xff]
    %v576 = vld [vmem:[#allocation2 + $0xf88] sm:$0xff]
    %v577 = vld [vmem:[#allocation2 + $0xf90] sm:$0xff]
    %v578 = vld [vmem:[#allocation2 + $0xf98] sm:$0xff]
    %v579 = vld [vmem:[#allocation2 + $0xfa0] sm:$0xff]
    %v580 = vld [vmem:[#allocation2 + $0xfa8] sm:$0xff]
    %v581 = vld [vmem:[#allocation2 + $0xfb0] sm:$0xff]
    %v582 = vld [vmem:[#allocation2 + $0xfb8] sm:$0xff]
    %v583 = vld [vmem:[#allocation2 + $0xfc0] sm:$0xff]
    %v584 = vld [vmem:[#allocation2 + $0xfc8] sm:$0xff]
    %v585 = vld [vmem:[#allocation2 + $0xfd0] sm:$0xff]
    %v586 = vld [vmem:[#allocation2 + $0xfd8] sm:$0xff]
    %v587 = vld [vmem:[#allocation2 + $0xfe0] sm:$0xff]
    %v588 = vld [vmem:[#allocation2 + $0xfe8] sm:$0xff]
    %v589 = vld [vmem:[#allocation2 + $0xff0] sm:$0xff]
    %v590 = vld [vmem:[#allocation2 + $0xff8] sm:$0xff]
    %v591 = vld [vmem:[#allocation2 + $0x1000] sm:$0xff]
    %v592 = vld [vmem:[#allocation2 + $0x1008] sm:$0xff]
    %v593 = vld [vmem:[#allocation2 + $0x1010] sm:$0xff]
    %v594 = vld [vmem:[#allocation2 + $0x1018] sm:$0xff]
    %v595 = vld [vmem:[#allocation2 + $0x1020] sm:$0xff]
    %v596 = vld [vmem:[#allocation2 + $0x1028] sm:$0xff]
    %v597 = vld [vmem:[#allocation2 + $0x1030] sm:$0xff]
    %v598 = vld [vmem:[#allocation2 + $0x1038] sm:$0xff]
    %v599 = vld [vmem:[#allocation2 + $0x1040] sm:$0xff]
    %v600 = vld [vmem:[#allocation2 + $0x1048] sm:$0xff]
    %v601 = vld [vmem:[#allocation2 + $0x1050] sm:$0xff]
    %v602 = vld [vmem:[#allocation2 + $0x1058] sm:$0xff]
    %v603 = vld [vmem:[#allocation2 + $0x1060] sm:$0xff]
    %v604 = vld [vmem:[#allocation2 + $0x1068] sm:$0xff]
    %v605 = vld [vmem:[#allocation2 + $0x1070] sm:$0xff]
    %v606 = vld [vmem:[#allocation2 + $0x1078] sm:$0xff]
    %v607 = vld [vmem:[#allocation2 + $0x1080] sm:$0xff]
    %v608 = vld [vmem:[#allocation2 + $0x1088] sm:$0xff]
    %v609 = vld [vmem:[#allocation2 + $0x1090] sm:$0xff]
    %v610 = vld [vmem:[#allocation2 + $0x1098] sm:$0xff]
    %v611 = vld [vmem:[#allocation2 + $0x10a0] sm:$0xff]
    %v612 = vld [vmem:[#allocation2 + $0x10a8] sm:$0xff]
    %v613 = vld [vmem:[#allocation2 + $0x10b0] sm:$0xff]
    %v614 = vld [vmem:[#allocation2 + $0x10b8] sm:$0xff]
    %v615 = vld [vmem:[#allocation2 + $0x10c0] sm:$0xff]
    %v616 = vld [vmem:[#allocation2 + $0x10c8] sm:$0xff]
    %v617 = vld [vmem:[#allocation2 + $0x10d0] sm:$0xff]
    %v618 = vld [vmem:[#allocation2 + $0x10d8] sm:$0xff]
    %v619 = vld [vmem:[#allocation2 + $0x10e0] sm:$0xff]
    %v620 = vld [vmem:[#allocation2 + $0x10e8] sm:$0xff]
    %v621 = vld [vmem:[#allocation2 + $0x10f0] sm:$0xff]
    %v622 = vld [vmem:[#allocation2 + $0x10f8] sm:$0xff]
    %v623 = vld [vmem:[#allocation2 + $0x1100] sm:$0xff]
    %v624 = vld [vmem:[#allocation2 + $0x1108] sm:$0xff]
    %v625 = vld [vmem:[#allocation2 + $0x1110] sm:$0xff]
    %v626 = vld [vmem:[#allocation2 + $0x1118] sm:$0xff]
    %v627 = vld [vmem:[#allocation2 + $0x1120] sm:$0xff]
    %v628 = vld [vmem:[#allocation2 + $0x1128] sm:$0xff]
    %v629 = vld [vmem:[#allocation2 + $0x1130] sm:$0xff]
    %v630 = vld [vmem:[#allocation2 + $0x1138] sm:$0xff]
    %v631 = vld [vmem:[#allocation2 + $0x1140] sm:$0xff]
    %v632 = vld [vmem:[#allocation2 + $0x1148] sm:$0xff]
    %v633 = vld [vmem:[#allocation2 + $0x1150] sm:$0xff]
    %v634 = vld [vmem:[#allocation2 + $0x1158] sm:$0xff]
    %v635 = vld [vmem:[#allocation2 + $0x1160] sm:$0xff]
    %v636 = vld [vmem:[#allocation2 + $0x1168] sm:$0xff]
    %v637 = vld [vmem:[#allocation2 + $0x1170] sm:$0xff]
    %v638 = vld [vmem:[#allocation2 + $0x1178] sm:$0xff]
    %v639 = vld [vmem:[#allocation2 + $0x1180] sm:$0xff]
    %v640 = vld [vmem:[#allocation2 + $0x1188] sm:$0xff]
    %v641 = vld [vmem:[#allocation2 + $0x1190] sm:$0xff]
    %v642 = vld [vmem:[#allocation2 + $0x1198] sm:$0xff]
    %v643 = vld [vmem:[#allocation2 + $0x11a0] sm:$0xff]
    %v644 = vld [vmem:[#allocation2 + $0x11a8] sm:$0xff]
    %v645 = vld [vmem:[#allocation2 + $0x11b0] sm:$0xff]
    %v646 = vld [vmem:[#allocation2 + $0x11b8] sm:$0xff]
    %v647 = vld [vmem:[#allocation2 + $0x11c0] sm:$0xff]
    %v648 = vld [vmem:[#allocation2 + $0x11c8] sm:$0xff]
    %v649 = vld [vmem:[#allocation2 + $0x11d0] sm:$0xff]
    %v650 = vld [vmem:[#allocation2 + $0x11d8] sm:$0xff]
    %v651 = vld [vmem:[#allocation2 + $0x11e0] sm:$0xff]
    %v652 = vld [vmem:[#allocation2 + $0x11e8] sm:$0xff]
    %v653 = vld [vmem:[#allocation2 + $0x11f0] sm:$0xff]
    %v654 = vld [vmem:[#allocation2 + $0x11f8] sm:$0xff]
    %v655 = vld [vmem:[#allocation2 + $0x1200] sm:$0xff]
    %v656 = vld [vmem:[#allocation2 + $0x1208] sm:$0xff]
    %v657 = vld [vmem:[#allocation2 + $0x1210] sm:$0xff]
    %v658 = vld [vmem:[#allocation2 + $0x1218] sm:$0xff]
    %v659 = vld [vmem:[#allocation2 + $0x1220] sm:$0xff]
    %v660 = vld [vmem:[#allocation2 + $0x1228] sm:$0xff]
    %v661 = vld [vmem:[#allocation2 + $0x1230] sm:$0xff]
    %v662 = vld [vmem:[#allocation2 + $0x1238] sm:$0xff]
    %v663 = vld [vmem:[#allocation2 + $0x1240] sm:$0xff]
    %v664 = vld [vmem:[#allocation2 + $0x1248] sm:$0xff]
    %v665 = vld [vmem:[#allocation2 + $0x1250] sm:$0xff]
    %v666 = vld [vmem:[#allocation2 + $0x1258] sm:$0xff]
    %v667 = vld [vmem:[#allocation2 + $0x1260] sm:$0xff]
    %v668 = vld [vmem:[#allocation2 + $0x1268] sm:$0xff]
    %v669 = vld [vmem:[#allocation2 + $0x1270] sm:$0xff]
    %v670 = vld [vmem:[#allocation2 + $0x1278] sm:$0xff]
    %v671 = vld [vmem:[#allocation2 + $0x1280] sm:$0xff]
    %v672 = vld [vmem:[#allocation2 + $0x1288] sm:$0xff]
    %v673 = vld [vmem:[#allocation2 + $0x1290] sm:$0xff]
    %v674 = vld [vmem:[#allocation2 + $0x1298] sm:$0xff]
    %v675 = vld [vmem:[#allocation2 + $0x12a0] sm:$0xff]
    %v676 = vld [vmem:[#allocation2 + $0x12a8] sm:$0xff]
    %v677 = vld [vmem:[#allocation2 + $0x12b0] sm:$0xff]
    %v678 = vld [vmem:[#allocation2 + $0x12b8] sm:$0xff]
    %v679 = vld [vmem:[#allocation2 + $0x12c0] sm:$0xff]
    %v680 = vld [vmem:[#allocation2 + $0x12c8] sm:$0xff]
    %v681 = vld [vmem:[#allocation2 + $0x12d0] sm:$0xff]
    %v682 = vld [vmem:[#allocation2 + $0x12d8] sm:$0xff]
    %v683 = vld [vmem:[#allocation2 + $0x12e0] sm:$0xff]
    %v684 = vld [vmem:[#allocation2 + $0x12e8] sm:$0xff]
    %v685 = vld [vmem:[#allocation2 + $0x12f0] sm:$0xff]
    %v686 = vld [vmem:[#allocation2 + $0x12f8] sm:$0xff]
    %v687 = vld [vmem:[#allocation2 + $0x1300] sm:$0xff]
    %v688 = vld [vmem:[#allocation2 + $0x1308] sm:$0xff]
    %v689 = vld [vmem:[#allocation2 + $0x1310] sm:$0xff]
    %v690 = vld [vmem:[#allocation2 + $0x1318] sm:$0xff]
    %v691 = vld [vmem:[#allocation2 + $0x1320] sm:$0xff]
    %v692 = vld [vmem:[#allocation2 + $0x1328] sm:$0xff]
    %v693 = vld [vmem:[#allocation2 + $0x1330] sm:$0xff]
    %v694 = vld [vmem:[#allocation2 + $0x1338] sm:$0xff]
    %v695 = vld [vmem:[#allocation2 + $0x1340] sm:$0xff]
    %v696 = vld [vmem:[#allocation2 + $0x1348] sm:$0xff]
    %v697 = vld [vmem:[#allocation2 + $0x1350] sm:$0xff]
    %v698 = vld [vmem:[#allocation2 + $0x1358] sm:$0xff]
    %v699 = vld [vmem:[#allocation2 + $0x1360] sm:$0xff]
    %v700 = vld [vmem:[#allocation2 + $0x1368] sm:$0xff]
    %v701 = vld [vmem:[#allocation2 + $0x1370] sm:$0xff]
    %v702 = vld [vmem:[#allocation2 + $0x1378] sm:$0xff]
    %v703 = vld [vmem:[#allocation2 + $0x1380] sm:$0xff]
    %v704 = vld [vmem:[#allocation2 + $0x1388] sm:$0xff]
    %v705 = vld [vmem:[#allocation2 + $0x1390] sm:$0xff]
    %v706 = vld [vmem:[#allocation2 + $0x1398] sm:$0xff]
    %v707 = vld [vmem:[#allocation2 + $0x13a0] sm:$0xff]
    %v708 = vld [vmem:[#allocation2 + $0x13a8] sm:$0xff]
    %v709 = vld [vmem:[#allocation2 + $0x13b0] sm:$0xff]
    %v710 = vld [vmem:[#allocation2 + $0x13b8] sm:$0xff]
    %v711 = vld [vmem:[#allocation2 + $0x13c0] sm:$0xff]
    %v712 = vld [vmem:[#allocation2 + $0x13c8] sm:$0xff]
    %v713 = vld [vmem:[#allocation2 + $0x13d0] sm:$0xff]
    %v714 = vld [vmem:[#allocation2 + $0x13d8] sm:$0xff]
    %v715 = vld [vmem:[#allocation2 + $0x13e0] sm:$0xff]
    %v716 = vld [vmem:[#allocation2 + $0x13e8] sm:$0xff]
    %v717 = vld [vmem:[#allocation2 + $0x13f0] sm:$0xff]
    %v718 = vld [vmem:[#allocation2 + $0x13f8] sm:$0xff]
    %v719 = vld [vmem:[#allocation2 + $0x1400] sm:$0xff]
    %v720 = vld [vmem:[#allocation2 + $0x1408] sm:$0xff]
    %v721 = vld [vmem:[#allocation2 + $0x1410] sm:$0xff]
    %v722 = vld [vmem:[#allocation2 + $0x1418] sm:$0xff]
    %v723 = vld [vmem:[#allocation2 + $0x1420] sm:$0xff]
    %v724 = vld [vmem:[#allocation2 + $0x1428] sm:$0xff]
    %v725 = vld [vmem:[#allocation2 + $0x1430] sm:$0xff]
    %v726 = vld [vmem:[#allocation2 + $0x1438] sm:$0xff]
    %v727 = vld [vmem:[#allocation2 + $0x1440] sm:$0xff]
    %v728 = vld [vmem:[#allocation2 + $0x1448] sm:$0xff]
    %v729 = vld [vmem:[#allocation2 + $0x1450] sm:$0xff]
    %v730 = vld [vmem:[#allocation2 + $0x1458] sm:$0xff]
    %v731 = vld [vmem:[#allocation2 + $0x1460] sm:$0xff]
    %v732 = vld [vmem:[#allocation2 + $0x1468] sm:$0xff]
    %v733 = vld [vmem:[#allocation2 + $0x1470] sm:$0xff]
    %v734 = vld [vmem:[#allocation2 + $0x1478] sm:$0xff]
    %v735 = vld [vmem:[#allocation2 + $0x1480] sm:$0xff]
    %v736 = vld [vmem:[#allocation2 + $0x1488] sm:$0xff]
    %v737 = vld [vmem:[#allocation2 + $0x1490] sm:$0xff]
    %v738 = vld [vmem:[#allocation2 + $0x1498] sm:$0xff]
    %v739 = vld [vmem:[#allocation2 + $0x14a0] sm:$0xff]
    %v740 = vld [vmem:[#allocation2 + $0x14a8] sm:$0xff]
    %v741 = vld [vmem:[#allocation2 + $0x14b0] sm:$0xff]
    %v742 = vld [vmem:[#allocation2 + $0x14b8] sm:$0xff]
    %v743 = vld [vmem:[#allocation2 + $0x14c0] sm:$0xff]
    %v744 = vld [vmem:[#allocation2 + $0x14c8] sm:$0xff]
    %v745 = vld [vmem:[#allocation2 + $0x14d0] sm:$0xff]
    %v746 = vld [vmem:[#allocation2 + $0x14d8] sm:$0xff]
    %v747 = vld [vmem:[#allocation2 + $0x14e0] sm:$0xff]
    %v748 = vld [vmem:[#allocation2 + $0x14e8] sm:$0xff]
    %v749 = vld [vmem:[#allocation2 + $0x14f0] sm:$0xff]
    %v750 = vld [vmem:[#allocation2 + $0x14f8] sm:$0xff]
    %v751 = vld [vmem:[#allocation5] sm:$0xf]
    %v753 = vlaneseq
    %v754 = vshrl.u32 %v753, 7
    %v755 = vsub.s32 0, %v754
    %v756 = vrot.slane %v751, %v755
    %v757 = vlaneseq
    %v758 = vshrl.u32 %v757, 7
    %v759 = vsub.s32 1, %v758
    %v760 = vrot.slane %v751, %v759
    %v761 = vlaneseq
    %v762 = vshrl.u32 %v761, 7
    %v763 = vsub.s32 2, %v762
    %v764 = vrot.slane %v751, %v763
    %v765 = vlaneseq
    %v766 = vshrl.u32 %v765, 7
    %v767 = vsub.s32 3, %v766
    %v768 = vrot.slane %v751, %v767
    %v776 = vcombine.high %v76, %v76
    %v778 = vunpack.c.l.s4 1983009808
    %v779 = vunpack.c.0.s8 %v778
    %v780 = vlaneseq
    %v781 = vshrl.u32 %v780, 7
    %v782 = vsub.s32 %v779, %v781
    %v783 = vrot.slane %v76, %v782
    %v785 = vunpack.c.l.s4 1983009808
    %v786 = vunpack.c.0.s8 %v785
    %v787 = vlaneseq
    %v788 = vshrl.u32 %v787, 7
    %v789 = vsub.s32 %v786, %v788
    %v790 = vrot.slane %v776, %v789
    %v791 = vcombine.high %v783, %v783
    %v792 = vcombine.high %v790, %v790
    %v793 = vcombine.high %v77, %v77
    %v795 = vunpack.c.l.s4 1983009808
    %v796 = vunpack.c.0.s8 %v795
    %v797 = vlaneseq
    %v798 = vshrl.u32 %v797, 7
    %v799 = vsub.s32 %v796, %v798
    %v800 = vrot.slane %v77, %v799
    %v802 = vunpack.c.l.s4 1983009808
    %v803 = vunpack.c.0.s8 %v802
    %v804 = vlaneseq
    %v805 = vshrl.u32 %v804, 7
    %v806 = vsub.s32 %v803, %v805
    %v807 = vrot.slane %v793, %v806
    %v808 = vcombine.high %v800, %v800
    %v809 = vcombine.high %v807, %v807
    %v810 = vcombine.high %v78, %v78
    %v812 = vunpack.c.l.s4 1983009808
    %v813 = vunpack.c.0.s8 %v812
    %v814 = vlaneseq
    %v815 = vshrl.u32 %v814, 7
    %v816 = vsub.s32 %v813, %v815
    %v817 = vrot.slane %v78, %v816
    %v819 = vunpack.c.l.s4 1983009808
    %v820 = vunpack.c.0.s8 %v819
    %v821 = vlaneseq
    %v822 = vshrl.u32 %v821, 7
    %v823 = vsub.s32 %v820, %v822
    %v824 = vrot.slane %v810, %v823
    %v825 = vcombine.high %v817, %v817
    %vm836 = vcmask 523264
    %v837 = vsel %vm836, %v824, 0
    %839 = vmatprep.subr.mxu0 %v80
    %840 = vmatpush1.msra.mxu0 %v79
    %841 = vmatprep.subr.mxu0 %v84
    %842 = vmatpush1.msra.mxu0 %v83
    %843 = vmatprep.subr.mxu0 %v88
    %844 = vmatpush1.msra.mxu0 %v87
    %845 = vmatprep.subr.mxu0 %v92
    %846 = vmatpush1.msra.mxu0 %v91
    %847 = vmatprep.subr.mxu0 %v96
    %848 = vmatpush1.msra.mxu0 %v95
    %849 = vmatprep.subr.mxu0 %v100
    %850 = vmatpush1.msra.mxu0 %v99
    %851 = vmatprep.subr.mxu0 %v104
    %852 = vmatpush1.msra.mxu0 %v103
    %853 = vmatprep.subr.mxu0 %v108
    %854 = vmatpush1.msra.mxu0 %v107
    %855 = vmatprep.subr.mxu0 %v112
    %856 = vmatpush1.msra.mxu0 %v111
    %857 = vmatprep.subr.mxu0 %v116
    %858 = vmatpush1.msra.mxu0 %v115
    %859 = vmatprep.subr.mxu0 %v120
    %860 = vmatpush1.msra.mxu0 %v119
    %861 = vmatprep.subr.mxu0 %v124
    %862 = vmatpush1.msra.mxu0 %v123
    %863 = vmatprep.subr.mxu0 %v128
    %864 = vmatpush1.msra.mxu0 %v127
    %865 = vmatprep.subr.mxu0 %v132
    %866 = vmatpush1.msra.mxu0 %v131
    %867 = vmatprep.subr.mxu0 %v136
    %868 = vmatpush1.msra.mxu0 %v135
    %869 = vmatprep.subr.mxu0 %v140
    %870 = vmatpush1.msra.mxu0 %v139
    %871 = vmatprep.subr.mxu0 %v144
    %872 = vmatpush1.msra.mxu0 %v143
    %873 = vmatprep.subr.mxu0 %v148
    %874 = vmatpush1.msra.mxu0 %v147
    %875 = vmatprep.subr.mxu0 %v152
    %876 = vmatpush1.msra.mxu0 %v151
    %877 = vmatprep.subr.mxu0 %v156
    %878 = vmatpush1.msra.mxu0 %v155
    %879 = vmatprep.subr.mxu0 %v160
    %880 = vmatpush1.msra.mxu0 %v159
    %881 = vmatprep.subr.mxu0 %v164
    %882 = vmatpush1.msra.mxu0 %v163
    %883 = vmatprep.subr.mxu0 %v168
    %884 = vmatpush1.msra.mxu0 %v167
    %885 = vmatprep.subr.mxu0 %v172
    %886 = vmatpush1.msra.mxu0 %v171
    %887 = vmatprep.subr.mxu0 %v176
    %888 = vmatpush1.msra.mxu0 %v175
    %889 = vmatprep.subr.mxu0 %v180
    %890 = vmatpush1.msra.mxu0 %v179
    %891 = vmatprep.subr.mxu0 %v184
    %892 = vmatpush1.msra.mxu0 %v183
    %893 = vmatprep.subr.mxu0 %v188
    %894 = vmatpush1.msra.mxu0 %v187
    %895 = vmatprep.subr.mxu0 %v192
    %896 = vmatpush1.msra.mxu0 %v191
    %897 = vmatprep.subr.mxu0 %v196
    %898 = vmatpush1.msra.mxu0 %v195
    %899 = vmatprep.subr.mxu0 %v200
    %900 = vmatpush1.msra.mxu0 %v199
    %901 = vmatprep.subr.mxu0 %v204
    %902 = vmatpush1.msra.mxu0 %v203
    %903 = vmatprep.mubr.f32.mxu0 %v791
    %904 = vmatmul.mubr.f32.gmra.mrb[0].mxu0 %v783
    %v905 = vpop.f32.mrb[0].mxu0
    %v906 = vadd.f32 %v756, %v905
    %v907 = vpop.f32.mrb[0].mxu0
    %v908 = vadd.f32 %v760, %v907
    %909 = vdwg.mxu0
    %910 = vmatprep.subr.mxu0 %v208
    %911 = vmatpush1.msra.mxu0 %v207
    %912 = vmatprep.subr.mxu0 %v212
    %913 = vmatpush1.msra.mxu0 %v211
    %914 = vmatprep.subr.mxu0 %v216
    %915 = vmatpush1.msra.mxu0 %v215
    %916 = vmatprep.subr.mxu0 %v220
    %917 = vmatpush1.msra.mxu0 %v219
    %918 = vmatprep.subr.mxu0 %v224
    %919 = vmatpush1.msra.mxu0 %v223
    %920 = vmatprep.subr.mxu0 %v228
    %921 = vmatpush1.msra.mxu0 %v227
    %922 = vmatprep.subr.mxu0 %v232
    %923 = vmatpush1.msra.mxu0 %v231
    %924 = vmatprep.subr.mxu0 %v236
    %925 = vmatpush1.msra.mxu0 %v235
    %926 = vmatprep.subr.mxu0 %v240
    %927 = vmatpush1.msra.mxu0 %v239
    %928 = vmatprep.subr.mxu0 %v244
    %929 = vmatpush1.msra.mxu0 %v243
    %930 = vmatprep.subr.mxu0 %v248
    %931 = vmatpush1.msra.mxu0 %v247
    %932 = vmatprep.subr.mxu0 %v252
    %933 = vmatpush1.msra.mxu0 %v251
    %934 = vmatprep.subr.mxu0 %v256
    %935 = vmatpush1.msra.mxu0 %v255
    %936 = vmatprep.subr.mxu0 %v260
    %937 = vmatpush1.msra.mxu0 %v259
    %938 = vmatprep.subr.mxu0 %v264
    %939 = vmatpush1.msra.mxu0 %v263
    %940 = vmatprep.subr.mxu0 %v268
    %941 = vmatpush1.msra.mxu0 %v267
    %942 = vmatprep.subr.mxu0 %v272
    %943 = vmatpush1.msra.mxu0 %v271
    %944 = vmatprep.subr.mxu0 %v276
    %945 = vmatpush1.msra.mxu0 %v275
    %946 = vmatprep.subr.mxu0 %v280
    %947 = vmatpush1.msra.mxu0 %v279
    %948 = vmatprep.subr.mxu0 %v284
    %949 = vmatpush1.msra.mxu0 %v283
    %950 = vmatprep.subr.mxu0 %v288
    %951 = vmatpush1.msra.mxu0 %v287
    %952 = vmatprep.subr.mxu0 %v292
    %953 = vmatpush1.msra.mxu0 %v291
    %954 = vmatprep.subr.mxu0 %v296
    %955 = vmatpush1.msra.mxu0 %v295
    %956 = vmatprep.subr.mxu0 %v300
    %957 = vmatpush1.msra.mxu0 %v299
    %958 = vmatprep.subr.mxu0 %v304
    %959 = vmatpush1.msra.mxu0 %v303
    %960 = vmatprep.subr.mxu0 %v308
    %961 = vmatpush1.msra.mxu0 %v307
    %962 = vmatprep.subr.mxu0 %v312
    %963 = vmatpush1.msra.mxu0 %v311
    %964 = vmatprep.subr.mxu0 %v316
    %965 = vmatpush1.msra.mxu0 %v315
    %966 = vmatprep.subr.mxu0 %v320
    %967 = vmatpush1.msra.mxu0 %v319
    %968 = vmatprep.subr.mxu0 %v324
    %969 = vmatpush1.msra.mxu0 %v323
    %970 = vmatprep.subr.mxu0 %v328
    %971 = vmatpush1.msra.mxu0 %v327
    %972 = vmatprep.subr.mxu0 %v332
    %973 = vmatpush1.msra.mxu0 %v331
    %974 = vmatprep.mubr.f32.mxu0 %v792
    %975 = vmatmul.mubr.f32.gmra.mrb[0].mxu0 %v790
    %v976 = vpop.f32.mrb[0].mxu0
    %v977 = vadd.f32 %v906, %v976
    %v978 = vpop.f32.mrb[0].mxu0
    %v979 = vadd.f32 %v908, %v978
    %980 = vdwg.mxu0
    %981 = vmatprep.subr.mxu0 %v336
    %982 = vmatpush1.msra.mxu0 %v335
    %983 = vmatprep.subr.mxu0 %v340
    %984 = vmatpush1.msra.mxu0 %v339
    %985 = vmatprep.subr.mxu0 %v344
    %986 = vmatpush1.msra.mxu0 %v343
    %987 = vmatprep.subr.mxu0 %v348
    %988 = vmatpush1.msra.mxu0 %v347
    %989 = vmatprep.subr.mxu0 %v352
    %990 = vmatpush1.msra.mxu0 %v351
    %991 = vmatprep.subr.mxu0 %v356
    %992 = vmatpush1.msra.mxu0 %v355
    %993 = vmatprep.subr.mxu0 %v360
    %994 = vmatpush1.msra.mxu0 %v359
    %995 = vmatprep.subr.mxu0 %v364
    %996 = vmatpush1.msra.mxu0 %v363
    %997 = vmatprep.subr.mxu0 %v368
    %998 = vmatpush1.msra.mxu0 %v367
    %999 = vmatprep.subr.mxu0 %v372
    %1000 = vmatpush1.msra.mxu0 %v371
    %1001 = vmatprep.subr.mxu0 %v376
    %1002 = vmatpush1.msra.mxu0 %v375
    %1003 = vmatprep.subr.mxu0 %v380
    %1004 = vmatpush1.msra.mxu0 %v379
    %1005 = vmatprep.subr.mxu0 %v384
    %1006 = vmatpush1.msra.mxu0 %v383
    %1007 = vmatprep.subr.mxu0 %v388
    %1008 = vmatpush1.msra.mxu0 %v387
    %1009 = vmatprep.subr.mxu0 %v392
    %1010 = vmatpush1.msra.mxu0 %v391
    %1011 = vmatprep.subr.mxu0 %v396
    %1012 = vmatpush1.msra.mxu0 %v395
    %1013 = vmatprep.subr.mxu0 %v400
    %1014 = vmatpush1.msra.mxu0 %v399
    %1015 = vmatprep.subr.mxu0 %v404
    %1016 = vmatpush1.msra.mxu0 %v403
    %1017 = vmatprep.subr.mxu0 %v408
    %1018 = vmatpush1.msra.mxu0 %v407
    %1019 = vmatprep.subr.mxu0 %v412
    %1020 = vmatpush1.msra.mxu0 %v411
    %1021 = vmatprep.subr.mxu0 %v416
    %1022 = vmatpush1.msra.mxu0 %v415
    %1023 = vmatprep.subr.mxu0 %v420
    %1024 = vmatpush1.msra.mxu0 %v419
    %1025 = vmatprep.subr.mxu0 %v424
    %1026 = vmatpush1.msra.mxu0 %v423
    %1027 = vmatprep.subr.mxu0 %v428
    %1028 = vmatpush1.msra.mxu0 %v427
    %1029 = vmatprep.subr.mxu0 %v432
    %1030 = vmatpush1.msra.mxu0 %v431
    %1031 = vmatprep.subr.mxu0 %v436
    %1032 = vmatpush1.msra.mxu0 %v435
    %1033 = vmatprep.subr.mxu0 %v440
    %1034 = vmatpush1.msra.mxu0 %v439
    %1035 = vmatprep.subr.mxu0 %v444
    %1036 = vmatpush1.msra.mxu0 %v443
    %1037 = vmatprep.subr.mxu0 %v448
    %1038 = vmatpush1.msra.mxu0 %v447
    %1039 = vmatprep.subr.mxu0 %v452
    %1040 = vmatpush1.msra.mxu0 %v451
    %1041 = vmatprep.subr.mxu0 %v456
    %1042 = vmatpush1.msra.mxu0 %v455
    %1043 = vmatprep.subr.mxu0 %v460
    %1044 = vmatpush1.msra.mxu0 %v459
    %1045 = vmatprep.mubr.f32.mxu0 %v808
    %1046 = vmatmul.mubr.f32.gmra.mrb[0].mxu0 %v800
    %v1047 = vpop.f32.mrb[0].mxu0
    %v1048 = vadd.f32 %v977, %v1047
    %v1049 = vpop.f32.mrb[0].mxu0
    %v1050 = vadd.f32 %v979, %v1049
    %1051 = vdwg.mxu0
    %1052 = vmatprep.subr.mxu0 %v464
    %1053 = vmatpush1.msra.mxu0 %v463
    %1054 = vmatprep.subr.mxu0 %v468
    %1055 = vmatpush1.msra.mxu0 %v467
    %1056 = vmatprep.subr.mxu0 %v472
    %1057 = vmatpush1.msra.mxu0 %v471
    %1058 = vmatprep.subr.mxu0 %v476
    %1059 = vmatpush1.msra.mxu0 %v475
    %1060 = vmatprep.subr.mxu0 %v480
    %1061 = vmatpush1.msra.mxu0 %v479
    %1062 = vmatprep.subr.mxu0 %v484
    %1063 = vmatpush1.msra.mxu0 %v483
    %1064 = vmatprep.subr.mxu0 %v488
    %1065 = vmatpush1.msra.mxu0 %v487
    %1066 = vmatprep.subr.mxu0 %v492
    %1067 = vmatpush1.msra.mxu0 %v491
    %1068 = vmatprep.subr.mxu0 %v496
    %1069 = vmatpush1.msra.mxu0 %v495
    %1070 = vmatprep.subr.mxu0 %v500
    %1071 = vmatpush1.msra.mxu0 %v499
    %1072 = vmatprep.subr.mxu0 %v504
    %1073 = vmatpush1.msra.mxu0 %v503
    %1074 = vmatprep.subr.mxu0 %v508
    %1075 = vmatpush1.msra.mxu0 %v507
    %1076 = vmatprep.subr.mxu0 %v512
    %1077 = vmatpush1.msra.mxu0 %v511
    %1078 = vmatprep.subr.mxu0 %v516
    %1079 = vmatpush1.msra.mxu0 %v515
    %1080 = vmatprep.subr.mxu0 %v520
    %1081 = vmatpush1.msra.mxu0 %v519
    %1082 = vmatprep.subr.mxu0 %v524
    %1083 = vmatpush1.msra.mxu0 %v523
    %1084 = vmatprep.subr.mxu0 %v528
    %1085 = vmatpush1.msra.mxu0 %v527
    %1086 = vmatprep.subr.mxu0 %v532
    %1087 = vmatpush1.msra.mxu0 %v531
    %1088 = vmatprep.subr.mxu0 %v536
    %1089 = vmatpush1.msra.mxu0 %v535
    %1090 = vmatprep.subr.mxu0 %v540
    %1091 = vmatpush1.msra.mxu0 %v539
    %1092 = vmatprep.subr.mxu0 %v544
    %1093 = vmatpush1.msra.mxu0 %v543
    %1094 = vmatprep.subr.mxu0 %v548
    %1095 = vmatpush1.msra.mxu0 %v547
    %1096 = vmatprep.subr.mxu0 %v552
    %1097 = vmatpush1.msra.mxu0 %v551
    %1098 = vmatprep.subr.mxu0 %v556
    %1099 = vmatpush1.msra.mxu0 %v555
    %1100 = vmatprep.subr.mxu0 %v560
    %1101 = vmatpush1.msra.mxu0 %v559
    %1102 = vmatprep.subr.mxu0 %v564
    %1103 = vmatpush1.msra.mxu0 %v563
    %1104 = vmatprep.subr.mxu0 %v568
    %1105 = vmatpush1.msra.mxu0 %v567
    %1106 = vmatprep.subr.mxu0 %v572
    %1107 = vmatpush1.msra.mxu0 %v571
    %1108 = vmatprep.subr.mxu0 %v576
    %1109 = vmatpush1.msra.mxu0 %v575
    %1110 = vmatprep.subr.mxu0 %v580
    %1111 = vmatpush1.msra.mxu0 %v579
    %1112 = vmatprep.subr.mxu0 %v584
    %1113 = vmatpush1.msra.mxu0 %v583
    %1114 = vmatprep.subr.mxu0 %v588
    %1115 = vmatpush1.msra.mxu0 %v587
    %1116 = vmatprep.mubr.f32.mxu0 %v809
    %1117 = vmatmul.mubr.f32.gmra.mrb[0].mxu0 %v807
    %v1118 = vpop.f32.mrb[0].mxu0
    %v1119 = vadd.f32 %v1048, %v1118
    %v1120 = vpop.f32.mrb[0].mxu0
    %v1121 = vadd.f32 %v1050, %v1120
    %1122 = vdwg.mxu0
    %1123 = vmatprep.subr.mxu0 %v592
    %1124 = vmatpush1.msra.mxu0 %v591
    %1125 = vmatprep.subr.mxu0 %v596
    %1126 = vmatpush1.msra.mxu0 %v595
    %1127 = vmatprep.subr.mxu0 %v600
    %1128 = vmatpush1.msra.mxu0 %v599
    %1129 = vmatprep.subr.mxu0 %v604
    %1130 = vmatpush1.msra.mxu0 %v603
    %1131 = vmatprep.subr.mxu0 %v608
    %1132 = vmatpush1.msra.mxu0 %v607
    %1133 = vmatprep.subr.mxu0 %v612
    %1134 = vmatpush1.msra.mxu0 %v611
    %1135 = vmatprep.subr.mxu0 %v616
    %1136 = vmatpush1.msra.mxu0 %v615
    %1137 = vmatprep.subr.mxu0 %v620
    %1138 = vmatpush1.msra.mxu0 %v619
    %1139 = vmatprep.subr.mxu0 %v624
    %1140 = vmatpush1.msra.mxu0 %v623
    %1141 = vmatprep.subr.mxu0 %v628
    %1142 = vmatpush1.msra.mxu0 %v627
    %1143 = vmatprep.subr.mxu0 %v632
    %1144 = vmatpush1.msra.mxu0 %v631
    %1145 = vmatprep.subr.mxu0 %v636
    %1146 = vmatpush1.msra.mxu0 %v635
    %1147 = vmatprep.subr.mxu0 %v640
    %1148 = vmatpush1.msra.mxu0 %v639
    %1149 = vmatprep.subr.mxu0 %v644
    %1150 = vmatpush1.msra.mxu0 %v643
    %1151 = vmatprep.subr.mxu0 %v648
    %1152 = vmatpush1.msra.mxu0 %v647
    %1153 = vmatprep.subr.mxu0 %v652
    %1154 = vmatpush1.msra.mxu0 %v651
    %1155 = vmatprep.subr.mxu0 %v656
    %1156 = vmatpush1.msra.mxu0 %v655
    %1157 = vmatprep.subr.mxu0 %v660
    %1158 = vmatpush1.msra.mxu0 %v659
    %1159 = vmatprep.subr.mxu0 %v664
    %1160 = vmatpush1.msra.mxu0 %v663
    %1161 = vmatprep.subr.mxu0 %v668
    %1162 = vmatpush1.msra.mxu0 %v667
    %1163 = vmatprep.subr.mxu0 %v672
    %1164 = vmatpush1.msra.mxu0 %v671
    %1165 = vmatprep.subr.mxu0 %v676
    %1166 = vmatpush1.msra.mxu0 %v675
    %1167 = vmatprep.subr.mxu0 %v680
    %1168 = vmatpush1.msra.mxu0 %v679
    %1169 = vmatprep.subr.mxu0 %v684
    %1170 = vmatpush1.msra.mxu0 %v683
    %1171 = vmatprep.subr.mxu0 %v688
    %1172 = vmatpush1.msra.mxu0 %v687
    %1173 = vmatprep.subr.mxu0 %v692
    %1174 = vmatpush1.msra.mxu0 %v691
    %1175 = vmatprep.subr.mxu0 %v696
    %1176 = vmatpush1.msra.mxu0 %v695
    %1177 = vmatprep.subr.mxu0 %v700
    %1178 = vmatpush1.msra.mxu0 %v699
    %1179 = vmatprep.subr.mxu0 %v704
    %1180 = vmatpush1.msra.mxu0 %v703
    %1181 = vmatprep.subr.mxu0 %v708
    %1182 = vmatpush1.msra.mxu0 %v707
    %1183 = vmatprep.subr.mxu0 %v712
    %1184 = vmatpush1.msra.mxu0 %v711
    %1185 = vmatprep.subr.mxu0 %v716
    %1186 = vmatpush1.msra.mxu0 %v715
    %1187 = vmatprep.mubr.f32.mxu0 %v825
    %1188 = vmatmul.mubr.f32.gmra.mrb[0].mxu0 %v817
    %v1189 = vpop.f32.mrb[0].mxu0
    %v1190 = vadd.f32 %v1119, %v1189
    %v1191 = vpop.f32.mrb[0].mxu0
    %v1192 = vadd.f32 %v1121, %v1191
    %1193 = vdwg.mxu0
    %1194 = vmatprep.subr.mxu0 %v720
    %1195 = vmatpush1.msra.mxu0 %v719
    %1196 = vmatprep.subr.mxu0 %v724
    %1197 = vmatpush1.msra.mxu0 %v723
    %1198 = vmatprep.subr.mxu0 %v728
    %1199 = vmatpush1.msra.mxu0 %v727
    %1200 = vmatprep.subr.mxu0 %v732
    %1201 = vmatpush1.msra.mxu0 %v731
    %1202 = vmatprep.subr.mxu0 %v736
    %1203 = vmatpush1.msra.mxu0 %v735
    %1204 = vmatprep.subr.mxu0 %v740
    %1205 = vmatpush1.msra.mxu0 %v739
    %1206 = vmatprep.subr.mxu0 %v744
    %1207 = vmatpush1.msra.mxu0 %v743
    %1208 = vmatprep.subr.mxu0 %v748
    %1209 = vmatpush1.msra.mxu0 %v747
    %1210 = vmatprep.subr.mxu0 0.0
    %1211 = vmatpush1.msra.mxu0 0.0
    %1212 = vmatprep.subr.mxu0 0.0
    %1213 = vmatpush1.msra.mxu0 0.0
    %1214 = vmatprep.subr.mxu0 0.0
    %1215 = vmatpush1.msra.mxu0 0.0
    %1216 = vmatprep.subr.mxu0 0.0
    %1217 = vmatpush1.msra.mxu0 0.0
    %1218 = vmatprep.subr.mxu0 0.0
    %1219 = vmatpush1.msra.mxu0 0.0
    %1220 = vmatprep.subr.mxu0 0.0
    %1221 = vmatpush1.msra.mxu0 0.0
    %1222 = vmatprep.subr.mxu0 0.0
    %1223 = vmatpush1.msra.mxu0 0.0
    %1224 = vmatprep.subr.mxu0 0.0
    %1225 = vmatpush1.msra.mxu0 0.0
    %1226 = vmatprep.subr.mxu0 0.0
    %1227 = vmatpush1.msra.mxu0 0.0
    %1228 = vmatprep.subr.mxu0 0.0
    %1229 = vmatpush1.msra.mxu0 0.0
    %1230 = vmatprep.subr.mxu0 0.0
    %1231 = vmatpush1.msra.mxu0 0.0
    %1232 = vmatprep.subr.mxu0 0.0
    %1233 = vmatpush1.msra.mxu0 0.0
    %1234 = vmatprep.subr.mxu0 0.0
    %1235 = vmatpush1.msra.mxu0 0.0
    %1236 = vmatprep.subr.mxu0 0.0
    %1237 = vmatpush1.msra.mxu0 0.0
    %1238 = vmatprep.subr.mxu0 0.0
    %1239 = vmatpush1.msra.mxu0 0.0
    %1240 = vmatprep.subr.mxu0 0.0
    %1241 = vmatpush1.msra.mxu0 0.0
    %1242 = vmatprep.subr.mxu0 0.0
    %1243 = vmatpush1.msra.mxu0 0.0
    %1244 = vmatprep.subr.mxu0 0.0
    %1245 = vmatpush1.msra.mxu0 0.0
    %1246 = vmatprep.subr.mxu0 0.0
    %1247 = vmatpush1.msra.mxu0 0.0
    %1248 = vmatprep.subr.mxu0 0.0
    %1249 = vmatpush1.msra.mxu0 0.0
    %1250 = vmatprep.subr.mxu0 0.0
    %1251 = vmatpush1.msra.mxu0 0.0
    %1252 = vmatprep.subr.mxu0 0.0
    %1253 = vmatpush1.msra.mxu0 0.0
    %1254 = vmatprep.subr.mxu0 0.0
    %1255 = vmatpush1.msra.mxu0 0.0
    %1256 = vmatprep.subr.mxu0 0.0
    %1257 = vmatpush1.msra.mxu0 0.0
    %1258 = vmatprep.mubr.f32.mxu0 0.0
    %1259 = vmatmul.mubr.f32.gmra.mrb[0].mxu0 %v837
    %v1260 = vpop.f32.mrb[0].mxu0
    %v1261 = vadd.f32 %v1190, %v1260
    %v1262 = vpop.f32.mrb[0].mxu0
    %v1263 = vadd.f32 %v1192, %v1262
    %1264 = vdwg.mxu0
    %1265 = vmatprep.subr.mxu0 %v82
    %1266 = vmatpush1.msra.mxu0 %v81
    %1267 = vmatprep.subr.mxu0 %v86
    %1268 = vmatpush1.msra.mxu0 %v85
    %1269 = vmatprep.subr.mxu0 %v90
    %1270 = vmatpush1.msra.mxu0 %v89
    %1271 = vmatprep.subr.mxu0 %v94
    %1272 = vmatpush1.msra.mxu0 %v93
    %1273 = vmatprep.subr.mxu0 %v98
    %1274 = vmatpush1.msra.mxu0 %v97
    %1275 = vmatprep.subr.mxu0 %v102
    %1276 = vmatpush1.msra.mxu0 %v101
    %1277 = vmatprep.subr.mxu0 %v106
    %1278 = vmatpush1.msra.mxu0 %v105
    %1279 = vmatprep.subr.mxu0 %v110
    %1280 = vmatpush1.msra.mxu0 %v109
    %1281 = vmatprep.subr.mxu0 %v114
    %1282 = vmatpush1.msra.mxu0 %v113
    %1283 = vmatprep.subr.mxu0 %v118
    %1284 = vmatpush1.msra.mxu0 %v117
    %1285 = vmatprep.subr.mxu0 %v122
    %1286 = vmatpush1.msra.mxu0 %v121
    %1287 = vmatprep.subr.mxu0 %v126
    %1288 = vmatpush1.msra.mxu0 %v125
    %1289 = vmatprep.subr.mxu0 %v130
    %1290 = vmatpush1.msra.mxu0 %v129
    %1291 = vmatprep.subr.mxu0 %v134
    %1292 = vmatpush1.msra.mxu0 %v133
    %1293 = vmatprep.subr.mxu0 %v138
    %1294 = vmatpush1.msra.mxu0 %v137
    %1295 = vmatprep.subr.mxu0 %v142
    %1296 = vmatpush1.msra.mxu0 %v141
    %1297 = vmatprep.subr.mxu0 %v146
    %1298 = vmatpush1.msra.mxu0 %v145
    %1299 = vmatprep.subr.mxu0 %v150
    %1300 = vmatpush1.msra.mxu0 %v149
    %1301 = vmatprep.subr.mxu0 %v154
    %1302 = vmatpush1.msra.mxu0 %v153
    %1303 = vmatprep.subr.mxu0 %v158
    %1304 = vmatpush1.msra.mxu0 %v157
    %1305 = vmatprep.subr.mxu0 %v162
    %1306 = vmatpush1.msra.mxu0 %v161
    %1307 = vmatprep.subr.mxu0 %v166
    %1308 = vmatpush1.msra.mxu0 %v165
    %1309 = vmatprep.subr.mxu0 %v170
    %1310 = vmatpush1.msra.mxu0 %v169
    %1311 = vmatprep.subr.mxu0 %v174
    %1312 = vmatpush1.msra.mxu0 %v173
    %1313 = vmatprep.subr.mxu0 %v178
    %1314 = vmatpush1.msra.mxu0 %v177
    %1315 = vmatprep.subr.mxu0 %v182
    %1316 = vmatpush1.msra.mxu0 %v181
    %1317 = vmatprep.subr.mxu0 %v186
    %1318 = vmatpush1.msra.mxu0 %v185
    %1319 = vmatprep.subr.mxu0 %v190
    %1320 = vmatpush1.msra.mxu0 %v189
    %1321 = vmatprep.subr.mxu0 %v194
    %1322 = vmatpush1.msra.mxu0 %v193
    %1323 = vmatprep.subr.mxu0 %v198
    %1324 = vmatpush1.msra.mxu0 %v197
    %1325 = vmatprep.subr.mxu0 %v202
    %1326 = vmatpush1.msra.mxu0 %v201
    %1327 = vmatprep.subr.mxu0 %v206
    %1328 = vmatpush1.msra.mxu0 %v205
    %1329 = vmatprep.mubr.f32.mxu0 %v791
    %1330 = vmatmul.mubr.f32.gmra.mrb[0].mxu0 %v783
    %v1331 = vpop.f32.mrb[0].mxu0
    %v1332 = vadd.f32 %v764, %v1331
    %v1333 = vpop.f32.mrb[0].mxu0
    %v1334 = vadd.f32 %v768, %v1333
    %1335 = vdwg.mxu0
    %1336 = vmatprep.subr.mxu0 %v210
    %1337 = vmatpush1.msra.mxu0 %v209
    %1338 = vmatprep.subr.mxu0 %v214
    %1339 = vmatpush1.msra.mxu0 %v213
    %1340 = vmatprep.subr.mxu0 %v218
    %1341 = vmatpush1.msra.mxu0 %v217
    %1342 = vmatprep.subr.mxu0 %v222
    %1343 = vmatpush1.msra.mxu0 %v221
    %1344 = vmatprep.subr.mxu0 %v226
    %1345 = vmatpush1.msra.mxu0 %v225
    %1346 = vmatprep.subr.mxu0 %v230
    %1347 = vmatpush1.msra.mxu0 %v229
    %1348 = vmatprep.subr.mxu0 %v234
    %1349 = vmatpush1.msra.mxu0 %v233
    %1350 = vmatprep.subr.mxu0 %v238
    %1351 = vmatpush1.msra.mxu0 %v237
    %1352 = vmatprep.subr.mxu0 %v242
    %1353 = vmatpush1.msra.mxu0 %v241
    %1354 = vmatprep.subr.mxu0 %v246
    %1355 = vmatpush1.msra.mxu0 %v245
    %1356 = vmatprep.subr.mxu0 %v250
    %1357 = vmatpush1.msra.mxu0 %v249
    %1358 = vmatprep.subr.mxu0 %v254
    %1359 = vmatpush1.msra.mxu0 %v253
    %1360 = vmatprep.subr.mxu0 %v258
    %1361 = vmatpush1.msra.mxu0 %v257
    %1362 = vmatprep.subr.mxu0 %v262
    %1363 = vmatpush1.msra.mxu0 %v261
    %1364 = vmatprep.subr.mxu0 %v266
    %1365 = vmatpush1.msra.mxu0 %v265
    %1366 = vmatprep.subr.mxu0 %v270
    %1367 = vmatpush1.msra.mxu0 %v269
    %1368 = vmatprep.subr.mxu0 %v274
    %1369 = vmatpush1.msra.mxu0 %v273
    %1370 = vmatprep.subr.mxu0 %v278
    %1371 = vmatpush1.msra.mxu0 %v277
    %1372 = vmatprep.subr.mxu0 %v282
    %1373 = vmatpush1.msra.mxu0 %v281
    %1374 = vmatprep.subr.mxu0 %v286
    %1375 = vmatpush1.msra.mxu0 %v285
    %1376 = vmatprep.subr.mxu0 %v290
    %1377 = vmatpush1.msra.mxu0 %v289
    %1378 = vmatprep.subr.mxu0 %v294
    %1379 = vmatpush1.msra.mxu0 %v293
    %1380 = vmatprep.subr.mxu0 %v298
    %1381 = vmatpush1.msra.mxu0 %v297
    %1382 = vmatprep.subr.mxu0 %v302
    %1383 = vmatpush1.msra.mxu0 %v301
    %1384 = vmatprep.subr.mxu0 %v306
    %1385 = vmatpush1.msra.mxu0 %v305
    %1386 = vmatprep.subr.mxu0 %v310
    %1387 = vmatpush1.msra.mxu0 %v309
    %1388 = vmatprep.subr.mxu0 %v314
    %1389 = vmatpush1.msra.mxu0 %v313
    %1390 = vmatprep.subr.mxu0 %v318
    %1391 = vmatpush1.msra.mxu0 %v317
    %1392 = vmatprep.subr.mxu0 %v322
    %1393 = vmatpush1.msra.mxu0 %v321
    %1394 = vmatprep.subr.mxu0 %v326
    %1395 = vmatpush1.msra.mxu0 %v325
    %1396 = vmatprep.subr.mxu0 %v330
    %1397 = vmatpush1.msra.mxu0 %v329
    %1398 = vmatprep.subr.mxu0 %v334
    %1399 = vmatpush1.msra.mxu0 %v333
    %1400 = vmatprep.mubr.f32.mxu0 %v792
    %1401 = vmatmul.mubr.f32.gmra.mrb[0].mxu0 %v790
    %v1402 = vpop.f32.mrb[0].mxu0
    %v1403 = vadd.f32 %v1332, %v1402
    %v1404 = vpop.f32.mrb[0].mxu0
    %v1405 = vadd.f32 %v1334, %v1404
    %1406 = vdwg.mxu0
    %1407 = vmatprep.subr.mxu0 %v338
    %1408 = vmatpush1.msra.mxu0 %v337
    %1409 = vmatprep.subr.mxu0 %v342
    %1410 = vmatpush1.msra.mxu0 %v341
    %1411 = vmatprep.subr.mxu0 %v346
    %1412 = vmatpush1.msra.mxu0 %v345
    %1413 = vmatprep.subr.mxu0 %v350
    %1414 = vmatpush1.msra.mxu0 %v349
    %1415 = vmatprep.subr.mxu0 %v354
    %1416 = vmatpush1.msra.mxu0 %v353
    %1417 = vmatprep.subr.mxu0 %v358
    %1418 = vmatpush1.msra.mxu0 %v357
    %1419 = vmatprep.subr.mxu0 %v362
    %1420 = vmatpush1.msra.mxu0 %v361
    %1421 = vmatprep.subr.mxu0 %v366
    %1422 = vmatpush1.msra.mxu0 %v365
    %1423 = vmatprep.subr.mxu0 %v370
    %1424 = vmatpush1.msra.mxu0 %v369
    %1425 = vmatprep.subr.mxu0 %v374
    %1426 = vmatpush1.msra.mxu0 %v373
    %1427 = vmatprep.subr.mxu0 %v378
    %1428 = vmatpush1.msra.mxu0 %v377
    %1429 = vmatprep.subr.mxu0 %v382
    %1430 = vmatpush1.msra.mxu0 %v381
    %1431 = vmatprep.subr.mxu0 %v386
    %1432 = vmatpush1.msra.mxu0 %v385
    %1433 = vmatprep.subr.mxu0 %v390
    %1434 = vmatpush1.msra.mxu0 %v389
    %1435 = vmatprep.subr.mxu0 %v394
    %1436 = vmatpush1.msra.mxu0 %v393
    %1437 = vmatprep.subr.mxu0 %v398
    %1438 = vmatpush1.msra.mxu0 %v397
    %1439 = vmatprep.subr.mxu0 %v402
    %1440 = vmatpush1.msra.mxu0 %v401
    %1441 = vmatprep.subr.mxu0 %v406
    %1442 = vmatpush1.msra.mxu0 %v405
    %1443 = vmatprep.subr.mxu0 %v410
    %1444 = vmatpush1.msra.mxu0 %v409
    %1445 = vmatprep.subr.mxu0 %v414
    %1446 = vmatpush1.msra.mxu0 %v413
    %1447 = vmatprep.subr.mxu0 %v418
    %1448 = vmatpush1.msra.mxu0 %v417
    %1449 = vmatprep.subr.mxu0 %v422
    %1450 = vmatpush1.msra.mxu0 %v421
    %1451 = vmatprep.subr.mxu0 %v426
    %1452 = vmatpush1.msra.mxu0 %v425
    %1453 = vmatprep.subr.mxu0 %v430
    %1454 = vmatpush1.msra.mxu0 %v429
    %1455 = vmatprep.subr.mxu0 %v434
    %1456 = vmatpush1.msra.mxu0 %v433
    %1457 = vmatprep.subr.mxu0 %v438
    %1458 = vmatpush1.msra.mxu0 %v437
    %1459 = vmatprep.subr.mxu0 %v442
    %1460 = vmatpush1.msra.mxu0 %v441
    %1461 = vmatprep.subr.mxu0 %v446
    %1462 = vmatpush1.msra.mxu0 %v445
    %1463 = vmatprep.subr.mxu0 %v450
    %1464 = vmatpush1.msra.mxu0 %v449
    %1465 = vmatprep.subr.mxu0 %v454
    %1466 = vmatpush1.msra.mxu0 %v453
    %1467 = vmatprep.subr.mxu0 %v458
    %1468 = vmatpush1.msra.mxu0 %v457
    %1469 = vmatprep.subr.mxu0 %v462
    %1470 = vmatpush1.msra.mxu0 %v461
    %1471 = vmatprep.mubr.f32.mxu0 %v808
    %1472 = vmatmul.mubr.f32.gmra.mrb[0].mxu0 %v800
    %v1473 = vpop.f32.mrb[0].mxu0
    %v1474 = vadd.f32 %v1403, %v1473
    %v1475 = vpop.f32.mrb[0].mxu0
    %v1476 = vadd.f32 %v1405, %v1475
    %1477 = vdwg.mxu0
    %1478 = vmatprep.subr.mxu0 %v466
    %1479 = vmatpush1.msra.mxu0 %v465
    %1480 = vmatprep.subr.mxu0 %v470
    %1481 = vmatpush1.msra.mxu0 %v469
    %1482 = vmatprep.subr.mxu0 %v474
    %1483 = vmatpush1.msra.mxu0 %v473
    %1484 = vmatprep.subr.mxu0 %v478
    %1485 = vmatpush1.msra.mxu0 %v477
    %1486 = vmatprep.subr.mxu0 %v482
    %1487 = vmatpush1.msra.mxu0 %v481
    %1488 = vmatprep.subr.mxu0 %v486
    %1489 = vmatpush1.msra.mxu0 %v485
    %1490 = vmatprep.subr.mxu0 %v490
    %1491 = vmatpush1.msra.mxu0 %v489
    %1492 = vmatprep.subr.mxu0 %v494
    %1493 = vmatpush1.msra.mxu0 %v493
    %1494 = vmatprep.subr.mxu0 %v498
    %1495 = vmatpush1.msra.mxu0 %v497
    %1496 = vmatprep.subr.mxu0 %v502
    %1497 = vmatpush1.msra.mxu0 %v501
    %1498 = vmatprep.subr.mxu0 %v506
    %1499 = vmatpush1.msra.mxu0 %v505
    %1500 = vmatprep.subr.mxu0 %v510
    %1501 = vmatpush1.msra.mxu0 %v509
    %1502 = vmatprep.subr.mxu0 %v514
    %1503 = vmatpush1.msra.mxu0 %v513
    %1504 = vmatprep.subr.mxu0 %v518
    %1505 = vmatpush1.msra.mxu0 %v517
    %1506 = vmatprep.subr.mxu0 %v522
    %1507 = vmatpush1.msra.mxu0 %v521
    %1508 = vmatprep.subr.mxu0 %v526
    %1509 = vmatpush1.msra.mxu0 %v525
    %1510 = vmatprep.subr.mxu0 %v530
    %1511 = vmatpush1.msra.mxu0 %v529
    %1512 = vmatprep.subr.mxu0 %v534
    %1513 = vmatpush1.msra.mxu0 %v533
    %1514 = vmatprep.subr.mxu0 %v538
    %1515 = vmatpush1.msra.mxu0 %v537
    %1516 = vmatprep.subr.mxu0 %v542
    %1517 = vmatpush1.msra.mxu0 %v541
    %1518 = vmatprep.subr.mxu0 %v546
    %1519 = vmatpush1.msra.mxu0 %v545
    %1520 = vmatprep.subr.mxu0 %v550
    %1521 = vmatpush1.msra.mxu0 %v549
    %1522 = vmatprep.subr.mxu0 %v554
    %1523 = vmatpush1.msra.mxu0 %v553
    %1524 = vmatprep.subr.mxu0 %v558
    %1525 = vmatpush1.msra.mxu0 %v557
    %1526 = vmatprep.subr.mxu0 %v562
    %1527 = vmatpush1.msra.mxu0 %v561
    %1528 = vmatprep.subr.mxu0 %v566
    %1529 = vmatpush1.msra.mxu0 %v565
    %1530 = vmatprep.subr.mxu0 %v570
    %1531 = vmatpush1.msra.mxu0 %v569
    %1532 = vmatprep.subr.mxu0 %v574
    %1533 = vmatpush1.msra.mxu0 %v573
    %1534 = vmatprep.subr.mxu0 %v578
    %1535 = vmatpush1.msra.mxu0 %v577
    %1536 = vmatprep.subr.mxu0 %v582
    %1537 = vmatpush1.msra.mxu0 %v581
    %1538 = vmatprep.subr.mxu0 %v586
    %1539 = vmatpush1.msra.mxu0 %v585
    %1540 = vmatprep.subr.mxu0 %v590
    %1541 = vmatpush1.msra.mxu0 %v589
    %1542 = vmatprep.mubr.f32.mxu0 %v809
    %1543 = vmatmul.mubr.f32.gmra.mrb[0].mxu0 %v807
    %v1544 = vpop.f32.mrb[0].mxu0
    %v1545 = vadd.f32 %v1474, %v1544
    %v1546 = vpop.f32.mrb[0].mxu0
    %v1547 = vadd.f32 %v1476, %v1546
    %1548 = vdwg.mxu0
    %1549 = vmatprep.subr.mxu0 %v594
    %1550 = vmatpush1.msra.mxu0 %v593
    %1551 = vmatprep.subr.mxu0 %v598
    %1552 = vmatpush1.msra.mxu0 %v597
    %1553 = vmatprep.subr.mxu0 %v602
    %1554 = vmatpush1.msra.mxu0 %v601
    %1555 = vmatprep.subr.mxu0 %v606
    %1556 = vmatpush1.msra.mxu0 %v605
    %1557 = vmatprep.subr.mxu0 %v610
    %1558 = vmatpush1.msra.mxu0 %v609
    %1559 = vmatprep.subr.mxu0 %v614
    %1560 = vmatpush1.msra.mxu0 %v613
    %1561 = vmatprep.subr.mxu0 %v618
    %1562 = vmatpush1.msra.mxu0 %v617
    %1563 = vmatprep.subr.mxu0 %v622
    %1564 = vmatpush1.msra.mxu0 %v621
    %1565 = vmatprep.subr.mxu0 %v626
    %1566 = vmatpush1.msra.mxu0 %v625
    %1567 = vmatprep.subr.mxu0 %v630
    %1568 = vmatpush1.msra.mxu0 %v629
    %1569 = vmatprep.subr.mxu0 %v634
    %1570 = vmatpush1.msra.mxu0 %v633
    %1571 = vmatprep.subr.mxu0 %v638
    %1572 = vmatpush1.msra.mxu0 %v637
    %1573 = vmatprep.subr.mxu0 %v642
    %1574 = vmatpush1.msra.mxu0 %v641
    %1575 = vmatprep.subr.mxu0 %v646
    %1576 = vmatpush1.msra.mxu0 %v645
    %1577 = vmatprep.subr.mxu0 %v650
    %1578 = vmatpush1.msra.mxu0 %v649
    %1579 = vmatprep.subr.mxu0 %v654
    %1580 = vmatpush1.msra.mxu0 %v653
    %1581 = vmatprep.subr.mxu0 %v658
    %1582 = vmatpush1.msra.mxu0 %v657
    %1583 = vmatprep.subr.mxu0 %v662
    %1584 = vmatpush1.msra.mxu0 %v661
    %1585 = vmatprep.subr.mxu0 %v666
    %1586 = vmatpush1.msra.mxu0 %v665
    %1587 = vmatprep.subr.mxu0 %v670
    %1588 = vmatpush1.msra.mxu0 %v669
    %1589 = vmatprep.subr.mxu0 %v674
    %1590 = vmatpush1.msra.mxu0 %v673
    %1591 = vmatprep.subr.mxu0 %v678
    %1592 = vmatpush1.msra.mxu0 %v677
    %1593 = vmatprep.subr.mxu0 %v682
    %1594 = vmatpush1.msra.mxu0 %v681
    %1595 = vmatprep.subr.mxu0 %v686
    %1596 = vmatpush1.msra.mxu0 %v685
    %1597 = vmatprep.subr.mxu0 %v690
    %1598 = vmatpush1.msra.mxu0 %v689
    %1599 = vmatprep.subr.mxu0 %v694
    %1600 = vmatpush1.msra.mxu0 %v693
    %1601 = vmatprep.subr.mxu0 %v698
    %1602 = vmatpush1.msra.mxu0 %v697
    %1603 = vmatprep.subr.mxu0 %v702
    %1604 = vmatpush1.msra.mxu0 %v701
    %1605 = vmatprep.subr.mxu0 %v706
    %1606 = vmatpush1.msra.mxu0 %v705
    %1607 = vmatprep.subr.mxu0 %v710
    %1608 = vmatpush1.msra.mxu0 %v709
    %1609 = vmatprep.subr.mxu0 %v714
    %1610 = vmatpush1.msra.mxu0 %v713
    %1611 = vmatprep.subr.mxu0 %v718
    %1612 = vmatpush1.msra.mxu0 %v717
    %1613 = vmatprep.mubr.f32.mxu0 %v825
    %1614 = vmatmul.mubr.f32.gmra.mrb[0].mxu0 %v817
    %v1615 = vpop.f32.mrb[0].mxu0
    %v1616 = vadd.f32 %v1545, %v1615
    %v1617 = vpop.f32.mrb[0].mxu0
    %v1618 = vadd.f32 %v1547, %v1617
    %1619 = vdwg.mxu0
    %1620 = vmatprep.subr.mxu0 %v722
    %1621 = vmatpush1.msra.mxu0 %v721
    %1622 = vmatprep.subr.mxu0 %v726
    %1623 = vmatpush1.msra.mxu0 %v725
    %1624 = vmatprep.subr.mxu0 %v730
    %1625 = vmatpush1.msra.mxu0 %v729
    %1626 = vmatprep.subr.mxu0 %v734
    %1627 = vmatpush1.msra.mxu0 %v733
    %1628 = vmatprep.subr.mxu0 %v738
    %1629 = vmatpush1.msra.mxu0 %v737
    %1630 = vmatprep.subr.mxu0 %v742
    %1631 = vmatpush1.msra.mxu0 %v741
    %1632 = vmatprep.subr.mxu0 %v746
    %1633 = vmatpush1.msra.mxu0 %v745
    %1634 = vmatprep.subr.mxu0 %v750
    %1635 = vmatpush1.msra.mxu0 %v749
    %1636 = vmatprep.subr.mxu0 0.0
    %1637 = vmatpush1.msra.mxu0 0.0
    %1638 = vmatprep.subr.mxu0 0.0
    %1639 = vmatpush1.msra.mxu0 0.0
    %1640 = vmatprep.subr.mxu0 0.0
    %1641 = vmatpush1.msra.mxu0 0.0
    %1642 = vmatprep.subr.mxu0 0.0
    %1643 = vmatpush1.msra.mxu0 0.0
    %1644 = vmatprep.subr.mxu0 0.0
    %1645 = vmatpush1.msra.mxu0 0.0
    %1646 = vmatprep.subr.mxu0 0.0
    %1647 = vmatpush1.msra.mxu0 0.0
    %1648 = vmatprep.subr.mxu0 0.0
    %1649 = vmatpush1.msra.mxu0 0.0
    %1650 = vmatprep.subr.mxu0 0.0
    %1651 = vmatpush1.msra.mxu0 0.0
    %1652 = vmatprep.subr.mxu0 0.0
    %1653 = vmatpush1.msra.mxu0 0.0
    %1654 = vmatprep.subr.mxu0 0.0
    %1655 = vmatpush1.msra.mxu0 0.0
    %1656 = vmatprep.subr.mxu0 0.0
    %1657 = vmatpush1.msra.mxu0 0.0
    %1658 = vmatprep.subr.mxu0 0.0
    %1659 = vmatpush1.msra.mxu0 0.0
    %1660 = vmatprep.subr.mxu0 0.0
    %1661 = vmatpush1.msra.mxu0 0.0
    %1662 = vmatprep.subr.mxu0 0.0
    %1663 = vmatpush1.msra.mxu0 0.0
    %1664 = vmatprep.subr.mxu0 0.0
    %1665 = vmatpush1.msra.mxu0 0.0
    %1666 = vmatprep.subr.mxu0 0.0
    %1667 = vmatpush1.msra.mxu0 0.0
    %1668 = vmatprep.subr.mxu0 0.0
    %1669 = vmatpush1.msra.mxu0 0.0
    %1670 = vmatprep.subr.mxu0 0.0
    %1671 = vmatpush1.msra.mxu0 0.0
    %1672 = vmatprep.subr.mxu0 0.0
    %1673 = vmatpush1.msra.mxu0 0.0
    %1674 = vmatprep.subr.mxu0 0.0
    %1675 = vmatpush1.msra.mxu0 0.0
    %1676 = vmatprep.subr.mxu0 0.0
    %1677 = vmatpush1.msra.mxu0 0.0
    %1678 = vmatprep.subr.mxu0 0.0
    %1679 = vmatpush1.msra.mxu0 0.0
    %1680 = vmatprep.subr.mxu0 0.0
    %1681 = vmatpush1.msra.mxu0 0.0
    %1682 = vmatprep.subr.mxu0 0.0
    %1683 = vmatpush1.msra.mxu0 0.0
    %1684 = vmatprep.mubr.f32.mxu0 0.0
    %1685 = vmatmul.mubr.f32.gmra.mrb[0].mxu0 %v837
    %v1686 = vpop.f32.mrb[0].mxu0
    %v1687 = vadd.f32 %v1616, %v1686
    %v1688 = vpop.f32.mrb[0].mxu0
    %v1689 = vadd.f32 %v1618, %v1688
    %1690 = vdwg.mxu0
    %v1691 = vmax.f32 %v1261, 0.0
    %v1692 = vmax.f32 %v1263, 0.0
    %v1693 = vmax.f32 %v1687, 0.0
    %v1694 = vmax.f32 %v1689, 0.0
    %v1695 = vld [vmem:[%s3] sm:$0xff]
    %v1696 = vld [vmem:[%s3 + $0x8] sm:$0xff]
    %v1697 = vld [vmem:[%s3 + $0x10] sm:$0xff]
    %v1698 = vld [vmem:[%s3 + $0x18] sm:$0xff]
    %v1699 = vld [vmem:[%s3 + $0x20] sm:$0xff]
    %v1700 = vld [vmem:[%s3 + $0x28] sm:$0xff]
    %v1701 = vld [vmem:[%s3 + $0x30] sm:$0xff]
    %v1702 = vld [vmem:[%s3 + $0x38] sm:$0xff]
    %v1703 = vld [vmem:[%s3 + $0x40] sm:$0xff]
    %v1704 = vld [vmem:[%s3 + $0x48] sm:$0xff]
    %v1705 = vld [vmem:[%s3 + $0x50] sm:$0xff]
    %v1706 = vld [vmem:[%s3 + $0x58] sm:$0xff]
    %v1707 = vld [vmem:[%s3 + $0x60] sm:$0xff]
    %v1708 = vld [vmem:[%s3 + $0x68] sm:$0xff]
    %v1709 = vld [vmem:[%s3 + $0x70] sm:$0xff]
    %v1710 = vld [vmem:[%s3 + $0x78] sm:$0xff]
    %v1711 = vld [vmem:[%s3 + $0x80] sm:$0xff]
    %v1712 = vld [vmem:[%s3 + $0x88] sm:$0xff]
    %v1713 = vld [vmem:[%s3 + $0x90] sm:$0xff]
    %v1714 = vld [vmem:[%s3 + $0x98] sm:$0xff]
    %v1715 = vld [vmem:[%s3 + $0xa0] sm:$0xff]
    %v1716 = vld [vmem:[%s3 + $0xa8] sm:$0xff]
    %v1717 = vld [vmem:[%s3 + $0xb0] sm:$0xff]
    %v1718 = vld [vmem:[%s3 + $0xb8] sm:$0xff]
    %v1719 = vld [vmem:[%s3 + $0xc0] sm:$0xff]
    %v1720 = vld [vmem:[%s3 + $0xc8] sm:$0xff]
    %v1721 = vld [vmem:[%s3 + $0xd0] sm:$0xff]
    %v1722 = vld [vmem:[%s3 + $0xd8] sm:$0xff]
    %v1723 = vld [vmem:[%s3 + $0xe0] sm:$0xff]
    %v1724 = vld [vmem:[%s3 + $0xe8] sm:$0xff]
    %v1725 = vld [vmem:[%s3 + $0xf0] sm:$0xff]
    %v1726 = vld [vmem:[%s3 + $0xf8] sm:$0xff]
    %v1727 = vld [vmem:[%s3 + $0x100] sm:$0xff]
    %v1728 = vld [vmem:[%s3 + $0x108] sm:$0xff]
    %v1729 = vld [vmem:[%s3 + $0x110] sm:$0xff]
    %v1730 = vld [vmem:[%s3 + $0x118] sm:$0xff]
    %v1731 = vld [vmem:[%s3 + $0x120] sm:$0xff]
    %v1732 = vld [vmem:[%s3 + $0x128] sm:$0xff]
    %v1733 = vld [vmem:[%s3 + $0x130] sm:$0xff]
    %v1734 = vld [vmem:[%s3 + $0x138] sm:$0xff]
    %v1735 = vld [vmem:[%s3 + $0x140] sm:$0xff]
    %v1736 = vld [vmem:[%s3 + $0x148] sm:$0xff]
    %v1737 = vld [vmem:[%s3 + $0x150] sm:$0xff]
    %v1738 = vld [vmem:[%s3 + $0x158] sm:$0xff]
    %v1739 = vld [vmem:[%s3 + $0x160] sm:$0xff]
    %v1740 = vld [vmem:[%s3 + $0x168] sm:$0xff]
    %v1741 = vld [vmem:[%s3 + $0x170] sm:$0xff]
    %v1742 = vld [vmem:[%s3 + $0x178] sm:$0xff]
    %v1743 = vld [vmem:[%s3 + $0x180] sm:$0xff]
    %v1744 = vld [vmem:[%s3 + $0x188] sm:$0xff]
    %v1745 = vld [vmem:[%s3 + $0x190] sm:$0xff]
    %v1746 = vld [vmem:[%s3 + $0x198] sm:$0xff]
    %v1747 = vld [vmem:[%s3 + $0x1a0] sm:$0xff]
    %v1748 = vld [vmem:[%s3 + $0x1a8] sm:$0xff]
    %v1749 = vld [vmem:[%s3 + $0x1b0] sm:$0xff]
    %v1750 = vld [vmem:[%s3 + $0x1b8] sm:$0xff]
    %v1751 = vld [vmem:[%s3 + $0x1c0] sm:$0xff]
    %v1752 = vld [vmem:[%s3 + $0x1c8] sm:$0xff]
    %v1753 = vld [vmem:[%s3 + $0x1d0] sm:$0xff]
    %v1754 = vld [vmem:[%s3 + $0x1d8] sm:$0xff]
    %v1755 = vld [vmem:[%s3 + $0x1e0] sm:$0xff]
    %v1756 = vld [vmem:[%s3 + $0x1e8] sm:$0xff]
    %v1757 = vld [vmem:[%s3 + $0x1f0] sm:$0xff]
    %v1758 = vld [vmem:[%s3 + $0x1f8] sm:$0xff]
    %v1759 = vld [vmem:[#allocation7] sm:$0x1]
    %v1761 = vlaneseq
    %v1762 = vshrl.u32 %v1761, 7
    %v1763 = vsub.s32 0, %v1762
    %v1764 = vrot.slane %v1759, %v1763
    %1766 = vmatprep.subr.mxu0 0.0
    %1767 = vmatpush1.msra.mxu0 %v1695
    %1768 = vmatprep.subr.mxu0 0.0
    %1769 = vmatpush1.msra.mxu0 %v1696
    %1770 = vmatprep.subr.mxu0 0.0
    %1771 = vmatpush1.msra.mxu0 %v1697
    %1772 = vmatprep.subr.mxu0 0.0
    %1773 = vmatpush1.msra.mxu0 %v1698
    %1774 = vmatprep.subr.mxu0 0.0
    %1775 = vmatpush1.msra.mxu0 %v1699
    %1776 = vmatprep.subr.mxu0 0.0
    %1777 = vmatpush1.msra.mxu0 %v1700
    %1778 = vmatprep.subr.mxu0 0.0
    %1779 = vmatpush1.msra.mxu0 %v1701
    %1780 = vmatprep.subr.mxu0 0.0
    %1781 = vmatpush1.msra.mxu0 %v1702
    %1782 = vmatprep.subr.mxu0 0.0
    %1783 = vmatpush1.msra.mxu0 %v1703
    %1784 = vmatprep.subr.mxu0 0.0
    %1785 = vmatpush1.msra.mxu0 %v1704
    %1786 = vmatprep.subr.mxu0 0.0
    %1787 = vmatpush1.msra.mxu0 %v1705
    %1788 = vmatprep.subr.mxu0 0.0
    %1789 = vmatpush1.msra.mxu0 %v1706
    %1790 = vmatprep.subr.mxu0 0.0
    %1791 = vmatpush1.msra.mxu0 %v1707
    %1792 = vmatprep.subr.mxu0 0.0
    %1793 = vmatpush1.msra.mxu0 %v1708
    %1794 = vmatprep.subr.mxu0 0.0
    %1795 = vmatpush1.msra.mxu0 %v1709
    %1796 = vmatprep.subr.mxu0 0.0
    %1797 = vmatpush1.msra.mxu0 %v1710
    %1798 = vmatprep.subr.mxu0 0.0
    %1799 = vmatpush1.msra.mxu0 %v1711
    %1800 = vmatprep.subr.mxu0 0.0
    %1801 = vmatpush1.msra.mxu0 %v1712
    %1802 = vmatprep.subr.mxu0 0.0
    %1803 = vmatpush1.msra.mxu0 %v1713
    %1804 = vmatprep.subr.mxu0 0.0
    %1805 = vmatpush1.msra.mxu0 %v1714
    %1806 = vmatprep.subr.mxu0 0.0
    %1807 = vmatpush1.msra.mxu0 %v1715
    %1808 = vmatprep.subr.mxu0 0.0
    %1809 = vmatpush1.msra.mxu0 %v1716
    %1810 = vmatprep.subr.mxu0 0.0
    %1811 = vmatpush1.msra.mxu0 %v1717
    %1812 = vmatprep.subr.mxu0 0.0
    %1813 = vmatpush1.msra.mxu0 %v1718
    %1814 = vmatprep.subr.mxu0 0.0
    %1815 = vmatpush1.msra.mxu0 %v1719
    %1816 = vmatprep.subr.mxu0 0.0
    %1817 = vmatpush1.msra.mxu0 %v1720
    %1818 = vmatprep.subr.mxu0 0.0
    %1819 = vmatpush1.msra.mxu0 %v1721
    %1820 = vmatprep.subr.mxu0 0.0
    %1821 = vmatpush1.msra.mxu0 %v1722
    %1822 = vmatprep.subr.mxu0 0.0
    %1823 = vmatpush1.msra.mxu0 %v1723
    %1824 = vmatprep.subr.mxu0 0.0
    %1825 = vmatpush1.msra.mxu0 %v1724
    %1826 = vmatprep.subr.mxu0 0.0
    %1827 = vmatpush1.msra.mxu0 %v1725
    %1828 = vmatprep.subr.mxu0 0.0
    %1829 = vmatpush1.msra.mxu0 %v1726
    %1830 = vmatprep.mubr.f32.mxu0 %v1692
    %1831 = vmatmul.mubr.f32.gmra.mrb[0].mxu0 %v1691
    %v1832 = vpop.f32.mrb[0].mxu0
    %v1833 = vadd.f32 %v1764, %v1832
    %v1834 = vpop.f32.mrb[0].mxu0
    %1835 = vdwg.mxu0
    %1836 = vmatprep.subr.mxu0 0.0
    %1837 = vmatpush1.msra.mxu0 %v1727
    %1838 = vmatprep.subr.mxu0 0.0
    %1839 = vmatpush1.msra.mxu0 %v1728
    %1840 = vmatprep.subr.mxu0 0.0
    %1841 = vmatpush1.msra.mxu0 %v1729
    %1842 = vmatprep.subr.mxu0 0.0
    %1843 = vmatpush1.msra.mxu0 %v1730
    %1844 = vmatprep.subr.mxu0 0.0
    %1845 = vmatpush1.msra.mxu0 %v1731
    %1846 = vmatprep.subr.mxu0 0.0
    %1847 = vmatpush1.msra.mxu0 %v1732
    %1848 = vmatprep.subr.mxu0 0.0
    %1849 = vmatpush1.msra.mxu0 %v1733
    %1850 = vmatprep.subr.mxu0 0.0
    %1851 = vmatpush1.msra.mxu0 %v1734
    %1852 = vmatprep.subr.mxu0 0.0
    %1853 = vmatpush1.msra.mxu0 %v1735
    %1854 = vmatprep.subr.mxu0 0.0
    %1855 = vmatpush1.msra.mxu0 %v1736
    %1856 = vmatprep.subr.mxu0 0.0
    %1857 = vmatpush1.msra.mxu0 %v1737
    %1858 = vmatprep.subr.mxu0 0.0
    %1859 = vmatpush1.msra.mxu0 %v1738
    %1860 = vmatprep.subr.mxu0 0.0
    %1861 = vmatpush1.msra.mxu0 %v1739
    %1862 = vmatprep.subr.mxu0 0.0
    %1863 = vmatpush1.msra.mxu0 %v1740
    %1864 = vmatprep.subr.mxu0 0.0
    %1865 = vmatpush1.msra.mxu0 %v1741
    %1866 = vmatprep.subr.mxu0 0.0
    %1867 = vmatpush1.msra.mxu0 %v1742
    %1868 = vmatprep.subr.mxu0 0.0
    %1869 = vmatpush1.msra.mxu0 %v1743
    %1870 = vmatprep.subr.mxu0 0.0
    %1871 = vmatpush1.msra.mxu0 %v1744
    %1872 = vmatprep.subr.mxu0 0.0
    %1873 = vmatpush1.msra.mxu0 %v1745
    %1874 = vmatprep.subr.mxu0 0.0
    %1875 = vmatpush1.msra.mxu0 %v1746
    %1876 = vmatprep.subr.mxu0 0.0
    %1877 = vmatpush1.msra.mxu0 %v1747
    %1878 = vmatprep.subr.mxu0 0.0
    %1879 = vmatpush1.msra.mxu0 %v1748
    %1880 = vmatprep.subr.mxu0 0.0
    %1881 = vmatpush1.msra.mxu0 %v1749
    %1882 = vmatprep.subr.mxu0 0.0
    %1883 = vmatpush1.msra.mxu0 %v1750
    %1884 = vmatprep.subr.mxu0 0.0
    %1885 = vmatpush1.msra.mxu0 %v1751
    %1886 = vmatprep.subr.mxu0 0.0
    %1887 = vmatpush1.msra.mxu0 %v1752
    %1888 = vmatprep.subr.mxu0 0.0
    %1889 = vmatpush1.msra.mxu0 %v1753
    %1890 = vmatprep.subr.mxu0 0.0
    %1891 = vmatpush1.msra.mxu0 %v1754
    %1892 = vmatprep.subr.mxu0 0.0
    %1893 = vmatpush1.msra.mxu0 %v1755
    %1894 = vmatprep.subr.mxu0 0.0
    %1895 = vmatpush1.msra.mxu0 %v1756
    %1896 = vmatprep.subr.mxu0 0.0
    %1897 = vmatpush1.msra.mxu0 %v1757
    %1898 = vmatprep.subr.mxu0 0.0
    %1899 = vmatpush1.msra.mxu0 %v1758
    %1900 = vmatprep.mubr.f32.mxu0 %v1694
    %1901 = vmatmul.mubr.f32.gmra.mrb[0].mxu0 %v1693
    %v1902 = vpop.f32.mrb[0].mxu0
    %v1903 = vadd.f32 %v1833, %v1902
    %v1904 = vpop.f32.mrb[0].mxu0
    %1905 = vdwg.mxu0
    %v1906 = vmax.f32 %v1903, 0.0
    %v1907 = vld [vmem:[%s5] sm:$0xff]
    %v1908 = vld [vmem:[%s5 + $0x8] sm:$0xff]
    %v1909 = vld [vmem:[%s5 + $0x10] sm:$0xff]
    %v1910 = vld [vmem:[%s5 + $0x18] sm:$0xff]
    %v1911 = vld [vmem:[%s5 + $0x20] sm:$0xff]
    %v1912 = vld [vmem:[%s5 + $0x28] sm:$0xff]
    %v1913 = vld [vmem:[%s5 + $0x30] sm:$0xff]
    %v1914 = vld [vmem:[%s5 + $0x38] sm:$0xff]
    %v1915 = vld [vmem:[#allocation8] sm:$0x1]
    %v1917 = vlaneseq
    %v1918 = vshrl.u32 %v1917, 7
    %v1919 = vsub.s32 0, %v1918
    %v1920 = vrot.slane %v1915, %v1919
    %v1923 = vsel %vm836, %v1906, 0
    %1925 = vmatprep.subr.mxu0 0.0
    %1926 = vmatpush1.msra.mxu0 %v1907
    %1927 = vmatprep.subr.mxu0 0.0
    %1928 = vmatpush1.msra.mxu0 %v1908
    %1929 = vmatprep.subr.mxu0 0.0
    %1930 = vmatpush1.msra.mxu0 %v1909
    %1931 = vmatprep.subr.mxu0 0.0
    %1932 = vmatpush1.msra.mxu0 %v1910
    %1933 = vmatprep.subr.mxu0 0.0
    %1934 = vmatpush1.msra.mxu0 %v1911
    %1935 = vmatprep.subr.mxu0 0.0
    %1936 = vmatpush1.msra.mxu0 %v1912
    %1937 = vmatprep.subr.mxu0 0.0
    %1938 = vmatpush1.msra.mxu0 %v1913
    %1939 = vmatprep.subr.mxu0 0.0
    %1940 = vmatpush1.msra.mxu0 %v1914
    %1941 = vmatprep.subr.mxu0 0.0
    %1942 = vmatpush1.msra.mxu0 0.0
    %1943 = vmatprep.subr.mxu0 0.0
    %1944 = vmatpush1.msra.mxu0 0.0
    %1945 = vmatprep.subr.mxu0 0.0
    %1946 = vmatpush1.msra.mxu0 0.0
    %1947 = vmatprep.subr.mxu0 0.0
    %1948 = vmatpush1.msra.mxu0 0.0
    %1949 = vmatprep.subr.mxu0 0.0
    %1950 = vmatpush1.msra.mxu0 0.0
    %1951 = vmatprep.subr.mxu0 0.0
    %1952 = vmatpush1.msra.mxu0 0.0
    %1953 = vmatprep.subr.mxu0 0.0
    %1954 = vmatpush1.msra.mxu0 0.0
    %1955 = vmatprep.subr.mxu0 0.0
    %1956 = vmatpush1.msra.mxu0 0.0
    %1957 = vmatprep.subr.mxu0 0.0
    %1958 = vmatpush1.msra.mxu0 0.0
    %1959 = vmatprep.subr.mxu0 0.0
    %1960 = vmatpush1.msra.mxu0 0.0
    %1961 = vmatprep.subr.mxu0 0.0
    %1962 = vmatpush1.msra.mxu0 0.0
    %1963 = vmatprep.subr.mxu0 0.0
    %1964 = vmatpush1.msra.mxu0 0.0
    %1965 = vmatprep.subr.mxu0 0.0
    %1966 = vmatpush1.msra.mxu0 0.0
    %1967 = vmatprep.subr.mxu0 0.0
    %1968 = vmatpush1.msra.mxu0 0.0
    %1969 = vmatprep.subr.mxu0 0.0
    %1970 = vmatpush1.msra.mxu0 0.0
    %1971 = vmatprep.subr.mxu0 0.0
    %1972 = vmatpush1.msra.mxu0 0.0
    %1973 = vmatprep.subr.mxu0 0.0
    %1974 = vmatpush1.msra.mxu0 0.0
    %1975 = vmatprep.subr.mxu0 0.0
    %1976 = vmatpush1.msra.mxu0 0.0
    %1977 = vmatprep.subr.mxu0 0.0
    %1978 = vmatpush1.msra.mxu0 0.0
    %1979 = vmatprep.subr.mxu0 0.0
    %1980 = vmatpush1.msra.mxu0 0.0
    %1981 = vmatprep.subr.mxu0 0.0
    %1982 = vmatpush1.msra.mxu0 0.0
    %1983 = vmatprep.subr.mxu0 0.0
    %1984 = vmatpush1.msra.mxu0 0.0
    %1985 = vmatprep.subr.mxu0 0.0
    %1986 = vmatpush1.msra.mxu0 0.0
    %1987 = vmatprep.subr.mxu0 0.0
    %1988 = vmatpush1.msra.mxu0 0.0
    %1989 = vmatprep.mubr.f32.mxu0 0.0
    %1990 = vmatmul.mubr.f32.gmra.mrb[0].mxu0 %v1923
    %v1991 = vpop.f32.mrb[0].mxu0
    %v1992 = vadd.f32 %v1920, %v1991
    %v1993 = vpop.f32.mrb[0].mxu0
    %1994 = vdwg.mxu0
    %vm1995 = vcmask 17408
    %1996 = vst.msk [vmem:[#allocation10] sm:$0x3] %vm1995, %v1992
    // Predicated region
    $region46: #{fuel_cell_net_forward.3} parent=1 // pred_check
      _
    $region47: #{fuel_cell_net_forward.3} parent=1 // pred_check_branch
      %1998 = sbr.rel (0) target = $region49
    $region48: #{fuel_cell_net_forward.3} parent=1 // pred_region
      %s2000 = ssub.s32 32, 32
      %2001 = vsyncadd [#allocation4], %s2000
      %s2003 = sshll.u32 [#allocation10], 4
      %s2004 = int_to_ptr.vmem [resolvable:$true] %s2003
      %2006 = dma.vmem_to_hbm [thread:$0]  %s2004, 32, %s7, [#allocation4]
    $region49: #{fuel_cell_net_forward.3} parent=1 // pred_fallthru
      _
    // Predicated region
    $region50: #{fuel_cell_net_forward.3} parent=1 // pred_check
      _
    $region51: #{fuel_cell_net_forward.3} parent=1 // pred_check_branch
      %2008 = sbr.rel (0) target = $region53
    $region52: #{fuel_cell_net_forward.3} parent=1 // pred_region
      %2009 = dma.done [#allocation4], 32
    $region53: #{fuel_cell_net_forward.3} parent=1 // pred_fallthru
      _
    %2010 = vsyncpa [#allocation3], 1
    %2011 = vsyncpa [#allocation6], 1
    %2012 = vsyncpa [#allocation9], 1
    %2013 = vsyncpa [#allocation4], 1

</llo_original>
